<compile_context>
chip_gen: v7x
topology: tpu7x:2x2x1
jax: 0.10.0
libtpu: 0.0.40
codegen_flags: <defaults>
</compile_context>

<pallas_src>
import math

import jax
import jax.numpy as jnp
from jax import lax
from jax.experimental import pallas as pl
from jax.experimental.pallas import tpu as pltpu

NH = 8      # attention heads
HD = 16     # head dim
EMB = 128   # embed dim
C1 = 64     # conv hidden channels
OUT = 48    # fc output features


# --------------------------------------------------------------------------
# Shared compute bodies.
# --------------------------------------------------------------------------
def _conv_feat_compute(x_ref, w1_ref, b1_ref,
                       w2a_ref, w2b_ref, w2c_ref, b2_ref,
                       w3a_ref, w3b_ref, w3c_ref, b3_ref,
                       xpad_ref, pad_ref):
    """Conv stack + adaptive average pool for one B-tile. Returns (TB, 128) f32."""
    TB, L = x_ref.shape

    # zero-padded x scratch: halo columns + center written once.
    xpad_ref[:, 0:1] = jnp.zeros((TB, 1), jnp.float32)
    xpad_ref[:, L + 1:L + 2] = jnp.zeros((TB, 1), jnp.float32)
    xpad_ref[:, 1:L + 1] = x_ref[...].astype(jnp.float32)

    # ---- Conv1d(1 -> 64, k=3, p=1) + ReLU : VPU broadcast-MAC in f32 ----
    # TODO(synk): if bundle dumps show the 64-wide lane replication binding the VALU
    # slot on v6e/v7x, restructure conv1 with channels on the sublane axis or as a
    # K=3-padded-to-8 MXU matmul (secondary to the matmul/copy items already applied).
    w1 = w1_ref[...]                                            # (3, 64)
    h1 = xpad_ref[:, 0:L][:, :, None] * w1[0].reshape(1, 1, C1)
    h1 = h1 + xpad_ref[:, 1:L + 1][:, :, None] * w1[1].reshape(1, 1, C1)
    h1 = h1 + xpad_ref[:, 2:L + 2][:, :, None] * w1[2].reshape(1, 1, C1)
    h1 = jnp.maximum(h1 + b1_ref[...].reshape(1, 1, C1), 0.0)   # (TB, L, 64) f32

    # padded channel scratch (bf16), reused as the input of conv2 and conv3.
    zb = jnp.zeros((TB, 1, C1), jnp.bfloat16)
    pad_ref[:, 0:1, :] = zb
    pad_ref[:, L + 1:L + 2, :] = zb
    pad_ref[:, 1:L + 1, :] = h1.astype(jnp.bfloat16)

    def tap(k):
        # (TB*L, 64) bf16 view of tap k, read straight from the ref
        # (no cross-lane concat / K=192 im2col slab materialization).
        return pad_ref[:, k:k + L, :].reshape(TB * L, C1)

    # ---- Conv1d(64 -> 64) + ReLU : three accumulated (64x64) bf16 matmuls, f32 acc ----
    h2 = jnp.dot(tap(0), w2a_ref[...], preferred_element_type=jnp.float32)
    h2 = h2 + jnp.dot(tap(1), w2b_ref[...], preferred_element_type=jnp.float32)
    h2 = h2 + jnp.dot(tap(2), w2c_ref[...], preferred_element_type=jnp.float32)
    h2 = jnp.maximum(h2 + b2_ref[...], 0.0)                     # (TB*L, 64) f32
    pad_ref[:, 1:L + 1, :] = h2.reshape(TB, L, C1).astype(jnp.bfloat16)

    # ---- Conv1d(64 -> 128) + ReLU : three accumulated (64x128) bf16 matmuls, f32 acc ----
    h3 = jnp.dot(tap(0), w3a_ref[...], preferred_element_type=jnp.float32)
    h3 = h3 + jnp.dot(tap(1), w3b_ref[...], preferred_element_type=jnp.float32)
    h3 = h3 + jnp.dot(tap(2), w3c_ref[...], preferred_element_type=jnp.float32)
    h3 = jnp.maximum(h3 + b3_ref[...], 0.0).reshape(TB, L, EMB)

    # ---- AdaptiveAvgPool1d(1): mean over L ----
    return jnp.mean(h3, axis=1)                                 # (TB, 128) f32


def _attn_fc_compute(feat, wqkv_ref, bqkv_ref, wof_ref, bof_ref):
    """Cross-B MHA (8 heads) + fused out-projection/FC. feat: (B, 128).
    Returns (B, 128) f32 (FC lane-padded from 48 to 128 features)."""
    B = feat.shape[0]
    featb = feat.astype(jnp.bfloat16)

    # fused q|k|v projection: one (128 x 384) bf16 matmul.
    qkv = jnp.dot(featb, wqkv_ref[...],
                  preferred_element_type=jnp.float32) + bqkv_ref[...]
    qh = qkv[:, 0:EMB].reshape(B, NH, HD).astype(jnp.bfloat16)
    kh = qkv[:, EMB:2 * EMB].reshape(B, NH, HD).astype(jnp.bfloat16)
    vh = qkv[:, 2 * EMB:3 * EMB].reshape(B, NH, HD).astype(jnp.bfloat16)

    # All heads batched: one score einsum, one softmax, one PV einsum.
    # TODO(synk): for very large B the (NH, B, B) f32 score slab should be tiled
    # flash-style over query blocks (budgeted against 64 MiB/TC on v7x).
    s = jnp.einsum("qhd,khd->hqk", qh, kh,
                   preferred_element_type=jnp.float32) * (1.0 / math.sqrt(HD))
    s = s - jnp.max(s, axis=-1, keepdims=True)
    p = jnp.exp(s)
    # approx reciprocal (EUP slot): deliberate, tiny deviation from exact softmax.
    p = p * pl.reciprocal(jnp.sum(p, axis=-1, keepdims=True), approx=True)
    a = jnp.einsum("hqk,khd->qhd", p.astype(jnp.bfloat16), vh,
                   preferred_element_type=jnp.float32).reshape(B, EMB)

    # Fused attention out-projection + Linear(128->48): W = wo@wfc (precomputed).
    return jnp.dot(a.astype(jnp.bfloat16), wof_ref[...],
                   preferred_element_type=jnp.float32) + bof_ref[...]


# --------------------------------------------------------------------------
# Kernels.
# --------------------------------------------------------------------------
def _conv_feat_kernel(x_ref, w1, b1, w2a, w2b, w2c, b2, w3a, w3b, w3c, b3,
                      feat_ref, xpad_ref, pad_ref):
    feat = _conv_feat_compute(x_ref, w1, b1, w2a, w2b, w2c, b2,
                              w3a, w3b, w3c, b3, xpad_ref, pad_ref)
    feat_ref[...] = feat.astype(feat_ref.dtype)     # bf16 out: halves feat HBM traffic


def _attn_fc_kernel(feat_ref, wqkv, bqkv, wof, bof, out_ref):
    out = _attn_fc_compute(feat_ref[...], wqkv, bqkv, wof, bof)
    out_ref[...] = out.astype(out_ref.dtype)


def _fused_kernel(x_ref, w1, b1, w2a, w2b, w2c, b2, w3a, w3b, w3c, b3,
                  wqkv, bqkv, wof, bof, out_ref, xpad_ref, pad_ref):
    feat = _conv_feat_compute(x_ref, w1, b1, w2a, w2b, w2c, b2,
                              w3a, w3b, w3c, b3, xpad_ref, pad_ref)
    out = _attn_fc_compute(feat, wqkv, bqkv, wof, bof)
    out_ref[...] = out.astype(out_ref.dtype)


# --------------------------------------------------------------------------
# One-time parameter preparation (hoisted out of the per-call path).
# --------------------------------------------------------------------------
def prepare_params(params):
    f32, bf16 = jnp.float32, jnp.bfloat16
    win, bin_ = params["attn_in_w"], params["attn_in_b"]

    # per-tap conv weights: (C_out, C_in, 3)[:, :, k].T -> (C_in, C_out)
    def taps(w):
        return tuple(jnp.transpose(w[:, :, k], (1, 0)).astype(bf16) for k in range(3))

    w2a, w2b, w2c = taps(params["conv2_w"])
    w3a, w3b, w3c = taps(params["conv3_w"])

    # fused q|k|v projection weight/bias: columns are [q | k | v].
    wqkv = win.T.astype(bf16)                                   # (128, 384)
    bqkv = bin_.reshape(1, 3 * EMB).astype(f32)

    # fused out-projection + FC (no nonlinearity between them):
    #   out = (a @ wo.T + bo) @ wfc.T + bfc  ==  a @ (wo.T @ wfc.T) + (bo @ wfc.T + bfc)
    # product computed in f32, lane-padded to 128 output features, then cast to bf16.
    wo_t = params["attn_out_w"].T.astype(f32)                   # (128, 128)
    wfc_pad = jnp.zeros((EMB, EMB), f32).at[:, :OUT].set(params["fc_w"].T)
    wof = (wo_t @ wfc_pad).astype(bf16)                         # (128, 128) bf16
    bof = (params["attn_out_b"].reshape(1, EMB).astype(f32) @ wfc_pad
           + jnp.zeros((1, EMB), f32).at[0, :OUT].set(params["fc_b"]))

    return {
        "w1": jnp.transpose(params["conv1_w"][:, 0, :], (1, 0)).astype(f32),  # (3, 64)
        "b1": params["conv1_b"].reshape(1, C1).astype(f32),
        "w2a": w2a, "w2b": w2b, "w2c": w2c,
        "b2": params["conv2_b"].reshape(1, C1).astype(f32),
        "w3a": w3a, "w3b": w3b, "w3c": w3c,
        "b3": params["conv3_b"].reshape(1, EMB).astype(f32),
        "wqkv": wqkv, "bqkv": bqkv,
        "wof": wof, "bof": bof,
    }


# --------------------------------------------------------------------------
# Tiling / VMEM budgeting.
# --------------------------------------------------------------------------
def _round_up(v, m):
    return ((v + m - 1) // m) * m


def _vmem_budget_bytes():
    """Generation-aware scoped-VMEM limit; safe 32 MiB fallback."""
    try:
        cap = getattr(pltpu.get_tpu_info(), "vmem_capacity_bytes", None)
        if cap:
            # ~96 MiB on v5e/v6e (128 MiB physical), ~48 MiB on v7x (64 MiB/TC).
            return int(min(cap * 3 // 4, 100 * 1024 * 1024))
    except Exception:
        pass
    return 32 * 1024 * 1024


def _per_row_bytes(L):
    """Rough per-batch-row phase-1 working set:
    xpad(f32) + pad_ref(bf16) + live h1/h2/h3(f32) + per-tap bf16 loads."""
    return (L + 2) * 132 + L * 1408 + 4096


# --------------------------------------------------------------------------
# Forward.
# --------------------------------------------------------------------------
def processor_forward(x, pp):
    """x: (B, L) float32; pp: output of prepare_params(). Returns (B, 48) f32."""
    B, L = x.shape
    budget = _vmem_budget_bytes()
    row_bytes = _per_row_bytes(L)

    conv_args = (pp["w1"], pp["b1"], pp["w2a"], pp["w2b"], pp["w2c"], pp["b2"],
                 pp["w3a"], pp["w3b"], pp["w3c"], pp["b3"])
    attn_args = (pp["wqkv"], pp["bqkv"], pp["wof"], pp["bof"])
    vmem = pl.BlockSpec(memory_space=pltpu.MemorySpace.VMEM)

    # ---- small-B fast path: single fused kernel (no second launch, no feat round trip) ----
    fused_bytes = B * row_bytes + 4 * NH * B * B + (1 << 20)
    if B <= 256 and fused_bytes <= budget // 2:
        out_pad = pl.pallas_call(
            _fused_kernel,
            out_shape=jax.ShapeDtypeStruct((B, EMB), jnp.float32),
            in_specs=[vmem] * 15,
            out_specs=vmem,
            scratch_shapes=[
                pltpu.VMEM((B, L + 2), jnp.float32),        # padded x
                pltpu.VMEM((B, L + 2, C1), jnp.bfloat16),   # padded conv activations
            ],
            compiler_params=pltpu.CompilerParams(vmem_limit_bytes=budget),
        )(x, *conv_args, *attn_args)
        return out_pad[:, :OUT]

    # ---- large-B path: conv+pool gridded over B, then cross-B attention + fc ----
    usable = budget // 2                        # headroom for compiler + double-buffering
    cap = max(16, (usable // row_bytes) // 16 * 16)
    half = max(16, _round_up((B + 1) // 2, 16))  # >=2 grid steps -> v7x megacore sharding
    tb = min(cap, half, 1024)
    bpad = _round_up(B, tb)
    xp = jnp.pad(x, ((0, bpad - B), (0, 0))) if bpad != B else x

    def _rep(shape):
        zeros = (0,) * len(shape)
        return pl.BlockSpec(shape, lambda i: zeros)

    feat = pl.pallas_call(
        _conv_feat_kernel,
        out_shape=jax.ShapeDtypeStruct((bpad, EMB), jnp.bfloat16),
        grid_spec=pltpu.PrefetchScalarGridSpec(
            num_scalar_prefetch=0,
            grid=(bpad // tb,),
            in_specs=[
                pl.BlockSpec((tb, L), lambda i: (i, 0)),
                _rep((3, C1)), _rep((1, C1)),
                _rep((C1, C1)), _rep((C1, C1)), _rep((C1, C1)), _rep((1, C1)),
                _rep((C1, EMB)), _rep((C1, EMB)), _rep((C1, EMB)), _rep((1, EMB)),
            ],
            out_specs=pl.BlockSpec((tb, EMB), lambda i: (i, 0)),
            scratch_shapes=[
                pltpu.VMEM((tb, L + 2), jnp.float32),
                pltpu.VMEM((tb, L + 2, C1), jnp.bfloat16),
            ],
        ),
        compiler_params=pltpu.CompilerParams(
            dimension_semantics=("parallel",),
            vmem_limit_bytes=budget,
        ),
    )(xp, *conv_args)

    if bpad != B:
        feat = feat[:B]

    # TODO(synk): for very large B, tile this call over query blocks (flash-style)
    # instead of holding the (NH, B, B) score slab whole in VMEM.
    out_pad = pl.pallas_call(
        _attn_fc_kernel,
        out_shape=jax.ShapeDtypeStruct((B, EMB), jnp.float32),
        in_specs=[vmem] * 5,
        out_specs=vmem,
        compiler_params=pltpu.CompilerParams(vmem_limit_bytes=budget),
    )(feat, *attn_args)
    return out_pad[:, :OUT]


# --------------------------------------------------------------------------
# Pure-JAX f32 reference of the PyTorch forward (for the correctness check).
# --------------------------------------------------------------------------
def processor_reference(x, params):
    def conv1d(h, w, b):
        out = lax.conv_general_dilated(h, w, window_strides=(1,), padding=((1, 1),),
                                       dimension_numbers=("NCH", "OIH", "NCH"))
        return out + b[None, :, None]

    h = x[:, None, :]
    h = jax.nn.relu(conv1d(h, params["conv1_w"], params["conv1_b"]))
    h = jax.nn.relu(conv1d(h, params["conv2_w"], params["conv2_b"]))
    h = jax.nn.relu(conv1d(h, params["conv3_w"], params["conv3_b"]))
    feat = jnp.mean(h, axis=2)

    win, bin_ = params["attn_in_w"], params["attn_in_b"]
    q = feat @ win[0:128].T + bin_[0:128]
    k = feat @ win[128:256].T + bin_[128:256]
    v = feat @ win[256:384].T + bin_[256:384]
    B = feat.shape[0]
    qh = q.reshape(B, NH, HD)
    kh = k.reshape(B, NH, HD)
    vh = v.reshape(B, NH, HD)
    s = jnp.einsum("qhd,khd->hqk", qh, kh) / math.sqrt(HD)
    p = jax.nn.softmax(s, axis=-1)
    a = jnp.einsum("hqk,khd->qhd", p, vh).reshape(B, EMB)
    a = a @ params["attn_out_w"].T + params["attn_out_b"]
    return a @ params["fc_w"].T + params["fc_b"]


if __name__ == "__main__":
    key = jax.random.PRNGKey(0)
    keys = jax.random.split(key, 13)
    B, L = 4, 16
    x = jax.random.normal(keys[0], (B, L), jnp.float32)
    s = 0.1
    params = {
        "conv1_w":    s * jax.random.normal(keys[1],  (64, 1, 3),   jnp.float32),
        "conv1_b":    s * jax.random.normal(keys[2],  (64,),        jnp.float32),
        "conv2_w":    s * jax.random.normal(keys[3],  (64, 64, 3),  jnp.float32),
        "conv2_b":    s * jax.random.normal(keys[4],  (64,),        jnp.float32),
        "conv3_w":    s * jax.random.normal(keys[5],  (128, 64, 3), jnp.float32),
        "conv3_b":    s * jax.random.normal(keys[6],  (128,),       jnp.float32),
        "attn_in_w":  s * jax.random.normal(keys[7],  (384, 128),   jnp.float32),
        "attn_in_b":  s * jax.random.normal(keys[8],  (384,),       jnp.float32),
        "attn_out_w": s * jax.random.normal(keys[9],  (128, 128),   jnp.float32),
        "attn_out_b": s * jax.random.normal(keys[10], (128,),       jnp.float32),
        "fc_w":       s * jax.random.normal(keys[11], (48, 128),    jnp.float32),
        "fc_b":       s * jax.random.normal(keys[12], (48,),        jnp.float32),
    }

    pp = prepare_params(params)                      # hoisted one-time weight prep
    out = jax.block_until_ready(processor_forward(x, pp))
    ref = jax.block_until_ready(processor_reference(x, params))
    assert out.shape == (B, OUT), out.shape
    # bf16 matmul operands (f32 accumulation) + approx softmax recip -> relaxed tolerance.
    if not jnp.allclose(out, ref, rtol=2e-2, atol=2e-2):
        raise AssertionError(
            f"kernel/reference mismatch, max abs err = {jnp.max(jnp.abs(out - ref))}")
    print("KERNEL_OK")
</pallas_src>

<mosaic_0001>
module attributes {stable_mosaic.version = 11 : i64} {
  func.func @_fused_kernel(%arg0: memref<4x16xf32, #tpu.memory_space<vmem>>, %arg1: memref<3x64xf32, #tpu.memory_space<vmem>>, %arg2: memref<1x64xf32, #tpu.memory_space<vmem>>, %arg3: memref<64x64xbf16, #tpu.memory_space<vmem>>, %arg4: memref<64x64xbf16, #tpu.memory_space<vmem>>, %arg5: memref<64x64xbf16, #tpu.memory_space<vmem>>, %arg6: memref<1x64xf32, #tpu.memory_space<vmem>>, %arg7: memref<64x128xbf16, #tpu.memory_space<vmem>>, %arg8: memref<64x128xbf16, #tpu.memory_space<vmem>>, %arg9: memref<64x128xbf16, #tpu.memory_space<vmem>>, %arg10: memref<1x128xf32, #tpu.memory_space<vmem>>, %arg11: memref<128x384xbf16, #tpu.memory_space<vmem>>, %arg12: memref<1x384xf32, #tpu.memory_space<vmem>>, %arg13: memref<128x128xbf16, #tpu.memory_space<vmem>>, %arg14: memref<1x128xf32, #tpu.memory_space<vmem>>, %arg15: memref<4x128xf32, #tpu.memory_space<vmem>>, %arg16: memref<4x18xf32, #tpu.memory_space<vmem>>, %arg17: memref<4x18x64xbf16, #tpu.memory_space<vmem>>) attributes {dimension_semantics = [], scalar_prefetch = 0 : i64, scratch_operands = 2 : i64, tpu.core_type = #tpu.core_type<tc>} {
    %cst = arith.constant 0.000000e+00 : f32
    %0 = vector.broadcast %cst : f32 to vector<4x1xf32>
    %c0 = arith.constant 0 : index
    %c0_0 = arith.constant 0 : index
    %1 = vector.load %arg16[%c0, %c0_0] : memref<4x18xf32, #tpu.memory_space<vmem>>, vector<4x1xf32>
    tpu.vector_store %arg16[%c0, %c0_0], %0 {strides = array<i32>} : memref<4x18xf32, #tpu.memory_space<vmem>>, vector<4x1xf32>,
    %cst_1 = arith.constant 0.000000e+00 : f32
    %2 = vector.broadcast %cst_1 : f32 to vector<4x1xf32>
    %c0_2 = arith.constant 0 : index
    %c17 = arith.constant 17 : index
    %3 = vector.load %arg16[%c0_2, %c17] : memref<4x18xf32, #tpu.memory_space<vmem>>, vector<4x1xf32>
    tpu.vector_store %arg16[%c0_2, %c17], %2 {strides = array<i32>} : memref<4x18xf32, #tpu.memory_space<vmem>>, vector<4x1xf32>,
    %c0_3 = arith.constant 0 : index
    %c0_4 = arith.constant 0 : index
    %4 = vector.load %arg0[%c0_3, %c0_4] : memref<4x16xf32, #tpu.memory_space<vmem>>, vector<4x16xf32>
    %c0_5 = arith.constant 0 : index
    %c1 = arith.constant 1 : index
    %5 = vector.load %arg16[%c0_5, %c1] : memref<4x18xf32, #tpu.memory_space<vmem>>, vector<4x16xf32>
    tpu.vector_store %arg16[%c0_5, %c1], %4 {strides = array<i32>} : memref<4x18xf32, #tpu.memory_space<vmem>>, vector<4x16xf32>,
    %c0_6 = arith.constant 0 : index
    %c0_7 = arith.constant 0 : index
    %6 = vector.load %arg1[%c0_6, %c0_7] : memref<3x64xf32, #tpu.memory_space<vmem>>, vector<3x64xf32>
    %c0_8 = arith.constant 0 : index
    %c0_9 = arith.constant 0 : index
    %7 = vector.load %arg16[%c0_8, %c0_9] : memref<4x18xf32, #tpu.memory_space<vmem>>, vector<4x16xf32>
    %8 = vector.shape_cast %7 : vector<4x16xf32> to vector<4x16x1xf32>
    %9 = vector.extract_strided_slice %6 {offsets = [0, 0], sizes = [1, 64], strides = [1, 1]} : vector<3x64xf32> to vector<1x64xf32>
    %10 = vector.shape_cast %9 : vector<1x64xf32> to vector<64xf32>
    %11 = vector.shape_cast %10 : vector<64xf32> to vector<1x1x64xf32>
    %12 = vector.broadcast %8 : vector<4x16x1xf32> to vector<4x16x64xf32>
    %13 = vector.broadcast %11 : vector<1x1x64xf32> to vector<4x16x64xf32>
    %14 = arith.mulf %12, %13 : vector<4x16x64xf32>
    %c0_10 = arith.constant 0 : index
    %c1_11 = arith.constant 1 : index
    %15 = vector.load %arg16[%c0_10, %c1_11] : memref<4x18xf32, #tpu.memory_space<vmem>>, vector<4x16xf32>
    %16 = vector.shape_cast %15 : vector<4x16xf32> to vector<4x16x1xf32>
    %17 = vector.extract_strided_slice %6 {offsets = [1, 0], sizes = [1, 64], strides = [1, 1]} : vector<3x64xf32> to vector<1x64xf32>
    %18 = vector.shape_cast %17 : vector<1x64xf32> to vector<64xf32>
    %19 = vector.shape_cast %18 : vector<64xf32> to vector<1x1x64xf32>
    %20 = vector.broadcast %16 : vector<4x16x1xf32> to vector<4x16x64xf32>
    %21 = vector.broadcast %19 : vector<1x1x64xf32> to vector<4x16x64xf32>
    %22 = arith.mulf %20, %21 : vector<4x16x64xf32>
    %23 = arith.addf %14, %22 : vector<4x16x64xf32>
    %c0_12 = arith.constant 0 : index
    %c2 = arith.constant 2 : index
    %24 = vector.load %arg16[%c0_12, %c2] : memref<4x18xf32, #tpu.memory_space<vmem>>, vector<4x16xf32>
    %25 = vector.shape_cast %24 : vector<4x16xf32> to vector<4x16x1xf32>
    %26 = vector.extract_strided_slice %6 {offsets = [2, 0], sizes = [1, 64], strides = [1, 1]} : vector<3x64xf32> to vector<1x64xf32>
    %27 = vector.shape_cast %26 : vector<1x64xf32> to vector<64xf32>
    %28 = vector.shape_cast %27 : vector<64xf32> to vector<1x1x64xf32>
    %29 = vector.broadcast %25 : vector<4x16x1xf32> to vector<4x16x64xf32>
    %30 = vector.broadcast %28 : vector<1x1x64xf32> to vector<4x16x64xf32>
    %31 = arith.mulf %29, %30 : vector<4x16x64xf32>
    %32 = arith.addf %23, %31 : vector<4x16x64xf32>
    %c0_13 = arith.constant 0 : index
    %c0_14 = arith.constant 0 : index
    %33 = vector.load %arg2[%c0_13, %c0_14] : memref<1x64xf32, #tpu.memory_space<vmem>>, vector<1x64xf32>
    %34 = vector.shape_cast %33 : vector<1x64xf32> to vector<1x1x64xf32>
    %35 = vector.broadcast %34 : vector<1x1x64xf32> to vector<4x16x64xf32>
    %36 = arith.addf %32, %35 : vector<4x16x64xf32>
    %cst_15 = arith.constant 0.000000e+00 : f32
    %37 = vector.broadcast %cst_15 : f32 to vector<4x16x64xf32>
    %38 = arith.maximumf %36, %37 : vector<4x16x64xf32>
    %cst_16 = arith.constant 0.000000e+00 : bf16
    %39 = vector.broadcast %cst_16 : bf16 to vector<4x1x64xbf16>
    %c0_17 = arith.constant 0 : index
    %c0_18 = arith.constant 0 : index
    %c0_19 = arith.constant 0 : index
    %40 = vector.load %arg17[%c0_17, %c0_18, %c0_19] : memref<4x18x64xbf16, #tpu.memory_space<vmem>>, vector<4x1x64xbf16>
    tpu.vector_store %arg17[%c0_17, %c0_18, %c0_19], %39 {strides = array<i32>} : memref<4x18x64xbf16, #tpu.memory_space<vmem>>, vector<4x1x64xbf16>,
    %c0_20 = arith.constant 0 : index
    %c17_21 = arith.constant 17 : index
    %c0_22 = arith.constant 0 : index
    %41 = vector.load %arg17[%c0_20, %c17_21, %c0_22] : memref<4x18x64xbf16, #tpu.memory_space<vmem>>, vector<4x1x64xbf16>
    tpu.vector_store %arg17[%c0_20, %c17_21, %c0_22], %39 {strides = array<i32>} : memref<4x18x64xbf16, #tpu.memory_space<vmem>>, vector<4x1x64xbf16>,
    %42 = arith.truncf %38 : vector<4x16x64xf32> to vector<4x16x64xbf16>
    %c0_23 = arith.constant 0 : index
    %c1_24 = arith.constant 1 : index
    %c0_25 = arith.constant 0 : index
    %43 = vector.load %arg17[%c0_23, %c1_24, %c0_25] : memref<4x18x64xbf16, #tpu.memory_space<vmem>>, vector<4x16x64xbf16>
    tpu.vector_store %arg17[%c0_23, %c1_24, %c0_25], %42 {strides = array<i32>} : memref<4x18x64xbf16, #tpu.memory_space<vmem>>, vector<4x16x64xbf16>,
    %c0_26 = arith.constant 0 : index
    %c0_27 = arith.constant 0 : index
    %c0_28 = arith.constant 0 : index
    %44 = vector.load %arg17[%c0_26, %c0_27, %c0_28] : memref<4x18x64xbf16, #tpu.memory_space<vmem>>, vector<4x16x64xbf16>
    %45 = vector.shape_cast %44 : vector<4x16x64xbf16> to vector<64x64xbf16>
    %c0_29 = arith.constant 0 : index
    %c0_30 = arith.constant 0 : index
    %46 = vector.load %arg3[%c0_29, %c0_30] : memref<64x64xbf16, #tpu.memory_space<vmem>>, vector<64x64xbf16>
    %cst_31 = arith.constant dense<0.000000e+00> : vector<64x64xf32>
    %47 = tpu.matmul %45, %46, %cst_31 {dimension_numbers = #tpu.dot_dimension_numbers<[1], [0], [0], [1], [0, 0, 1, 1], [], []>} : vector<64x64xbf16>, vector<64x64xbf16>, vector<64x64xf32> -> vector<64x64xf32>
    %c0_32 = arith.constant 0 : index
    %c1_33 = arith.constant 1 : index
    %c0_34 = arith.constant 0 : index
    %48 = vector.load %arg17[%c0_32, %c1_33, %c0_34] : memref<4x18x64xbf16, #tpu.memory_space<vmem>>, vector<4x16x64xbf16>
    %49 = vector.shape_cast %48 : vector<4x16x64xbf16> to vector<64x64xbf16>
    %c0_35 = arith.constant 0 : index
    %c0_36 = arith.constant 0 : index
    %50 = vector.load %arg4[%c0_35, %c0_36] : memref<64x64xbf16, #tpu.memory_space<vmem>>, vector<64x64xbf16>
    %cst_37 = arith.constant dense<0.000000e+00> : vector<64x64xf32>
    %51 = tpu.matmul %49, %50, %cst_37 {dimension_numbers = #tpu.dot_dimension_numbers<[1], [0], [0], [1], [0, 0, 1, 1], [], []>} : vector<64x64xbf16>, vector<64x64xbf16>, vector<64x64xf32> -> vector<64x64xf32>
    %52 = arith.addf %47, %51 : vector<64x64xf32>
    %c0_38 = arith.constant 0 : index
    %c2_39 = arith.constant 2 : index
    %c0_40 = arith.constant 0 : index
    %53 = vector.load %arg17[%c0_38, %c2_39, %c0_40] : memref<4x18x64xbf16, #tpu.memory_space<vmem>>, vector<4x16x64xbf16>
    %54 = vector.shape_cast %53 : vector<4x16x64xbf16> to vector<64x64xbf16>
    %c0_41 = arith.constant 0 : index
    %c0_42 = arith.constant 0 : index
    %55 = vector.load %arg5[%c0_41, %c0_42] : memref<64x64xbf16, #tpu.memory_space<vmem>>, vector<64x64xbf16>
    %cst_43 = arith.constant dense<0.000000e+00> : vector<64x64xf32>
    %56 = tpu.matmul %54, %55, %cst_43 {dimension_numbers = #tpu.dot_dimension_numbers<[1], [0], [0], [1], [0, 0, 1, 1], [], []>} : vector<64x64xbf16>, vector<64x64xbf16>, vector<64x64xf32> -> vector<64x64xf32>
    %57 = arith.addf %52, %56 : vector<64x64xf32>
    %c0_44 = arith.constant 0 : index
    %c0_45 = arith.constant 0 : index
    %58 = vector.load %arg6[%c0_44, %c0_45] : memref<1x64xf32, #tpu.memory_space<vmem>>, vector<1x64xf32>
    %59 = vector.broadcast %58 : vector<1x64xf32> to vector<64x64xf32>
    %60 = arith.addf %57, %59 : vector<64x64xf32>
    %cst_46 = arith.constant 0.000000e+00 : f32
    %61 = vector.broadcast %cst_46 : f32 to vector<64x64xf32>
    %62 = arith.maximumf %60, %61 : vector<64x64xf32>
    %63 = vector.shape_cast %62 : vector<64x64xf32> to vector<4x16x64xf32>
    %64 = arith.truncf %63 : vector<4x16x64xf32> to vector<4x16x64xbf16>
    %c0_47 = arith.constant 0 : index
    %c1_48 = arith.constant 1 : index
    %c0_49 = arith.constant 0 : index
    %65 = vector.load %arg17[%c0_47, %c1_48, %c0_49] : memref<4x18x64xbf16, #tpu.memory_space<vmem>>, vector<4x16x64xbf16>
    tpu.vector_store %arg17[%c0_47, %c1_48, %c0_49], %64 {strides = array<i32>} : memref<4x18x64xbf16, #tpu.memory_space<vmem>>, vector<4x16x64xbf16>,
    %c0_50 = arith.constant 0 : index
    %c0_51 = arith.constant 0 : index
    %c0_52 = arith.constant 0 : index
    %66 = vector.load %arg17[%c0_50, %c0_51, %c0_52] : memref<4x18x64xbf16, #tpu.memory_space<vmem>>, vector<4x16x64xbf16>
    %67 = vector.shape_cast %66 : vector<4x16x64xbf16> to vector<64x64xbf16>
    %c0_53 = arith.constant 0 : index
    %c0_54 = arith.constant 0 : index
    %68 = vector.load %arg7[%c0_53, %c0_54] : memref<64x128xbf16, #tpu.memory_space<vmem>>, vector<64x128xbf16>
    %cst_55 = arith.constant dense<0.000000e+00> : vector<64x128xf32>
    %69 = tpu.matmul %67, %68, %cst_55 {dimension_numbers = #tpu.dot_dimension_numbers<[1], [0], [0], [1], [0, 0, 1, 1], [], []>} : vector<64x64xbf16>, vector<64x128xbf16>, vector<64x128xf32> -> vector<64x128xf32>
    %c0_56 = arith.constant 0 : index
    %c1_57 = arith.constant 1 : index
    %c0_58 = arith.constant 0 : index
    %70 = vector.load %arg17[%c0_56, %c1_57, %c0_58] : memref<4x18x64xbf16, #tpu.memory_space<vmem>>, vector<4x16x64xbf16>
    %71 = vector.shape_cast %70 : vector<4x16x64xbf16> to vector<64x64xbf16>
    %c0_59 = arith.constant 0 : index
    %c0_60 = arith.constant 0 : index
    %72 = vector.load %arg8[%c0_59, %c0_60] : memref<64x128xbf16, #tpu.memory_space<vmem>>, vector<64x128xbf16>
    %cst_61 = arith.constant dense<0.000000e+00> : vector<64x128xf32>
    %73 = tpu.matmul %71, %72, %cst_61 {dimension_numbers = #tpu.dot_dimension_numbers<[1], [0], [0], [1], [0, 0, 1, 1], [], []>} : vector<64x64xbf16>, vector<64x128xbf16>, vector<64x128xf32> -> vector<64x128xf32>
    %74 = arith.addf %69, %73 : vector<64x128xf32>
    %c0_62 = arith.constant 0 : index
    %c2_63 = arith.constant 2 : index
    %c0_64 = arith.constant 0 : index
    %75 = vector.load %arg17[%c0_62, %c2_63, %c0_64] : memref<4x18x64xbf16, #tpu.memory_space<vmem>>, vector<4x16x64xbf16>
    %76 = vector.shape_cast %75 : vector<4x16x64xbf16> to vector<64x64xbf16>
    %c0_65 = arith.constant 0 : index
    %c0_66 = arith.constant 0 : index
    %77 = vector.load %arg9[%c0_65, %c0_66] : memref<64x128xbf16, #tpu.memory_space<vmem>>, vector<64x128xbf16>
    %cst_67 = arith.constant dense<0.000000e+00> : vector<64x128xf32>
    %78 = tpu.matmul %76, %77, %cst_67 {dimension_numbers = #tpu.dot_dimension_numbers<[1], [0], [0], [1], [0, 0, 1, 1], [], []>} : vector<64x64xbf16>, vector<64x128xbf16>, vector<64x128xf32> -> vector<64x128xf32>
    %79 = arith.addf %74, %78 : vector<64x128xf32>
    %c0_68 = arith.constant 0 : index
    %c0_69 = arith.constant 0 : index
    %80 = vector.load %arg10[%c0_68, %c0_69] : memref<1x128xf32, #tpu.memory_space<vmem>>, vector<1x128xf32>
    %81 = vector.broadcast %80 : vector<1x128xf32> to vector<64x128xf32>
    %82 = arith.addf %79, %81 : vector<64x128xf32>
    %cst_70 = arith.constant 0.000000e+00 : f32
    %83 = vector.broadcast %cst_70 : f32 to vector<64x128xf32>
    %84 = arith.maximumf %82, %83 : vector<64x128xf32>
    %85 = vector.shape_cast %84 : vector<64x128xf32> to vector<4x16x128xf32>
    %cst_71 = arith.constant dense<0.000000e+00> : vector<4x128xf32>
    %86 = vector.multi_reduction <add>, %85, %cst_71 [1] : vector<4x16x128xf32> to vector<4x128xf32>
    %cst_72 = arith.constant 1.600000e+01 : f32
    %87 = vector.broadcast %cst_72 : f32 to vector<4x128xf32>
    %88 = arith.divf %86, %87 : vector<4x128xf32>
    %89 = arith.truncf %88 : vector<4x128xf32> to vector<4x128xbf16>
    %c0_73 = arith.constant 0 : index
    %c0_74 = arith.constant 0 : index
    %90 = vector.load %arg11[%c0_73, %c0_74] : memref<128x384xbf16, #tpu.memory_space<vmem>>, vector<128x384xbf16>
    %cst_75 = arith.constant dense<0.000000e+00> : vector<4x384xf32>
    %91 = tpu.matmul %89, %90, %cst_75 {dimension_numbers = #tpu.dot_dimension_numbers<[1], [0], [0], [1], [0, 0, 1, 1], [], []>} : vector<4x128xbf16>, vector<128x384xbf16>, vector<4x384xf32> -> vector<4x384xf32>
    %c0_76 = arith.constant 0 : index
    %c0_77 = arith.constant 0 : index
    %92 = vector.load %arg12[%c0_76, %c0_77] : memref<1x384xf32, #tpu.memory_space<vmem>>, vector<1x384xf32>
    %93 = vector.broadcast %92 : vector<1x384xf32> to vector<4x384xf32>
    %94 = arith.addf %91, %93 : vector<4x384xf32>
    %95 = vector.extract_strided_slice %94 {offsets = [0, 0], sizes = [4, 128], strides = [1, 1]} : vector<4x384xf32> to vector<4x128xf32>
    %96 = vector.shape_cast %95 : vector<4x128xf32> to vector<4x8x16xf32>
    %97 = arith.truncf %96 : vector<4x8x16xf32> to vector<4x8x16xbf16>
    %98 = vector.extract_strided_slice %94 {offsets = [0, 128], sizes = [4, 128], strides = [1, 1]} : vector<4x384xf32> to vector<4x128xf32>
    %99 = vector.shape_cast %98 : vector<4x128xf32> to vector<4x8x16xf32>
    %100 = arith.truncf %99 : vector<4x8x16xf32> to vector<4x8x16xbf16>
    %101 = vector.extract_strided_slice %94 {offsets = [0, 256], sizes = [4, 128], strides = [1, 1]} : vector<4x384xf32> to vector<4x128xf32>
    %102 = vector.shape_cast %101 : vector<4x128xf32> to vector<4x8x16xf32>
    %103 = arith.truncf %102 : vector<4x8x16xf32> to vector<4x8x16xbf16>
    "tpu.trace_start"() <{level = 10 : i32, message = "qhd,khd->hqk"}> : () -> ()
    %cst_78 = arith.constant dense<0.000000e+00> : vector<8x4x4xf32>
    %104 = tpu.matmul %97, %100, %cst_78 {dimension_numbers = #tpu.dot_dimension_numbers<[2], [2], [0], [0], [0, 1, 0, 0, 1, 0], [1], [1]>} : vector<4x8x16xbf16>, vector<4x8x16xbf16>, vector<8x4x4xf32> -> vector<8x4x4xf32>
    "tpu.trace_stop"() : () -> ()
    %cst_79 = arith.constant 2.500000e-01 : f32
    %105 = vector.broadcast %cst_79 : f32 to vector<8x4x4xf32>
    %106 = arith.mulf %104, %105 : vector<8x4x4xf32>
    %cst_80 = arith.constant dense<0xFF800000> : vector<8x4xf32>
    %107 = vector.multi_reduction <maximumf>, %106, %cst_80 [2] : vector<8x4x4xf32> to vector<8x4xf32>
    %108 = vector.shape_cast %107 : vector<8x4xf32> to vector<8x4x1xf32>
    %109 = vector.broadcast %108 : vector<8x4x1xf32> to vector<8x4x4xf32>
    %110 = arith.subf %106, %109 : vector<8x4x4xf32>
    %111 = math.exp %110 : vector<8x4x4xf32>
    %cst_81 = arith.constant dense<0.000000e+00> : vector<8x4xf32>
    %112 = vector.multi_reduction <add>, %111, %cst_81 [2] : vector<8x4x4xf32> to vector<8x4xf32>
    %113 = vector.shape_cast %112 : vector<8x4xf32> to vector<8x4x1xf32>
    %114 = tpu.reciprocal %113 {approx = true} : vector<8x4x1xf32> -> vector<8x4x1xf32>
    %115 = vector.broadcast %114 : vector<8x4x1xf32> to vector<8x4x4xf32>
    %116 = arith.mulf %111, %115 : vector<8x4x4xf32>
    %117 = arith.truncf %116 : vector<8x4x4xf32> to vector<8x4x4xbf16>
    "tpu.trace_start"() <{level = 10 : i32, message = "hqk,khd->qhd"}> : () -> ()
    %cst_82 = arith.constant dense<0.000000e+00> : vector<8x16x4xf32>
    %118 = tpu.matmul %103, %117, %cst_82 {dimension_numbers = #tpu.dot_dimension_numbers<[0], [2], [2], [1], [0, 1, 0, 2, 1, 1], [1], [0]>} : vector<4x8x16xbf16>, vector<8x4x4xbf16>, vector<8x16x4xf32> -> vector<8x16x4xf32>
    %119 = tpu.transpose %118, [2, 0, 1] : vector<8x16x4xf32> -> vector<4x8x16xf32>
    "tpu.trace_stop"() : () -> ()
    %120 = vector.shape_cast %119 : vector<4x8x16xf32> to vector<4x128xf32>
    %121 = arith.truncf %120 : vector<4x128xf32> to vector<4x128xbf16>
    %c0_83 = arith.constant 0 : index
    %c0_84 = arith.constant 0 : index
    %122 = vector.load %arg13[%c0_83, %c0_84] : memref<128x128xbf16, #tpu.memory_space<vmem>>, vector<128x128xbf16>
    %cst_85 = arith.constant dense<0.000000e+00> : vector<4x128xf32>
    %123 = tpu.matmul %121, %122, %cst_85 {dimension_numbers = #tpu.dot_dimension_numbers<[1], [0], [0], [1], [0, 0, 1, 1], [], []>} : vector<4x128xbf16>, vector<128x128xbf16>, vector<4x128xf32> -> vector<4x128xf32>
    %c0_86 = arith.constant 0 : index
    %c0_87 = arith.constant 0 : index
    %124 = vector.load %arg14[%c0_86, %c0_87] : memref<1x128xf32, #tpu.memory_space<vmem>>, vector<1x128xf32>
    %125 = vector.broadcast %124 : vector<1x128xf32> to vector<4x128xf32>
    %126 = arith.addf %123, %125 : vector<4x128xf32>
    %c0_88 = arith.constant 0 : index
    %c0_89 = arith.constant 0 : index
    %127 = vector.load %arg15[%c0_88, %c0_89] : memref<4x128xf32, #tpu.memory_space<vmem>>, vector<4x128xf32>
    tpu.vector_store %arg15[%c0_88, %c0_89], %126 {strides = array<i32>} : memref<4x128xf32, #tpu.memory_space<vmem>>, vector<4x128xf32>,
    return
  }
}

</mosaic_0001>

<llo_original>
// kernel: tpu_custom_call.1
$region0: #{tpu_custom_call.1}
  #allocation0 [shape = 'u32[]', space=smem, size = 0x4, offset = 0x4, fixed_abs, tag = 'smem constant byte address 0x4 - core index']
  #allocation1 [shape = 'u32[144,128]{1,0:T(1,128)}', space=vmem, size = 0x12000, scoped, tag = 'internal scratch']
  #allocation2 [shape = 'f32[4,18]{1,0:T(4,128)}', space=vmem, size = 0x800, scoped, tag = 'scratch operand']
  #allocation3 [shape = 'bf16[4,18,64]{2,1,0:T(8,128)(2,1)}', space=vmem, size = 0x6000, scoped, tag = 'scratch operand']
  %s0 = inlined_call_operand.hbm [shape: f32[4,16], index: 0, kind: input, shape index: {}]
  %s1 = inlined_call_operand.hbm [shape: f32[3,64], index: 1, kind: input, shape index: {}]
  %s2 = inlined_call_operand.vmem [shape: f32[1,64], index: 2, kind: input, shape index: {}]
  %s3 = inlined_call_operand.hbm [shape: bf16[64,64], index: 3, kind: input, shape index: {}]
  %s4 = inlined_call_operand.hbm [shape: bf16[64,64], index: 4, kind: input, shape index: {}]
  %s5 = inlined_call_operand.hbm [shape: bf16[64,64], index: 5, kind: input, shape index: {}]
  %s6 = inlined_call_operand.vmem [shape: f32[1,64], index: 6, kind: input, shape index: {}]
  %s7 = inlined_call_operand.hbm [shape: bf16[64,128], index: 7, kind: input, shape index: {}]
  %s8 = inlined_call_operand.hbm [shape: bf16[64,128], index: 8, kind: input, shape index: {}]
  %s9 = inlined_call_operand.vmem [shape: bf16[64,128], index: 9, kind: input, shape index: {}]
  %s10 = inlined_call_operand.hbm [shape: f32[1,128], index: 10, kind: input, shape index: {}]
  %s11 = inlined_call_operand.hbm [shape: bf16[128,384], index: 11, kind: input, shape index: {}]
  %s12 = inlined_call_operand.vmem [shape: f32[1,384], index: 12, kind: input, shape index: {}]
  %s13 = inlined_call_operand.hbm [shape: bf16[128,128], index: 13, kind: input, shape index: {}]
  %s14 = inlined_call_operand.vmem [shape: f32[1,128], index: 14, kind: input, shape index: {}]
  %s15 = inlined_call_operand.hbm [shape: f32[4,128], index: 15, kind: output, shape index: {}]
  %s16 = sld [smem:[#allocation0]]
  $region110: #{tpu_custom_call.1} parent=0
    _
  %s18 = ssub.s32 1, %s16
  %s19 = scalar_select 0, %s18, %s16
  $region1: #{tpu_custom_call.1} parent=0
    #allocation4 [shape = 'u8[2048]{0}', space=vmem, size = 0x800, scoped, tag = 'input window, operand 0, single buffered']
    #allocation5 [shape = 's32[1]{0}', space=sflag, size = 0x4, scoped, tag = 'scoped memory for tpu_custom_call.1']
    #allocation6 [shape = 's32[1]{0}', space=sflag, size = 0x4, scoped, tag = 'scoped memory for tpu_custom_call.1']
    #allocation7 [shape = 'u8[2048]{0}', space=vmem, size = 0x800, scoped, tag = 'input window, operand 1, single buffered']
    #allocation8 [shape = 's32[1]{0}', space=sflag, size = 0x4, scoped, tag = 'scoped memory for tpu_custom_call.1']
    #allocation9 [shape = 'u8[16384]{0}', space=vmem, size = 0x4000, scoped, tag = 'input window, operand 3, single buffered']
    #allocation10 [shape = 'u8[16384]{0}', space=vmem, size = 0x4000, scoped, tag = 'input window, operand 4, single buffered']
    #allocation11 [shape = 's32[1]{0}', space=sflag, size = 0x4, scoped, tag = 'scoped memory for tpu_custom_call.1']
    #allocation12 [shape = 'u8[16384]{0}', space=vmem, size = 0x4000, scoped, tag = 'input window, operand 5, single buffered']
    #allocation13 [shape = 'u8[16384]{0}', space=vmem, size = 0x4000, scoped, tag = 'input window, operand 7, single buffered']
    #allocation14 [shape = 's32[1]{0}', space=sflag, size = 0x4, scoped, tag = 'scoped memory for tpu_custom_call.1']
    #allocation15 [shape = 'u8[16384]{0}', space=vmem, size = 0x4000, scoped, tag = 'input window, operand 8, single buffered']
    #allocation16 [shape = 'u8[512]{0}', space=vmem, size = 0x400, scoped, tag = 'input window, operand 10, single buffered']
    #allocation17 [shape = 's32[1]{0}', space=sflag, size = 0x4, scoped, tag = 'scoped memory for tpu_custom_call.1']
    #allocation18 [shape = 'u8[98304]{0}', space=vmem, size = 0x18000, scoped, tag = 'input window, operand 11, single buffered']
    #allocation19 [shape = 'u8[32768]{0}', space=vmem, size = 0x8000, scoped, tag = 'input window, operand 13, single buffered']
    #allocation20 [shape = 's32[1]{0}', space=sflag, size = 0x4, scoped, tag = 'scoped memory for tpu_custom_call.1']
    #allocation21 [shape = 'u8[2048]{0}', space=vmem, size = 0x800, scoped, tag = 'output window, operand 0, single buffered']
    %20 = vsyncpa [#allocation5], 0
    %21 = vsyncpa [#allocation8], 0
    %22 = vsyncpa [#allocation11], 0
    %23 = vsyncpa [#allocation14], 0
    %24 = vsyncpa [#allocation17], 0
    %25 = vsyncpa [#allocation20], 0
    %26 = vsyncpa [#allocation6], 0
    // Predicated region
    $region2: #{tpu_custom_call.1} parent=1 // pred_check
      _
    $region3: #{tpu_custom_call.1} parent=1 // pred_check_branch
      %28 = sbr.rel (0) target = $region5
    $region4: #{tpu_custom_call.1} parent=1 // pred_region
      %s30 = ssub.s32 64, 64
      %31 = vsyncadd [#allocation5], %s30
      %s33 = sshll.u32 [#allocation4], 4
      %s34 = int_to_ptr.vmem [resolvable:$true] %s33
      %36 = dma.hbm_to_vmem [thread:$0]  %s0, 64, %s34, [#allocation5]
    $region5: #{tpu_custom_call.1} parent=1 // pred_fallthru
      _
    // Predicated region
    $region6: #{tpu_custom_call.1} parent=1 // pred_check
      _
    $region7: #{tpu_custom_call.1} parent=1 // pred_check_branch
      %38 = sbr.rel (0) target = $region9
    $region8: #{tpu_custom_call.1} parent=1 // pred_region
      %s40 = ssub.s32 64, 64
      %41 = vsyncadd [#allocation8], %s40
      %s43 = sshll.u32 [#allocation7], 4
      %s44 = int_to_ptr.vmem [resolvable:$true] %s43
      %46 = dma.hbm_to_vmem [thread:$0]  %s1, 64, %s44, [#allocation8]
    $region9: #{tpu_custom_call.1} parent=1 // pred_fallthru
      _
    // Predicated region
    $region10: #{tpu_custom_call.1} parent=1 // pred_check
      _
    $region11: #{tpu_custom_call.1} parent=1 // pred_check_branch
      %48 = sbr.rel (0) target = $region13
    $region12: #{tpu_custom_call.1} parent=1 // pred_region
      _
    $region13: #{tpu_custom_call.1} parent=1 // pred_fallthru
      _
    // Predicated region
    $region14: #{tpu_custom_call.1} parent=1 // pred_check
      _
    $region15: #{tpu_custom_call.1} parent=1 // pred_check_branch
      %50 = sbr.rel (0) target = $region17
    $region16: #{tpu_custom_call.1} parent=1 // pred_region
      %s52 = ssub.s32 512, 512
      %53 = vsyncadd [#allocation8], %s52
      %s54 = sshll.u32 [#allocation9], 4
      %s55 = int_to_ptr.vmem [resolvable:$true] %s54
      %60 = dma.hbm_to_vmem [thread:$0]  %s3, 512, %s55, [#allocation8], 64, 64, 4
    $region17: #{tpu_custom_call.1} parent=1 // pred_fallthru
      _
    // Predicated region
    $region18: #{tpu_custom_call.1} parent=1 // pred_check
      _
    $region19: #{tpu_custom_call.1} parent=1 // pred_check_branch
      %62 = sbr.rel (0) target = $region21
    $region20: #{tpu_custom_call.1} parent=1 // pred_region
      %s64 = ssub.s32 512, 512
      %65 = vsyncadd [#allocation11], %s64
      %s66 = sshll.u32 [#allocation10], 4
      %s67 = int_to_ptr.vmem [resolvable:$true] %s66
      %72 = dma.hbm_to_vmem [thread:$0]  %s4, 512, %s67, [#allocation11], 64, 64, 4
    $region21: #{tpu_custom_call.1} parent=1 // pred_fallthru
      _
    // Predicated region
    $region22: #{tpu_custom_call.1} parent=1 // pred_check
      _
    $region23: #{tpu_custom_call.1} parent=1 // pred_check_branch
      %74 = sbr.rel (0) target = $region25
    $region24: #{tpu_custom_call.1} parent=1 // pred_region
      %s76 = ssub.s32 512, 512
      %77 = vsyncadd [#allocation11], %s76
      %s78 = sshll.u32 [#allocation12], 4
      %s79 = int_to_ptr.vmem [resolvable:$true] %s78
      %84 = dma.hbm_to_vmem [thread:$0]  %s5, 512, %s79, [#allocation11], 64, 64, 4
    $region25: #{tpu_custom_call.1} parent=1 // pred_fallthru
      _
    // Predicated region
    $region26: #{tpu_custom_call.1} parent=1 // pred_check
      _
    $region27: #{tpu_custom_call.1} parent=1 // pred_check_branch
      %86 = sbr.rel (0) target = $region29
    $region28: #{tpu_custom_call.1} parent=1 // pred_region
      _
    $region29: #{tpu_custom_call.1} parent=1 // pred_fallthru
      _
    // Predicated region
    $region30: #{tpu_custom_call.1} parent=1 // pred_check
      _
    $region31: #{tpu_custom_call.1} parent=1 // pred_check_branch
      %88 = sbr.rel (0) target = $region33
    $region32: #{tpu_custom_call.1} parent=1 // pred_region
      %s90 = ssub.s32 512, 512
      %91 = vsyncadd [#allocation14], %s90
      %s92 = sshll.u32 [#allocation13], 4
      %s93 = int_to_ptr.vmem [resolvable:$true] %s92
      %98 = dma.hbm_to_vmem [thread:$0]  %s7, 512, %s93, [#allocation14], 64, 64, 4
    $region33: #{tpu_custom_call.1} parent=1 // pred_fallthru
      _
    // Predicated region
    $region34: #{tpu_custom_call.1} parent=1 // pred_check
      _
    $region35: #{tpu_custom_call.1} parent=1 // pred_check_branch
      %100 = sbr.rel (0) target = $region37
    $region36: #{tpu_custom_call.1} parent=1 // pred_region
      %s102 = ssub.s32 512, 512
      %103 = vsyncadd [#allocation14], %s102
      %s104 = sshll.u32 [#allocation15], 4
      %s105 = int_to_ptr.vmem [resolvable:$true] %s104
      %110 = dma.hbm_to_vmem [thread:$0]  %s8, 512, %s105, [#allocation14], 64, 64, 4
    $region37: #{tpu_custom_call.1} parent=1 // pred_fallthru
      _
    // Predicated region
    $region38: #{tpu_custom_call.1} parent=1 // pred_check
      _
    $region39: #{tpu_custom_call.1} parent=1 // pred_check_branch
      %112 = sbr.rel (0) target = $region41
    $region40: #{tpu_custom_call.1} parent=1 // pred_region
      _
    $region41: #{tpu_custom_call.1} parent=1 // pred_fallthru
      _
    // Predicated region
    $region42: #{tpu_custom_call.1} parent=1 // pred_check
      _
    $region43: #{tpu_custom_call.1} parent=1 // pred_check_branch
      %114 = sbr.rel (0) target = $region45
    $region44: #{tpu_custom_call.1} parent=1 // pred_region
      %s116 = ssub.s32 16, 16
      %117 = vsyncadd [#allocation17], %s116
      %s119 = sshll.u32 [#allocation16], 4
      %s120 = int_to_ptr.vmem [resolvable:$true] %s119
      %122 = dma.hbm_to_vmem [thread:$0]  %s10, 16, %s120, [#allocation17]
    $region45: #{tpu_custom_call.1} parent=1 // pred_fallthru
      _
    // Predicated region
    $region46: #{tpu_custom_call.1} parent=1 // pred_check
      _
    $region47: #{tpu_custom_call.1} parent=1 // pred_check_branch
      %124 = sbr.rel (0) target = $region49
    $region48: #{tpu_custom_call.1} parent=1 // pred_region
      %s126 = ssub.s32 3072, 3072
      %127 = vsyncadd [#allocation17], %s126
      %s128 = sshll.u32 [#allocation18], 4
      %s129 = int_to_ptr.vmem [resolvable:$true] %s128
      %134 = dma.hbm_to_vmem [thread:$0]  %s11, 3072, %s129, [#allocation17], 192, 192, 12
    $region49: #{tpu_custom_call.1} parent=1 // pred_fallthru
      _
    // Predicated region
    $region50: #{tpu_custom_call.1} parent=1 // pred_check
      _
    $region51: #{tpu_custom_call.1} parent=1 // pred_check_branch
      %136 = sbr.rel (0) target = $region53
    $region52: #{tpu_custom_call.1} parent=1 // pred_region
      _
    $region53: #{tpu_custom_call.1} parent=1 // pred_fallthru
      _
    // Predicated region
    $region54: #{tpu_custom_call.1} parent=1 // pred_check
      _
    $region55: #{tpu_custom_call.1} parent=1 // pred_check_branch
      %138 = sbr.rel (0) target = $region57
    $region56: #{tpu_custom_call.1} parent=1 // pred_region
      %s140 = ssub.s32 1024, 1024
      %141 = vsyncadd [#allocation20], %s140
      %s142 = sshll.u32 [#allocation19], 4
      %s143 = int_to_ptr.vmem [resolvable:$true] %s142
      %148 = dma.hbm_to_vmem [thread:$0]  %s13, 1024, %s143, [#allocation20], 64, 64, 4
    $region57: #{tpu_custom_call.1} parent=1 // pred_fallthru
      _
    // Predicated region
    $region58: #{tpu_custom_call.1} parent=1 // pred_check
      _
    $region59: #{tpu_custom_call.1} parent=1 // pred_check_branch
      %150 = sbr.rel (0) target = $region61
    $region60: #{tpu_custom_call.1} parent=1 // pred_region
      _
    $region61: #{tpu_custom_call.1} parent=1 // pred_fallthru
      _
    // Predicated region
    $region62: #{tpu_custom_call.1} parent=1 // pred_check
      _
    $region63: #{tpu_custom_call.1} parent=1 // pred_check_branch
      %152 = sbr.rel (0) target = $region65
    $region64: #{tpu_custom_call.1} parent=1 // pred_region
      %153 = dma.done [#allocation5], 64
    $region65: #{tpu_custom_call.1} parent=1 // pred_fallthru
      _
    // Predicated region
    $region66: #{tpu_custom_call.1} parent=1 // pred_check
      _
    $region67: #{tpu_custom_call.1} parent=1 // pred_check_branch
      %155 = sbr.rel (0) target = $region69
    $region68: #{tpu_custom_call.1} parent=1 // pred_region
      %156 = dma.done [#allocation8], 64
    $region69: #{tpu_custom_call.1} parent=1 // pred_fallthru
      _
    // Predicated region
    $region70: #{tpu_custom_call.1} parent=1 // pred_check
      _
    $region71: #{tpu_custom_call.1} parent=1 // pred_check_branch
      %158 = sbr.rel (0) target = $region73
    $region72: #{tpu_custom_call.1} parent=1 // pred_region
      %159 = dma.done [#allocation8], 512
    $region73: #{tpu_custom_call.1} parent=1 // pred_fallthru
      _
    // Predicated region
    $region74: #{tpu_custom_call.1} parent=1 // pred_check
      _
    $region75: #{tpu_custom_call.1} parent=1 // pred_check_branch
      %161 = sbr.rel (0) target = $region77
    $region76: #{tpu_custom_call.1} parent=1 // pred_region
      %162 = dma.done [#allocation11], 512
    $region77: #{tpu_custom_call.1} parent=1 // pred_fallthru
      _
    // Predicated region
    $region78: #{tpu_custom_call.1} parent=1 // pred_check
      _
    $region79: #{tpu_custom_call.1} parent=1 // pred_check_branch
      %164 = sbr.rel (0) target = $region81
    $region80: #{tpu_custom_call.1} parent=1 // pred_region
      %165 = dma.done [#allocation11], 512
    $region81: #{tpu_custom_call.1} parent=1 // pred_fallthru
      _
    // Predicated region
    $region82: #{tpu_custom_call.1} parent=1 // pred_check
      _
    $region83: #{tpu_custom_call.1} parent=1 // pred_check_branch
      %167 = sbr.rel (0) target = $region85
    $region84: #{tpu_custom_call.1} parent=1 // pred_region
      %168 = dma.done [#allocation14], 512
    $region85: #{tpu_custom_call.1} parent=1 // pred_fallthru
      _
    // Predicated region
    $region86: #{tpu_custom_call.1} parent=1 // pred_check
      _
    $region87: #{tpu_custom_call.1} parent=1 // pred_check_branch
      %170 = sbr.rel (0) target = $region89
    $region88: #{tpu_custom_call.1} parent=1 // pred_region
      %171 = dma.done [#allocation14], 512
    $region89: #{tpu_custom_call.1} parent=1 // pred_fallthru
      _
    // Predicated region
    $region90: #{tpu_custom_call.1} parent=1 // pred_check
      _
    $region91: #{tpu_custom_call.1} parent=1 // pred_check_branch
      %173 = sbr.rel (0) target = $region93
    $region92: #{tpu_custom_call.1} parent=1 // pred_region
      %174 = dma.done [#allocation17], 16
    $region93: #{tpu_custom_call.1} parent=1 // pred_fallthru
      _
    // Predicated region
    $region94: #{tpu_custom_call.1} parent=1 // pred_check
      _
    $region95: #{tpu_custom_call.1} parent=1 // pred_check_branch
      %176 = sbr.rel (0) target = $region97
    $region96: #{tpu_custom_call.1} parent=1 // pred_region
      %177 = dma.done [#allocation17], 3072
    $region97: #{tpu_custom_call.1} parent=1 // pred_fallthru
      _
    // Predicated region
    $region98: #{tpu_custom_call.1} parent=1 // pred_check
      _
    $region99: #{tpu_custom_call.1} parent=1 // pred_check_branch
      %179 = sbr.rel (0) target = $region101
    $region100: #{tpu_custom_call.1} parent=1 // pred_region
      %180 = dma.done [#allocation20], 1024
    $region101: #{tpu_custom_call.1} parent=1 // pred_fallthru
      _
    %vm182 = vcmask 3072
    %183 = vst.msk [vmem:[#allocation2] sm:$0xf] %vm182, 0.0
    %vm184 = vcmask 142472
    %185 = vst.msk [vmem:[#allocation2] sm:$0xf] %vm184, 0.0
    %v186 = vld [vmem:[#allocation4] sm:$0xf]
    %188 = vrot.lane.b32.xlu0 %v186, 1
    %v189 = vpop.permute.xlu0 %188
    %vm191 = vcmask 134152
    %192 = vst.msk [vmem:[#allocation2] sm:$0xf] %vm191, %v189
    %v193 = vld [vmem:[#allocation7] sm:$0x7]
    %v194 = vld [vmem:[#allocation2] sm:$0xf]
    %v195 = vlaneseq
    %v196 = vshrl.u32 %v195, 7
    %v197 = vsub.s32 0, %v196
    %v198 = vrot.slane %v194, %v197
    %200 = vbcast.lane.b32.xlu0 %v198, 256
    %v201 = vpop.permute.xlu0 %200
    %s203 = sor.u32 256, 8
    %204 = vbcast.lane.b32.xlu0 %v198, %s203
    %v205 = vpop.permute.xlu0 %204
    %v206 = vlaneseq
    %v207 = vshrl.u32 %v206, 7
    %v208 = vsub.s32 1, %v207
    %v209 = vrot.slane %v194, %v208
    %211 = vbcast.lane.b32.xlu0 %v209, 256
    %v212 = vpop.permute.xlu0 %211
    %s214 = sor.u32 256, 8
    %215 = vbcast.lane.b32.xlu0 %v209, %s214
    %v216 = vpop.permute.xlu0 %215
    %v217 = vlaneseq
    %v218 = vshrl.u32 %v217, 7
    %v219 = vsub.s32 2, %v218
    %v220 = vrot.slane %v194, %v219
    %222 = vbcast.lane.b32.xlu0 %v220, 256
    %v223 = vpop.permute.xlu0 %222
    %s225 = sor.u32 256, 8
    %226 = vbcast.lane.b32.xlu0 %v220, %s225
    %v227 = vpop.permute.xlu0 %226
    %v228 = vlaneseq
    %v229 = vshrl.u32 %v228, 7
    %v230 = vsub.s32 3, %v229
    %v231 = vrot.slane %v194, %v230
    %233 = vbcast.lane.b32.xlu0 %v231, 256
    %v234 = vpop.permute.xlu0 %233
    %s236 = sor.u32 256, 8
    %237 = vbcast.lane.b32.xlu0 %v231, %s236
    %v238 = vpop.permute.xlu0 %237
    %v239 = vlaneseq
    %v240 = vshrl.u32 %v239, 7
    %v241 = vsub.s32 0, %v240
    %v242 = vrot.slane %v193, %v241
    %v243 = vmul.f32 %v201, %v242
    %v244 = vmul.f32 %v205, %v242
    %v245 = vmul.f32 %v212, %v242
    %v246 = vmul.f32 %v216, %v242
    %v247 = vmul.f32 %v223, %v242
    %v248 = vmul.f32 %v227, %v242
    %v249 = vmul.f32 %v234, %v242
    %v250 = vmul.f32 %v238, %v242
    %s252 = sor.u32 256, 1
    %253 = vbcast.lane.b32.xlu0 %v198, %s252
    %v254 = vpop.permute.xlu0 %253
    %s256 = sor.u32 256, 9
    %257 = vbcast.lane.b32.xlu0 %v198, %s256
    %v258 = vpop.permute.xlu0 %257
    %s260 = sor.u32 256, 1
    %261 = vbcast.lane.b32.xlu0 %v209, %s260
    %v262 = vpop.permute.xlu0 %261
    %s264 = sor.u32 256, 9
    %265 = vbcast.lane.b32.xlu0 %v209, %s264
    %v266 = vpop.permute.xlu0 %265
    %s268 = sor.u32 256, 1
    %269 = vbcast.lane.b32.xlu0 %v220, %s268
    %v270 = vpop.permute.xlu0 %269
    %s272 = sor.u32 256, 9
    %273 = vbcast.lane.b32.xlu0 %v220, %s272
    %v274 = vpop.permute.xlu0 %273
    %s276 = sor.u32 256, 1
    %277 = vbcast.lane.b32.xlu0 %v231, %s276
    %v278 = vpop.permute.xlu0 %277
    %s280 = sor.u32 256, 9
    %281 = vbcast.lane.b32.xlu0 %v231, %s280
    %v282 = vpop.permute.xlu0 %281
    %v283 = vlaneseq
    %v284 = vshrl.u32 %v283, 7
    %v285 = vsub.s32 1, %v284
    %v286 = vrot.slane %v193, %v285
    %v287 = vmul.f32 %v254, %v286
    %v288 = vmul.f32 %v258, %v286
    %v289 = vmul.f32 %v262, %v286
    %v290 = vmul.f32 %v266, %v286
    %v291 = vmul.f32 %v270, %v286
    %v292 = vmul.f32 %v274, %v286
    %v293 = vmul.f32 %v278, %v286
    %v294 = vmul.f32 %v282, %v286
    %v295 = vadd.f32 %v243, %v287
    %v296 = vadd.f32 %v244, %v288
    %v297 = vadd.f32 %v245, %v289
    %v298 = vadd.f32 %v246, %v290
    %v299 = vadd.f32 %v247, %v291
    %v300 = vadd.f32 %v248, %v292
    %v301 = vadd.f32 %v249, %v293
    %v302 = vadd.f32 %v250, %v294
    %s304 = sor.u32 256, 2
    %305 = vbcast.lane.b32.xlu0 %v198, %s304
    %v306 = vpop.permute.xlu0 %305
    %s308 = sor.u32 256, 10
    %309 = vbcast.lane.b32.xlu0 %v198, %s308
    %v310 = vpop.permute.xlu0 %309
    %s312 = sor.u32 256, 2
    %313 = vbcast.lane.b32.xlu0 %v209, %s312
    %v314 = vpop.permute.xlu0 %313
    %s316 = sor.u32 256, 10
    %317 = vbcast.lane.b32.xlu0 %v209, %s316
    %v318 = vpop.permute.xlu0 %317
    %s320 = sor.u32 256, 2
    %321 = vbcast.lane.b32.xlu0 %v220, %s320
    %v322 = vpop.permute.xlu0 %321
    %s324 = sor.u32 256, 10
    %325 = vbcast.lane.b32.xlu0 %v220, %s324
    %v326 = vpop.permute.xlu0 %325
    %s328 = sor.u32 256, 2
    %329 = vbcast.lane.b32.xlu0 %v231, %s328
    %v330 = vpop.permute.xlu0 %329
    %s332 = sor.u32 256, 10
    %333 = vbcast.lane.b32.xlu0 %v231, %s332
    %v334 = vpop.permute.xlu0 %333
    %v335 = vlaneseq
    %v336 = vshrl.u32 %v335, 7
    %v337 = vsub.s32 2, %v336
    %v338 = vrot.slane %v193, %v337
    %v339 = vmul.f32 %v306, %v338
    %v340 = vmul.f32 %v310, %v338
    %v341 = vmul.f32 %v314, %v338
    %v342 = vmul.f32 %v318, %v338
    %v343 = vmul.f32 %v322, %v338
    %v344 = vmul.f32 %v326, %v338
    %v345 = vmul.f32 %v330, %v338
    %v346 = vmul.f32 %v334, %v338
    %v347 = vadd.f32 %v295, %v339
    %v348 = vadd.f32 %v296, %v340
    %v349 = vadd.f32 %v297, %v341
    %v350 = vadd.f32 %v298, %v342
    %v351 = vadd.f32 %v299, %v343
    %v352 = vadd.f32 %v300, %v344
    %v353 = vadd.f32 %v301, %v345
    %v354 = vadd.f32 %v302, %v346
    %v355 = vld [vmem:[%s2] sm:$0x1]
    %v357 = vlaneseq
    %v358 = vshrl.u32 %v357, 7
    %v359 = vsub.s32 0, %v358
    %v360 = vrot.slane %v355, %v359
    %v362 = vadd.f32 %v347, %v360
    %v363 = vadd.f32 %v348, %v360
    %v364 = vadd.f32 %v349, %v360
    %v365 = vadd.f32 %v350, %v360
    %v366 = vadd.f32 %v351, %v360
    %v367 = vadd.f32 %v352, %v360
    %v368 = vadd.f32 %v353, %v360
    %v369 = vadd.f32 %v354, %v360
    %v370 = vmax.f32 %v362, 0.0
    %v371 = vmax.f32 %v363, 0.0
    %v372 = vmax.f32 %v364, 0.0
    %v373 = vmax.f32 %v365, 0.0
    %v374 = vmax.f32 %v366, 0.0
    %v375 = vmax.f32 %v367, 0.0
    %v376 = vmax.f32 %v368, 0.0
    %v377 = vmax.f32 %v369, 0.0
    %vm378 = vcmask 516096
    %vm379 = vsmask.f32 256
    %vm380 = vmand %vm378, %vm379
    %v381 = vld [vmem:[#allocation3] sm:$0x1]
    %v382 = vsel %vm380, 0, %v381
    %383 = vst [vmem:[#allocation3] sm:$0x1] %v382
    %v384 = vld [vmem:[#allocation3 + $0xc] sm:$0x1]
    %v385 = vsel %vm380, 0, %v384
    %386 = vst [vmem:[#allocation3 + $0xc] sm:$0x1] %v385
    %v387 = vld [vmem:[#allocation3 + $0x18] sm:$0x1]
    %v388 = vsel %vm380, 0, %v387
    %389 = vst [vmem:[#allocation3 + $0x18] sm:$0x1] %v388
    %v390 = vld [vmem:[#allocation3 + $0x24] sm:$0x1]
    %v391 = vsel %vm380, 0, %v390
    %392 = vst [vmem:[#allocation3 + $0x24] sm:$0x1] %v391
    %vm393 = vsmask.f32 7938
    %vm394 = vmand %vm378, %vm393
    %v395 = vld [vmem:[#allocation3 + $0x8] sm:$0x1]
    %v396 = vsel %vm394, 0, %v395
    %397 = vst [vmem:[#allocation3 + $0x8] sm:$0x1] %v396
    %v398 = vld [vmem:[#allocation3 + $0x14] sm:$0x1]
    %v399 = vsel %vm394, 0, %v398
    %400 = vst [vmem:[#allocation3 + $0x14] sm:$0x1] %v399
    %v401 = vld [vmem:[#allocation3 + $0x20] sm:$0x1]
    %v402 = vsel %vm394, 0, %v401
    %403 = vst [vmem:[#allocation3 + $0x20] sm:$0x1] %v402
    %v404 = vld [vmem:[#allocation3 + $0x2c] sm:$0x1]
    %v405 = vsel %vm394, 0, %v404
    %406 = vst [vmem:[#allocation3 + $0x2c] sm:$0x1] %v405
    %v407 = vpack.c.bf16 %v371, %v370
    %v408 = vpack.c.bf16 %v373, %v372
    %v409 = vpack.c.bf16 %v375, %v374
    %v410 = vpack.c.bf16 %v377, %v376
    %v415 = vunpack.c.l.b16 %v407
    %v416 = vunpack.c.h.b16 %v407
    %v417 = vunpack.c.l.b16 %v408
    %v418 = vunpack.c.h.b16 %v408
    %v419 = vunpack.c.l.b16 %v409
    %v420 = vunpack.c.h.b16 %v409
    %v421 = vunpack.c.l.b16 %v410
    %v422 = vunpack.c.h.b16 %v410
    %v423 = vpack.c.b16 %v415, %v415
    %v424 = vpack.c.b16 %v416, %v416
    %v425 = vpack.c.b16 %v417, %v417
    %v426 = vpack.c.b16 %v418, %v418
    %v427 = vpack.c.b16 %v419, %v419
    %v428 = vpack.c.b16 %v420, %v420
    %v429 = vpack.c.b16 %v421, %v421
    %v430 = vpack.c.b16 %v422, %v422
    %vm431 = vsmask.f32 4368
    %vm432 = vmor %vm379, %vm431
    %v434 = vshrl.u32 %v423, 16
    %v436 = vrot.slane %v434, 7
    %v437 = vshll.u32 %v423, 16
    %v439 = vor.u32 %v436, %v437
    %v440 = vrot.slane %v436, 4
    %v442 = vshrl.u32 %v424, 16
    %v444 = vrot.slane %v442, 7
    %v445 = vshll.u32 %v424, 16
    %v447 = vor.u32 %v444, %v445
    %v448 = vsel %vm432, %v440, %v447
    %v449 = vrot.slane %v444, 4
    %v451 = vshrl.u32 %v425, 16
    %v453 = vrot.slane %v451, 7
    %v454 = vshll.u32 %v425, 16
    %v456 = vor.u32 %v453, %v454
    %v457 = vrot.slane %v453, 4
    %v459 = vshrl.u32 %v426, 16
    %v461 = vrot.slane %v459, 7
    %v462 = vshll.u32 %v426, 16
    %v464 = vor.u32 %v461, %v462
    %v465 = vsel %vm432, %v457, %v464
    %v466 = vrot.slane %v461, 4
    %v468 = vshrl.u32 %v427, 16
    %v470 = vrot.slane %v468, 7
    %v471 = vshll.u32 %v427, 16
    %v473 = vor.u32 %v470, %v471
    %v474 = vrot.slane %v470, 4
    %v476 = vshrl.u32 %v428, 16
    %v478 = vrot.slane %v476, 7
    %v479 = vshll.u32 %v428, 16
    %v481 = vor.u32 %v478, %v479
    %v482 = vsel %vm432, %v474, %v481
    %v483 = vrot.slane %v478, 4
    %v485 = vshrl.u32 %v429, 16
    %v487 = vrot.slane %v485, 7
    %v488 = vshll.u32 %v429, 16
    %v490 = vor.u32 %v487, %v488
    %v491 = vrot.slane %v487, 4
    %v493 = vshrl.u32 %v430, 16
    %v495 = vrot.slane %v493, 7
    %v496 = vshll.u32 %v430, 16
    %v498 = vor.u32 %v495, %v496
    %v499 = vsel %vm432, %v491, %v498
    %v500 = vrot.slane %v495, 4
    %vm513 = vcmask 519168
    %vm514 = vmand %vm513, %vm393
    %v515 = vld [vmem:[#allocation3] sm:$0xf]
    %v516 = vsel %vm514, %v439, %v515
    %517 = vst [vmem:[#allocation3] sm:$0xf] %v516
    %vm518 = vcmask 519168
    %519 = vst.msk [vmem:[#allocation3 + $0x4] sm:$0xf] %vm518, %v448
    %v520 = vld [vmem:[#allocation3 + $0x8] sm:$0x1]
    %v521 = vsel %vm380, %v449, %v520
    %522 = vst [vmem:[#allocation3 + $0x8] sm:$0x1] %v521
    %v523 = vld [vmem:[#allocation3 + $0xc] sm:$0xf]
    %v524 = vsel %vm514, %v456, %v523
    %525 = vst [vmem:[#allocation3 + $0xc] sm:$0xf] %v524
    %526 = vst.msk [vmem:[#allocation3 + $0x10] sm:$0xf] %vm518, %v465
    %v527 = vld [vmem:[#allocation3 + $0x14] sm:$0x1]
    %v528 = vsel %vm380, %v466, %v527
    %529 = vst [vmem:[#allocation3 + $0x14] sm:$0x1] %v528
    %v530 = vld [vmem:[#allocation3 + $0x18] sm:$0xf]
    %v531 = vsel %vm514, %v473, %v530
    %532 = vst [vmem:[#allocation3 + $0x18] sm:$0xf] %v531
    %533 = vst.msk [vmem:[#allocation3 + $0x1c] sm:$0xf] %vm518, %v482
    %v534 = vld [vmem:[#allocation3 + $0x20] sm:$0x1]
    %v535 = vsel %vm380, %v483, %v534
    %536 = vst [vmem:[#allocation3 + $0x20] sm:$0x1] %v535
    %v537 = vld [vmem:[#allocation3 + $0x24] sm:$0xf]
    %v538 = vsel %vm514, %v490, %v537
    %539 = vst [vmem:[#allocation3 + $0x24] sm:$0xf] %v538
    %540 = vst.msk [vmem:[#allocation3 + $0x28] sm:$0xf] %vm518, %v499
    %v541 = vld [vmem:[#allocation3 + $0x2c] sm:$0x1]
    %v542 = vsel %vm380, %v500, %v541
    %543 = vst [vmem:[#allocation3 + $0x2c] sm:$0x1] %v542
    %v544 = vld [vmem:[#allocation3] sm:$0xf]
    %v545 = vld [vmem:[#allocation3 + $0x4] sm:$0xf]
    %v546 = vld [vmem:[#allocation3 + $0xc] sm:$0xf]
    %v547 = vld [vmem:[#allocation3 + $0x10] sm:$0xf]
    %v548 = vld [vmem:[#allocation3 + $0x18] sm:$0xf]
    %v549 = vld [vmem:[#allocation3 + $0x1c] sm:$0xf]
    %v550 = vld [vmem:[#allocation3 + $0x24] sm:$0xf]
    %v551 = vld [vmem:[#allocation3 + $0x28] sm:$0xf]
    %v552 = vld [vmem:[#allocation9] sm:$0xf]
    %v553 = vld [vmem:[#allocation9 + $0x4] sm:$0xf]
    %v554 = vld [vmem:[#allocation9 + $0x8] sm:$0xf]
    %v555 = vld [vmem:[#allocation9 + $0xc] sm:$0xf]
    %v556 = vld [vmem:[#allocation9 + $0x10] sm:$0xf]
    %v557 = vld [vmem:[#allocation9 + $0x14] sm:$0xf]
    %v558 = vld [vmem:[#allocation9 + $0x18] sm:$0xf]
    %v559 = vld [vmem:[#allocation9 + $0x1c] sm:$0xf]
    %v560 = vld [vmem:[#allocation3 + $0x8] sm:$0x1]
    %v561 = vld [vmem:[#allocation3 + $0x14] sm:$0x1]
    %v562 = vld [vmem:[#allocation3 + $0x20] sm:$0x1]
    %v563 = vld [vmem:[#allocation3 + $0x2c] sm:$0x1]
    %vm564 = vsmask.f32 3328
    %vm565 = vsmask.f32 7440
    %vm566 = vmor %vm564, %vm565
    %v568 = vshrl.u32 %v544, 16
    %v570 = vrot.slane %v568, 4
    %v571 = vshll.u32 %v544, 16
    %v573 = vrot.slane %v571, 5
    %v574 = vor.u32 %v570, %v573
    %v575 = vrot.slane %v574, 4
    %v577 = vshll.u32 %v545, 16
    %v579 = vrot.slane %v577, 5
    %v580 = vsel %vm566, %v575, %v579
    %v581 = vshrl.u32 %v545, 16
    %v583 = vrot.slane %v581, 4
    %v584 = vor.u32 %v583, %v579
    %v585 = vrot.slane %v584, 4
    %v587 = vshll.u32 %v560, 16
    %v589 = vrot.slane %v587, 5
    %v590 = vsel %vm566, %v585, %v589
    %v592 = vshrl.u32 %v546, 16
    %v594 = vrot.slane %v592, 4
    %v595 = vshll.u32 %v546, 16
    %v597 = vrot.slane %v595, 5
    %v598 = vor.u32 %v594, %v597
    %v599 = vrot.slane %v598, 4
    %v601 = vshll.u32 %v547, 16
    %v603 = vrot.slane %v601, 5
    %v604 = vsel %vm566, %v599, %v603
    %v605 = vshrl.u32 %v547, 16
    %v607 = vrot.slane %v605, 4
    %v608 = vor.u32 %v607, %v603
    %v609 = vrot.slane %v608, 4
    %v611 = vshll.u32 %v561, 16
    %v613 = vrot.slane %v611, 5
    %v614 = vsel %vm566, %v609, %v613
    %v616 = vshrl.u32 %v548, 16
    %v618 = vrot.slane %v616, 4
    %v619 = vshll.u32 %v548, 16
    %v621 = vrot.slane %v619, 5
    %v622 = vor.u32 %v618, %v621
    %v623 = vrot.slane %v622, 4
    %v625 = vshll.u32 %v549, 16
    %v627 = vrot.slane %v625, 5
    %v628 = vsel %vm566, %v623, %v627
    %v629 = vshrl.u32 %v549, 16
    %v631 = vrot.slane %v629, 4
    %v632 = vor.u32 %v631, %v627
    %v633 = vrot.slane %v632, 4
    %v635 = vshll.u32 %v562, 16
    %v637 = vrot.slane %v635, 5
    %v638 = vsel %vm566, %v633, %v637
    %v640 = vshrl.u32 %v550, 16
    %v642 = vrot.slane %v640, 4
    %v643 = vshll.u32 %v550, 16
    %v645 = vrot.slane %v643, 5
    %v646 = vor.u32 %v642, %v645
    %v647 = vrot.slane %v646, 4
    %v649 = vshll.u32 %v551, 16
    %v651 = vrot.slane %v649, 5
    %v652 = vsel %vm566, %v647, %v651
    %v653 = vshrl.u32 %v551, 16
    %v655 = vrot.slane %v653, 4
    %v656 = vor.u32 %v655, %v651
    %v657 = vrot.slane %v656, 4
    %v659 = vshll.u32 %v563, 16
    %v661 = vrot.slane %v659, 5
    %v662 = vsel %vm566, %v657, %v661
    %v663 = vld [vmem:[#allocation10] sm:$0xf]
    %v664 = vld [vmem:[#allocation10 + $0x4] sm:$0xf]
    %v665 = vld [vmem:[#allocation10 + $0x8] sm:$0xf]
    %v666 = vld [vmem:[#allocation10 + $0xc] sm:$0xf]
    %v667 = vld [vmem:[#allocation10 + $0x10] sm:$0xf]
    %v668 = vld [vmem:[#allocation10 + $0x14] sm:$0xf]
    %v669 = vld [vmem:[#allocation10 + $0x18] sm:$0xf]
    %v670 = vld [vmem:[#allocation10 + $0x1c] sm:$0xf]
    %v671 = vunpack.c.l.b16 %v580
    %v672 = vunpack.c.l.b16 %v590
    %v673 = vunpack.c.l.b16 %v604
    %v674 = vunpack.c.l.b16 %v614
    %v675 = vunpack.c.l.b16 %v628
    %v676 = vunpack.c.l.b16 %v638
    %v677 = vunpack.c.l.b16 %v652
    %v678 = vunpack.c.l.b16 %v662
    %v679 = vpack.c.b16 %v672, %v671
    %v680 = vpack.c.b16 %v674, %v673
    %v681 = vpack.c.b16 %v676, %v675
    %v682 = vpack.c.b16 %v678, %v677
    %v691 = vunpack.c.l.b16 %v663
    %v692 = vunpack.c.l.b16 %v664
    %v693 = vunpack.c.l.b16 %v665
    %v694 = vunpack.c.l.b16 %v666
    %v695 = vunpack.c.l.b16 %v667
    %v696 = vunpack.c.l.b16 %v668
    %v697 = vunpack.c.l.b16 %v669
    %v698 = vunpack.c.l.b16 %v670
    %v699 = vpack.c.b16 %v692, %v691
    %v700 = vpack.c.b16 %v694, %v693
    %v701 = vpack.c.b16 %v696, %v695
    %v702 = vpack.c.b16 %v698, %v697
    %vm707 = vcmask 523264
    %v709 = vsel %vm707, %v679, 0
    %v712 = vsel %vm707, %v680, 0
    %v715 = vsel %vm707, %v681, 0
    %v718 = vsel %vm707, %v682, 0
    %720 = vmatprep.subr.bf16.mxu0 0
    %721 = vmatpush1.bf16.msra.mxu0 %v699
    %722 = vmatprep.subr.bf16.mxu0 0
    %723 = vmatpush1.bf16.msra.mxu0 %v700
    %724 = vmatprep.subr.bf16.mxu0 0
    %725 = vmatpush1.bf16.msra.mxu0 %v701
    %726 = vmatprep.subr.bf16.mxu0 0
    %727 = vmatpush1.bf16.msra.mxu0 %v702
    %728 = vmatprep.subr.bf16.mxu0 0
    %729 = vmatpush1.bf16.msra.mxu0 0
    %730 = vmatprep.subr.bf16.mxu0 0
    %731 = vmatpush1.bf16.msra.mxu0 0
    %732 = vmatprep.subr.bf16.mxu0 0
    %733 = vmatpush1.bf16.msra.mxu0 0
    %734 = vmatprep.subr.bf16.mxu0 0
    %735 = vmatpush1.bf16.msra.mxu0 0
    %736 = vmatprep.subr.bf16.mxu0 0
    %737 = vmatpush1.bf16.msra.mxu0 0
    %738 = vmatprep.subr.bf16.mxu0 0
    %739 = vmatpush1.bf16.msra.mxu0 0
    %740 = vmatprep.subr.bf16.mxu0 0
    %741 = vmatpush1.bf16.msra.mxu0 0
    %742 = vmatprep.subr.bf16.mxu0 0
    %743 = vmatpush1.bf16.msra.mxu0 0
    %744 = vmatprep.subr.bf16.mxu0 0
    %745 = vmatpush1.bf16.msra.mxu0 0
    %746 = vmatprep.subr.bf16.mxu0 0
    %747 = vmatpush1.bf16.msra.mxu0 0
    %748 = vmatprep.subr.bf16.mxu0 0
    %749 = vmatpush1.bf16.msra.mxu0 0
    %750 = vmatprep.subr.bf16.mxu0 0
    %751 = vmatpush1.bf16.msra.mxu0 0
    %752 = vmatprep.mubr.bf16.mxu0 0
    %753 = vmatmul.mubr.bf16.gmra.mrb[0].mxu0 %v709
    %v754 = vpop.f32.mrb[0].mxu0
    %v755 = vadd.f32 0.0, %v754
    %v756 = vpop.f32.mrb[0].mxu0
    %v757 = vpop.f32.mrb[0].mxu0
    %v758 = vadd.f32 0.0, %v757
    %v759 = vpop.f32.mrb[0].mxu0
    %760 = vmatprep.mubr.bf16.mxu0 0
    %761 = vmatmul.mubr.bf16.gmra.mrb[0].mxu0 %v712
    %v762 = vpop.f32.mrb[0].mxu0
    %v763 = vadd.f32 0.0, %v762
    %v764 = vpop.f32.mrb[0].mxu0
    %v765 = vpop.f32.mrb[0].mxu0
    %v766 = vadd.f32 0.0, %v765
    %v767 = vpop.f32.mrb[0].mxu0
    %768 = vmatprep.mubr.bf16.mxu0 0
    %769 = vmatmul.mubr.bf16.gmra.mrb[0].mxu0 %v715
    %v770 = vpop.f32.mrb[0].mxu0
    %v771 = vadd.f32 0.0, %v770
    %v772 = vpop.f32.mrb[0].mxu0
    %v773 = vpop.f32.mrb[0].mxu0
    %v774 = vadd.f32 0.0, %v773
    %v775 = vpop.f32.mrb[0].mxu0
    %776 = vmatprep.mubr.bf16.mxu0 0
    %777 = vmatmul.mubr.bf16.gmra.mrb[0].mxu0 %v718
    %v778 = vpop.f32.mrb[0].mxu0
    %v779 = vadd.f32 0.0, %v778
    %v780 = vpop.f32.mrb[0].mxu0
    %v781 = vpop.f32.mrb[0].mxu0
    %v782 = vadd.f32 0.0, %v781
    %v783 = vpop.f32.mrb[0].mxu0
    %784 = vdwg.mxu0
    %v793 = vunpack.c.l.b16 %v544
    %v794 = vunpack.c.l.b16 %v545
    %v795 = vunpack.c.l.b16 %v546
    %v796 = vunpack.c.l.b16 %v547
    %v797 = vunpack.c.l.b16 %v548
    %v798 = vunpack.c.l.b16 %v549
    %v799 = vunpack.c.l.b16 %v550
    %v800 = vunpack.c.l.b16 %v551
    %v801 = vpack.c.b16 %v794, %v793
    %v802 = vpack.c.b16 %v796, %v795
    %v803 = vpack.c.b16 %v798, %v797
    %v804 = vpack.c.b16 %v800, %v799
    %v813 = vunpack.c.l.b16 %v552
    %v814 = vunpack.c.l.b16 %v553
    %v815 = vunpack.c.l.b16 %v554
    %v816 = vunpack.c.l.b16 %v555
    %v817 = vunpack.c.l.b16 %v556
    %v818 = vunpack.c.l.b16 %v557
    %v819 = vunpack.c.l.b16 %v558
    %v820 = vunpack.c.l.b16 %v559
    %v821 = vpack.c.b16 %v814, %v813
    %v822 = vpack.c.b16 %v816, %v815
    %v823 = vpack.c.b16 %v818, %v817
    %v824 = vpack.c.b16 %v820, %v819
    %v830 = vsel %vm707, %v801, 0
    %v833 = vsel %vm707, %v802, 0
    %v836 = vsel %vm707, %v803, 0
    %v839 = vsel %vm707, %v804, 0
    %841 = vmatprep.subr.bf16.mxu0 0
    %842 = vmatpush1.bf16.msra.mxu0 %v821
    %843 = vmatprep.subr.bf16.mxu0 0
    %844 = vmatpush1.bf16.msra.mxu0 %v822
    %845 = vmatprep.subr.bf16.mxu0 0
    %846 = vmatpush1.bf16.msra.mxu0 %v823
    %847 = vmatprep.subr.bf16.mxu0 0
    %848 = vmatpush1.bf16.msra.mxu0 %v824
    %849 = vmatprep.subr.bf16.mxu0 0
    %850 = vmatpush1.bf16.msra.mxu0 0
    %851 = vmatprep.subr.bf16.mxu0 0
    %852 = vmatpush1.bf16.msra.mxu0 0
    %853 = vmatprep.subr.bf16.mxu0 0
    %854 = vmatpush1.bf16.msra.mxu0 0
    %855 = vmatprep.subr.bf16.mxu0 0
    %856 = vmatpush1.bf16.msra.mxu0 0
    %857 = vmatprep.subr.bf16.mxu0 0
    %858 = vmatpush1.bf16.msra.mxu0 0
    %859 = vmatprep.subr.bf16.mxu0 0
    %860 = vmatpush1.bf16.msra.mxu0 0
    %861 = vmatprep.subr.bf16.mxu0 0
    %862 = vmatpush1.bf16.msra.mxu0 0
    %863 = vmatprep.subr.bf16.mxu0 0
    %864 = vmatpush1.bf16.msra.mxu0 0
    %865 = vmatprep.subr.bf16.mxu0 0
    %866 = vmatpush1.bf16.msra.mxu0 0
    %867 = vmatprep.subr.bf16.mxu0 0
    %868 = vmatpush1.bf16.msra.mxu0 0
    %869 = vmatprep.subr.bf16.mxu0 0
    %870 = vmatpush1.bf16.msra.mxu0 0
    %871 = vmatprep.subr.bf16.mxu0 0
    %872 = vmatpush1.bf16.msra.mxu0 0
    %873 = vmatprep.mubr.bf16.mxu0 0
    %874 = vmatmul.mubr.bf16.gmra.mrb[0].mxu0 %v830
    %v875 = vpop.f32.mrb[0].mxu0
    %v876 = vadd.f32 %v755, %v875
    %v877 = vpop.f32.mrb[0].mxu0
    %v878 = vpop.f32.mrb[0].mxu0
    %v879 = vadd.f32 %v758, %v878
    %v880 = vpop.f32.mrb[0].mxu0
    %881 = vmatprep.mubr.bf16.mxu0 0
    %882 = vmatmul.mubr.bf16.gmra.mrb[0].mxu0 %v833
    %v883 = vpop.f32.mrb[0].mxu0
    %v884 = vadd.f32 %v763, %v883
    %v885 = vpop.f32.mrb[0].mxu0
    %v886 = vpop.f32.mrb[0].mxu0
    %v887 = vadd.f32 %v766, %v886
    %v888 = vpop.f32.mrb[0].mxu0
    %889 = vmatprep.mubr.bf16.mxu0 0
    %890 = vmatmul.mubr.bf16.gmra.mrb[0].mxu0 %v836
    %v891 = vpop.f32.mrb[0].mxu0
    %v892 = vadd.f32 %v771, %v891
    %v893 = vpop.f32.mrb[0].mxu0
    %v894 = vpop.f32.mrb[0].mxu0
    %v895 = vadd.f32 %v774, %v894
    %v896 = vpop.f32.mrb[0].mxu0
    %897 = vmatprep.mubr.bf16.mxu0 0
    %898 = vmatmul.mubr.bf16.gmra.mrb[0].mxu0 %v839
    %v899 = vpop.f32.mrb[0].mxu0
    %v900 = vadd.f32 %v779, %v899
    %v901 = vpop.f32.mrb[0].mxu0
    %v902 = vpop.f32.mrb[0].mxu0
    %v903 = vadd.f32 %v782, %v902
    %v904 = vpop.f32.mrb[0].mxu0
    %905 = vdwg.mxu0
    %v906 = vld [vmem:[#allocation3] sm:$0xe]
    %v907 = vld [vmem:[#allocation3 + $0xc] sm:$0xe]
    %v908 = vld [vmem:[#allocation3 + $0x18] sm:$0xe]
    %v909 = vld [vmem:[#allocation3 + $0x24] sm:$0xe]
    %vm918 = vcmask 1042432
    %vm919 = vcmask 1046532
    %vm920 = vmor %vm918, %vm919
    %v921 = vrot.slane %v906, 5
    %v922 = vrot.slane %v921, 4
    %v923 = vrot.slane %v545, 5
    %v924 = vsel %vm920, %v922, %v923
    %v925 = vrot.slane %v923, 4
    %v926 = vrot.slane %v560, 5
    %v927 = vsel %vm920, %v925, %v926
    %v928 = vrot.slane %v907, 5
    %v929 = vrot.slane %v928, 4
    %v930 = vrot.slane %v547, 5
    %v931 = vsel %vm920, %v929, %v930
    %v932 = vrot.slane %v930, 4
    %v933 = vrot.slane %v561, 5
    %v934 = vsel %vm920, %v932, %v933
    %v935 = vrot.slane %v908, 5
    %v936 = vrot.slane %v935, 4
    %v937 = vrot.slane %v549, 5
    %v938 = vsel %vm920, %v936, %v937
    %v939 = vrot.slane %v937, 4
    %v940 = vrot.slane %v562, 5
    %v941 = vsel %vm920, %v939, %v940
    %v942 = vrot.slane %v909, 5
    %v943 = vrot.slane %v942, 4
    %v944 = vrot.slane %v551, 5
    %v945 = vsel %vm920, %v943, %v944
    %v946 = vrot.slane %v944, 4
    %v947 = vrot.slane %v563, 5
    %v948 = vsel %vm920, %v946, %v947
    %v949 = vld [vmem:[#allocation12] sm:$0xf]
    %v950 = vld [vmem:[#allocation12 + $0x4] sm:$0xf]
    %v951 = vld [vmem:[#allocation12 + $0x8] sm:$0xf]
    %v952 = vld [vmem:[#allocation12 + $0xc] sm:$0xf]
    %v953 = vld [vmem:[#allocation12 + $0x10] sm:$0xf]
    %v954 = vld [vmem:[#allocation12 + $0x14] sm:$0xf]
    %v955 = vld [vmem:[#allocation12 + $0x18] sm:$0xf]
    %v956 = vld [vmem:[#allocation12 + $0x1c] sm:$0xf]
    %v957 = vunpack.c.l.b16 %v924
    %v958 = vunpack.c.l.b16 %v927
    %v959 = vunpack.c.l.b16 %v931
    %v960 = vunpack.c.l.b16 %v934
    %v961 = vunpack.c.l.b16 %v938
    %v962 = vunpack.c.l.b16 %v941
    %v963 = vunpack.c.l.b16 %v945
    %v964 = vunpack.c.l.b16 %v948
    %v965 = vpack.c.b16 %v958, %v957
    %v966 = vpack.c.b16 %v960, %v959
    %v967 = vpack.c.b16 %v962, %v961
    %v968 = vpack.c.b16 %v964, %v963
    %v977 = vunpack.c.l.b16 %v949
    %v978 = vunpack.c.l.b16 %v950
    %v979 = vunpack.c.l.b16 %v951
    %v980 = vunpack.c.l.b16 %v952
    %v981 = vunpack.c.l.b16 %v953
    %v982 = vunpack.c.l.b16 %v954
    %v983 = vunpack.c.l.b16 %v955
    %v984 = vunpack.c.l.b16 %v956
    %v985 = vpack.c.b16 %v978, %v977
    %v986 = vpack.c.b16 %v980, %v979
    %v987 = vpack.c.b16 %v982, %v981
    %v988 = vpack.c.b16 %v984, %v983
    %v994 = vsel %vm707, %v965, 0
    %v997 = vsel %vm707, %v966, 0
    %v1000 = vsel %vm707, %v967, 0
    %v1003 = vsel %vm707, %v968, 0
    %1005 = vmatprep.subr.bf16.mxu0 0
    %1006 = vmatpush1.bf16.msra.mxu0 %v985
    %1007 = vmatprep.subr.bf16.mxu0 0
    %1008 = vmatpush1.bf16.msra.mxu0 %v986
    %1009 = vmatprep.subr.bf16.mxu0 0
    %1010 = vmatpush1.bf16.msra.mxu0 %v987
    %1011 = vmatprep.subr.bf16.mxu0 0
    %1012 = vmatpush1.bf16.msra.mxu0 %v988
    %1013 = vmatprep.subr.bf16.mxu0 0
    %1014 = vmatpush1.bf16.msra.mxu0 0
    %1015 = vmatprep.subr.bf16.mxu0 0
    %1016 = vmatpush1.bf16.msra.mxu0 0
    %1017 = vmatprep.subr.bf16.mxu0 0
    %1018 = vmatpush1.bf16.msra.mxu0 0
    %1019 = vmatprep.subr.bf16.mxu0 0
    %1020 = vmatpush1.bf16.msra.mxu0 0
    %1021 = vmatprep.subr.bf16.mxu0 0
    %1022 = vmatpush1.bf16.msra.mxu0 0
    %1023 = vmatprep.subr.bf16.mxu0 0
    %1024 = vmatpush1.bf16.msra.mxu0 0
    %1025 = vmatprep.subr.bf16.mxu0 0
    %1026 = vmatpush1.bf16.msra.mxu0 0
    %1027 = vmatprep.subr.bf16.mxu0 0
    %1028 = vmatpush1.bf16.msra.mxu0 0
    %1029 = vmatprep.subr.bf16.mxu0 0
    %1030 = vmatpush1.bf16.msra.mxu0 0
    %1031 = vmatprep.subr.bf16.mxu0 0
    %1032 = vmatpush1.bf16.msra.mxu0 0
    %1033 = vmatprep.subr.bf16.mxu0 0
    %1034 = vmatpush1.bf16.msra.mxu0 0
    %1035 = vmatprep.subr.bf16.mxu0 0
    %1036 = vmatpush1.bf16.msra.mxu0 0
    %1037 = vmatprep.mubr.bf16.mxu0 0
    %1038 = vmatmul.mubr.bf16.gmra.mrb[0].mxu0 %v994
    %v1039 = vpop.f32.mrb[0].mxu0
    %v1040 = vadd.f32 0.0, %v1039
    %v1041 = vpop.f32.mrb[0].mxu0
    %v1042 = vpop.f32.mrb[0].mxu0
    %v1043 = vadd.f32 0.0, %v1042
    %v1044 = vpop.f32.mrb[0].mxu0
    %1045 = vmatprep.mubr.bf16.mxu0 0
    %1046 = vmatmul.mubr.bf16.gmra.mrb[0].mxu0 %v997
    %v1047 = vpop.f32.mrb[0].mxu0
    %v1048 = vadd.f32 0.0, %v1047
    %v1049 = vpop.f32.mrb[0].mxu0
    %v1050 = vpop.f32.mrb[0].mxu0
    %v1051 = vadd.f32 0.0, %v1050
    %v1052 = vpop.f32.mrb[0].mxu0
    %1053 = vmatprep.mubr.bf16.mxu0 0
    %1054 = vmatmul.mubr.bf16.gmra.mrb[0].mxu0 %v1000
    %v1055 = vpop.f32.mrb[0].mxu0
    %v1056 = vadd.f32 0.0, %v1055
    %v1057 = vpop.f32.mrb[0].mxu0
    %v1058 = vpop.f32.mrb[0].mxu0
    %v1059 = vadd.f32 0.0, %v1058
    %v1060 = vpop.f32.mrb[0].mxu0
    %1061 = vmatprep.mubr.bf16.mxu0 0
    %1062 = vmatmul.mubr.bf16.gmra.mrb[0].mxu0 %v1003
    %v1063 = vpop.f32.mrb[0].mxu0
    %v1064 = vadd.f32 0.0, %v1063
    %v1065 = vpop.f32.mrb[0].mxu0
    %v1066 = vpop.f32.mrb[0].mxu0
    %v1067 = vadd.f32 0.0, %v1066
    %v1068 = vpop.f32.mrb[0].mxu0
    %1069 = vdwg.mxu0
    %v1070 = vadd.f32 %v876, %v1040
    %v1071 = vadd.f32 %v879, %v1043
    %v1072 = vadd.f32 %v884, %v1048
    %v1073 = vadd.f32 %v887, %v1051
    %v1074 = vadd.f32 %v892, %v1056
    %v1075 = vadd.f32 %v895, %v1059
    %v1076 = vadd.f32 %v900, %v1064
    %v1077 = vadd.f32 %v903, %v1067
    %v1078 = vld [vmem:[%s6] sm:$0x1]
    %v1080 = vlaneseq
    %v1081 = vshrl.u32 %v1080, 7
    %v1082 = vsub.s32 0, %v1081
    %v1083 = vrot.slane %v1078, %v1082
    %v1085 = vadd.f32 %v1070, %v1083
    %v1086 = vadd.f32 %v1071, %v1083
    %v1087 = vadd.f32 %v1072, %v1083
    %v1088 = vadd.f32 %v1073, %v1083
    %v1089 = vadd.f32 %v1074, %v1083
    %v1090 = vadd.f32 %v1075, %v1083
    %v1091 = vadd.f32 %v1076, %v1083
    %v1092 = vadd.f32 %v1077, %v1083
    %v1093 = vmax.f32 %v1085, 0.0
    %v1094 = vmax.f32 %v1086, 0.0
    %v1095 = vmax.f32 %v1087, 0.0
    %v1096 = vmax.f32 %v1088, 0.0
    %v1097 = vmax.f32 %v1089, 0.0
    %v1098 = vmax.f32 %v1090, 0.0
    %v1099 = vmax.f32 %v1091, 0.0
    %v1100 = vmax.f32 %v1092, 0.0
    %v1101 = vpack.c.bf16 %v1094, %v1093
    %v1102 = vpack.c.bf16 %v1096, %v1095
    %v1103 = vpack.c.bf16 %v1098, %v1097
    %v1104 = vpack.c.bf16 %v1100, %v1099
    %v1109 = vunpack.c.l.b16 %v1101
    %v1110 = vunpack.c.h.b16 %v1101
    %v1111 = vunpack.c.l.b16 %v1102
    %v1112 = vunpack.c.h.b16 %v1102
    %v1113 = vunpack.c.l.b16 %v1103
    %v1114 = vunpack.c.h.b16 %v1103
    %v1115 = vunpack.c.l.b16 %v1104
    %v1116 = vunpack.c.h.b16 %v1104
    %v1117 = vpack.c.b16 %v1109, %v1109
    %v1118 = vpack.c.b16 %v1110, %v1110
    %v1119 = vpack.c.b16 %v1111, %v1111
    %v1120 = vpack.c.b16 %v1112, %v1112
    %v1121 = vpack.c.b16 %v1113, %v1113
    %v1122 = vpack.c.b16 %v1114, %v1114
    %v1123 = vpack.c.b16 %v1115, %v1115
    %v1124 = vpack.c.b16 %v1116, %v1116
    %v1126 = vshrl.u32 %v1117, 16
    %v1128 = vrot.slane %v1126, 7
    %v1129 = vshll.u32 %v1117, 16
    %v1131 = vor.u32 %v1128, %v1129
    %v1132 = vrot.slane %v1128, 4
    %v1134 = vshrl.u32 %v1118, 16
    %v1136 = vrot.slane %v1134, 7
    %v1137 = vshll.u32 %v1118, 16
    %v1139 = vor.u32 %v1136, %v1137
    %v1140 = vsel %vm432, %v1132, %v1139
    %v1141 = vrot.slane %v1136, 4
    %v1143 = vshrl.u32 %v1119, 16
    %v1145 = vrot.slane %v1143, 7
    %v1146 = vshll.u32 %v1119, 16
    %v1148 = vor.u32 %v1145, %v1146
    %v1149 = vrot.slane %v1145, 4
    %v1151 = vshrl.u32 %v1120, 16
    %v1153 = vrot.slane %v1151, 7
    %v1154 = vshll.u32 %v1120, 16
    %v1156 = vor.u32 %v1153, %v1154
    %v1157 = vsel %vm432, %v1149, %v1156
    %v1158 = vrot.slane %v1153, 4
    %v1160 = vshrl.u32 %v1121, 16
    %v1162 = vrot.slane %v1160, 7
    %v1163 = vshll.u32 %v1121, 16
    %v1165 = vor.u32 %v1162, %v1163
    %v1166 = vrot.slane %v1162, 4
    %v1168 = vshrl.u32 %v1122, 16
    %v1170 = vrot.slane %v1168, 7
    %v1171 = vshll.u32 %v1122, 16
    %v1173 = vor.u32 %v1170, %v1171
    %v1174 = vsel %vm432, %v1166, %v1173
    %v1175 = vrot.slane %v1170, 4
    %v1177 = vshrl.u32 %v1123, 16
    %v1179 = vrot.slane %v1177, 7
    %v1180 = vshll.u32 %v1123, 16
    %v1182 = vor.u32 %v1179, %v1180
    %v1183 = vrot.slane %v1179, 4
    %v1185 = vshrl.u32 %v1124, 16
    %v1187 = vrot.slane %v1185, 7
    %v1188 = vshll.u32 %v1124, 16
    %v1190 = vor.u32 %v1187, %v1188
    %v1191 = vsel %vm432, %v1183, %v1190
    %v1192 = vrot.slane %v1187, 4
    %v1205 = vsel %vm514, %v1131, %v544
    %1206 = vst [vmem:[#allocation3] sm:$0xf] %v1205
    %1207 = vst.msk [vmem:[#allocation3 + $0x4] sm:$0xf] %vm518, %v1140
    %v1208 = vld [vmem:[#allocation3 + $0x8] sm:$0x1]
    %v1209 = vsel %vm380, %v1141, %v1208
    %1210 = vst [vmem:[#allocation3 + $0x8] sm:$0x1] %v1209
    %v1211 = vld [vmem:[#allocation3 + $0xc] sm:$0xf]
    %v1212 = vsel %vm514, %v1148, %v1211
    %1213 = vst [vmem:[#allocation3 + $0xc] sm:$0xf] %v1212
    %1214 = vst.msk [vmem:[#allocation3 + $0x10] sm:$0xf] %vm518, %v1157
    %v1215 = vld [vmem:[#allocation3 + $0x14] sm:$0x1]
    %v1216 = vsel %vm380, %v1158, %v1215
    %1217 = vst [vmem:[#allocation3 + $0x14] sm:$0x1] %v1216
    %v1218 = vld [vmem:[#allocation3 + $0x18] sm:$0xf]
    %v1219 = vsel %vm514, %v1165, %v1218
    %1220 = vst [vmem:[#allocation3 + $0x18] sm:$0xf] %v1219
    %1221 = vst.msk [vmem:[#allocation3 + $0x1c] sm:$0xf] %vm518, %v1174
    %v1222 = vld [vmem:[#allocation3 + $0x20] sm:$0x1]
    %v1223 = vsel %vm380, %v1175, %v1222
    %1224 = vst [vmem:[#allocation3 + $0x20] sm:$0x1] %v1223
    %v1225 = vld [vmem:[#allocation3 + $0x24] sm:$0xf]
    %v1226 = vsel %vm514, %v1182, %v1225
    %1227 = vst [vmem:[#allocation3 + $0x24] sm:$0xf] %v1226
    %1228 = vst.msk [vmem:[#allocation3 + $0x28] sm:$0xf] %vm518, %v1191
    %v1229 = vld [vmem:[#allocation3 + $0x2c] sm:$0x1]
    %v1230 = vsel %vm380, %v1192, %v1229
    %1231 = vst [vmem:[#allocation3 + $0x2c] sm:$0x1] %v1230
    %v1232 = vld [vmem:[#allocation3] sm:$0xf]
    %v1233 = vld [vmem:[#allocation3 + $0x4] sm:$0xf]
    %v1234 = vld [vmem:[#allocation3 + $0xc] sm:$0xf]
    %v1235 = vld [vmem:[#allocation3 + $0x10] sm:$0xf]
    %v1236 = vld [vmem:[#allocation3 + $0x18] sm:$0xf]
    %v1237 = vld [vmem:[#allocation3 + $0x1c] sm:$0xf]
    %v1238 = vld [vmem:[#allocation3 + $0x24] sm:$0xf]
    %v1239 = vld [vmem:[#allocation3 + $0x28] sm:$0xf]
    %v1240 = vld [vmem:[#allocation13] sm:$0xf]
    %v1241 = vld [vmem:[#allocation13 + $0x4] sm:$0xf]
    %v1242 = vld [vmem:[#allocation13 + $0x8] sm:$0xf]
    %v1243 = vld [vmem:[#allocation13 + $0xc] sm:$0xf]
    %v1244 = vld [vmem:[#allocation13 + $0x10] sm:$0xf]
    %v1245 = vld [vmem:[#allocation13 + $0x14] sm:$0xf]
    %v1246 = vld [vmem:[#allocation13 + $0x18] sm:$0xf]
    %v1247 = vld [vmem:[#allocation13 + $0x1c] sm:$0xf]
    %v1248 = vld [vmem:[#allocation3 + $0x8] sm:$0x1]
    %v1249 = vld [vmem:[#allocation3 + $0x14] sm:$0x1]
    %v1250 = vld [vmem:[#allocation3 + $0x20] sm:$0x1]
    %v1251 = vld [vmem:[#allocation3 + $0x2c] sm:$0x1]
    %v1253 = vshrl.u32 %v1232, 16
    %v1255 = vrot.slane %v1253, 4
    %v1256 = vshll.u32 %v1232, 16
    %v1258 = vrot.slane %v1256, 5
    %v1259 = vor.u32 %v1255, %v1258
    %v1260 = vrot.slane %v1259, 4
    %v1262 = vshll.u32 %v1233, 16
    %v1264 = vrot.slane %v1262, 5
    %v1265 = vsel %vm566, %v1260, %v1264
    %v1266 = vshrl.u32 %v1233, 16
    %v1268 = vrot.slane %v1266, 4
    %v1269 = vor.u32 %v1268, %v1264
    %v1270 = vrot.slane %v1269, 4
    %v1272 = vshll.u32 %v1248, 16
    %v1274 = vrot.slane %v1272, 5
    %v1275 = vsel %vm566, %v1270, %v1274
    %v1277 = vshrl.u32 %v1234, 16
    %v1279 = vrot.slane %v1277, 4
    %v1280 = vshll.u32 %v1234, 16
    %v1282 = vrot.slane %v1280, 5
    %v1283 = vor.u32 %v1279, %v1282
    %v1284 = vrot.slane %v1283, 4
    %v1286 = vshll.u32 %v1235, 16
    %v1288 = vrot.slane %v1286, 5
    %v1289 = vsel %vm566, %v1284, %v1288
    %v1290 = vshrl.u32 %v1235, 16
    %v1292 = vrot.slane %v1290, 4
    %v1293 = vor.u32 %v1292, %v1288
    %v1294 = vrot.slane %v1293, 4
    %v1296 = vshll.u32 %v1249, 16
    %v1298 = vrot.slane %v1296, 5
    %v1299 = vsel %vm566, %v1294, %v1298
    %v1301 = vshrl.u32 %v1236, 16
    %v1303 = vrot.slane %v1301, 4
    %v1304 = vshll.u32 %v1236, 16
    %v1306 = vrot.slane %v1304, 5
    %v1307 = vor.u32 %v1303, %v1306
    %v1308 = vrot.slane %v1307, 4
    %v1310 = vshll.u32 %v1237, 16
    %v1312 = vrot.slane %v1310, 5
    %v1313 = vsel %vm566, %v1308, %v1312
    %v1314 = vshrl.u32 %v1237, 16
    %v1316 = vrot.slane %v1314, 4
    %v1317 = vor.u32 %v1316, %v1312
    %v1318 = vrot.slane %v1317, 4
    %v1320 = vshll.u32 %v1250, 16
    %v1322 = vrot.slane %v1320, 5
    %v1323 = vsel %vm566, %v1318, %v1322
    %v1325 = vshrl.u32 %v1238, 16
    %v1327 = vrot.slane %v1325, 4
    %v1328 = vshll.u32 %v1238, 16
    %v1330 = vrot.slane %v1328, 5
    %v1331 = vor.u32 %v1327, %v1330
    %v1332 = vrot.slane %v1331, 4
    %v1334 = vshll.u32 %v1239, 16
    %v1336 = vrot.slane %v1334, 5
    %v1337 = vsel %vm566, %v1332, %v1336
    %v1338 = vshrl.u32 %v1239, 16
    %v1340 = vrot.slane %v1338, 4
    %v1341 = vor.u32 %v1340, %v1336
    %v1342 = vrot.slane %v1341, 4
    %v1344 = vshll.u32 %v1251, 16
    %v1346 = vrot.slane %v1344, 5
    %v1347 = vsel %vm566, %v1342, %v1346
    %v1348 = vld [vmem:[#allocation15] sm:$0xf]
    %v1349 = vld [vmem:[#allocation15 + $0x4] sm:$0xf]
    %v1350 = vld [vmem:[#allocation15 + $0x8] sm:$0xf]
    %v1351 = vld [vmem:[#allocation15 + $0xc] sm:$0xf]
    %v1352 = vld [vmem:[#allocation15 + $0x10] sm:$0xf]
    %v1353 = vld [vmem:[#allocation15 + $0x14] sm:$0xf]
    %v1354 = vld [vmem:[#allocation15 + $0x18] sm:$0xf]
    %v1355 = vld [vmem:[#allocation15 + $0x1c] sm:$0xf]
    %v1356 = vunpack.c.l.b16 %v1265
    %v1357 = vunpack.c.l.b16 %v1275
    %v1358 = vunpack.c.l.b16 %v1289
    %v1359 = vunpack.c.l.b16 %v1299
    %v1360 = vunpack.c.l.b16 %v1313
    %v1361 = vunpack.c.l.b16 %v1323
    %v1362 = vunpack.c.l.b16 %v1337
    %v1363 = vunpack.c.l.b16 %v1347
    %v1364 = vpack.c.b16 %v1357, %v1356
    %v1365 = vpack.c.b16 %v1359, %v1358
    %v1366 = vpack.c.b16 %v1361, %v1360
    %v1367 = vpack.c.b16 %v1363, %v1362
    %v1376 = vunpack.c.l.b16 %v1348
    %v1377 = vunpack.c.l.b16 %v1349
    %v1378 = vunpack.c.l.b16 %v1350
    %v1379 = vunpack.c.l.b16 %v1351
    %v1380 = vunpack.c.l.b16 %v1352
    %v1381 = vunpack.c.l.b16 %v1353
    %v1382 = vunpack.c.l.b16 %v1354
    %v1383 = vunpack.c.l.b16 %v1355
    %v1384 = vpack.c.b16 %v1377, %v1376
    %v1385 = vpack.c.b16 %v1379, %v1378
    %v1386 = vpack.c.b16 %v1381, %v1380
    %v1387 = vpack.c.b16 %v1383, %v1382
    %v1393 = vsel %vm707, %v1364, 0
    %v1396 = vsel %vm707, %v1365, 0
    %v1399 = vsel %vm707, %v1366, 0
    %v1402 = vsel %vm707, %v1367, 0
    %1404 = vmatprep.subr.bf16.mxu0 0
    %1405 = vmatpush1.bf16.msra.mxu0 %v1384
    %1406 = vmatprep.subr.bf16.mxu0 0
    %1407 = vmatpush1.bf16.msra.mxu0 %v1385
    %1408 = vmatprep.subr.bf16.mxu0 0
    %1409 = vmatpush1.bf16.msra.mxu0 %v1386
    %1410 = vmatprep.subr.bf16.mxu0 0
    %1411 = vmatpush1.bf16.msra.mxu0 %v1387
    %1412 = vmatprep.subr.bf16.mxu0 0
    %1413 = vmatpush1.bf16.msra.mxu0 0
    %1414 = vmatprep.subr.bf16.mxu0 0
    %1415 = vmatpush1.bf16.msra.mxu0 0
    %1416 = vmatprep.subr.bf16.mxu0 0
    %1417 = vmatpush1.bf16.msra.mxu0 0
    %1418 = vmatprep.subr.bf16.mxu0 0
    %1419 = vmatpush1.bf16.msra.mxu0 0
    %1420 = vmatprep.subr.bf16.mxu0 0
    %1421 = vmatpush1.bf16.msra.mxu0 0
    %1422 = vmatprep.subr.bf16.mxu0 0
    %1423 = vmatpush1.bf16.msra.mxu0 0
    %1424 = vmatprep.subr.bf16.mxu0 0
    %1425 = vmatpush1.bf16.msra.mxu0 0
    %1426 = vmatprep.subr.bf16.mxu0 0
    %1427 = vmatpush1.bf16.msra.mxu0 0
    %1428 = vmatprep.subr.bf16.mxu0 0
    %1429 = vmatpush1.bf16.msra.mxu0 0
    %1430 = vmatprep.subr.bf16.mxu0 0
    %1431 = vmatpush1.bf16.msra.mxu0 0
    %1432 = vmatprep.subr.bf16.mxu0 0
    %1433 = vmatpush1.bf16.msra.mxu0 0
    %1434 = vmatprep.subr.bf16.mxu0 0
    %1435 = vmatpush1.bf16.msra.mxu0 0
    %1436 = vmatprep.mubr.bf16.mxu0 0
    %1437 = vmatmul.mubr.bf16.gmra.mrb[0].mxu0 %v1393
    %v1438 = vpop.f32.mrb[0].mxu0
    %v1439 = vadd.f32 0.0, %v1438
    %v1440 = vpop.f32.mrb[0].mxu0
    %v1441 = vpop.f32.mrb[0].mxu0
    %v1442 = vadd.f32 0.0, %v1441
    %v1443 = vpop.f32.mrb[0].mxu0
    %1444 = vmatprep.mubr.bf16.mxu0 0
    %1445 = vmatmul.mubr.bf16.gmra.mrb[0].mxu0 %v1396
    %v1446 = vpop.f32.mrb[0].mxu0
    %v1447 = vadd.f32 0.0, %v1446
    %v1448 = vpop.f32.mrb[0].mxu0
    %v1449 = vpop.f32.mrb[0].mxu0
    %v1450 = vadd.f32 0.0, %v1449
    %v1451 = vpop.f32.mrb[0].mxu0
    %1452 = vmatprep.mubr.bf16.mxu0 0
    %1453 = vmatmul.mubr.bf16.gmra.mrb[0].mxu0 %v1399
    %v1454 = vpop.f32.mrb[0].mxu0
    %v1455 = vadd.f32 0.0, %v1454
    %v1456 = vpop.f32.mrb[0].mxu0
    %v1457 = vpop.f32.mrb[0].mxu0
    %v1458 = vadd.f32 0.0, %v1457
    %v1459 = vpop.f32.mrb[0].mxu0
    %1460 = vmatprep.mubr.bf16.mxu0 0
    %1461 = vmatmul.mubr.bf16.gmra.mrb[0].mxu0 %v1402
    %v1462 = vpop.f32.mrb[0].mxu0
    %v1463 = vadd.f32 0.0, %v1462
    %v1464 = vpop.f32.mrb[0].mxu0
    %v1465 = vpop.f32.mrb[0].mxu0
    %v1466 = vadd.f32 0.0, %v1465
    %v1467 = vpop.f32.mrb[0].mxu0
    %1468 = vdwg.mxu0
    %v1477 = vunpack.c.l.b16 %v1232
    %v1478 = vunpack.c.l.b16 %v1233
    %v1479 = vunpack.c.l.b16 %v1234
    %v1480 = vunpack.c.l.b16 %v1235
    %v1481 = vunpack.c.l.b16 %v1236
    %v1482 = vunpack.c.l.b16 %v1237
    %v1483 = vunpack.c.l.b16 %v1238
    %v1484 = vunpack.c.l.b16 %v1239
    %v1485 = vpack.c.b16 %v1478, %v1477
    %v1486 = vpack.c.b16 %v1480, %v1479
    %v1487 = vpack.c.b16 %v1482, %v1481
    %v1488 = vpack.c.b16 %v1484, %v1483
    %v1497 = vunpack.c.l.b16 %v1240
    %v1498 = vunpack.c.l.b16 %v1241
    %v1499 = vunpack.c.l.b16 %v1242
    %v1500 = vunpack.c.l.b16 %v1243
    %v1501 = vunpack.c.l.b16 %v1244
    %v1502 = vunpack.c.l.b16 %v1245
    %v1503 = vunpack.c.l.b16 %v1246
    %v1504 = vunpack.c.l.b16 %v1247
    %v1505 = vpack.c.b16 %v1498, %v1497
    %v1506 = vpack.c.b16 %v1500, %v1499
    %v1507 = vpack.c.b16 %v1502, %v1501
    %v1508 = vpack.c.b16 %v1504, %v1503
    %v1514 = vsel %vm707, %v1485, 0
    %v1517 = vsel %vm707, %v1486, 0
    %v1520 = vsel %vm707, %v1487, 0
    %v1523 = vsel %vm707, %v1488, 0
    %1525 = vmatprep.subr.bf16.mxu0 0
    %1526 = vmatpush1.bf16.msra.mxu0 %v1505
    %1527 = vmatprep.subr.bf16.mxu0 0
    %1528 = vmatpush1.bf16.msra.mxu0 %v1506
    %1529 = vmatprep.subr.bf16.mxu0 0
    %1530 = vmatpush1.bf16.msra.mxu0 %v1507
    %1531 = vmatprep.subr.bf16.mxu0 0
    %1532 = vmatpush1.bf16.msra.mxu0 %v1508
    %1533 = vmatprep.subr.bf16.mxu0 0
    %1534 = vmatpush1.bf16.msra.mxu0 0
    %1535 = vmatprep.subr.bf16.mxu0 0
    %1536 = vmatpush1.bf16.msra.mxu0 0
    %1537 = vmatprep.subr.bf16.mxu0 0
    %1538 = vmatpush1.bf16.msra.mxu0 0
    %1539 = vmatprep.subr.bf16.mxu0 0
    %1540 = vmatpush1.bf16.msra.mxu0 0
    %1541 = vmatprep.subr.bf16.mxu0 0
    %1542 = vmatpush1.bf16.msra.mxu0 0
    %1543 = vmatprep.subr.bf16.mxu0 0
    %1544 = vmatpush1.bf16.msra.mxu0 0
    %1545 = vmatprep.subr.bf16.mxu0 0
    %1546 = vmatpush1.bf16.msra.mxu0 0
    %1547 = vmatprep.subr.bf16.mxu0 0
    %1548 = vmatpush1.bf16.msra.mxu0 0
    %1549 = vmatprep.subr.bf16.mxu0 0
    %1550 = vmatpush1.bf16.msra.mxu0 0
    %1551 = vmatprep.subr.bf16.mxu0 0
    %1552 = vmatpush1.bf16.msra.mxu0 0
    %1553 = vmatprep.subr.bf16.mxu0 0
    %1554 = vmatpush1.bf16.msra.mxu0 0
    %1555 = vmatprep.subr.bf16.mxu0 0
    %1556 = vmatpush1.bf16.msra.mxu0 0
    %1557 = vmatprep.mubr.bf16.mxu0 0
    %1558 = vmatmul.mubr.bf16.gmra.mrb[0].mxu0 %v1514
    %v1559 = vpop.f32.mrb[0].mxu0
    %v1560 = vadd.f32 %v1439, %v1559
    %v1561 = vpop.f32.mrb[0].mxu0
    %v1562 = vpop.f32.mrb[0].mxu0
    %v1563 = vadd.f32 %v1442, %v1562
    %v1564 = vpop.f32.mrb[0].mxu0
    %1565 = vmatprep.mubr.bf16.mxu0 0
    %1566 = vmatmul.mubr.bf16.gmra.mrb[0].mxu0 %v1517
    %v1567 = vpop.f32.mrb[0].mxu0
    %v1568 = vadd.f32 %v1447, %v1567
    %v1569 = vpop.f32.mrb[0].mxu0
    %v1570 = vpop.f32.mrb[0].mxu0
    %v1571 = vadd.f32 %v1450, %v1570
    %v1572 = vpop.f32.mrb[0].mxu0
    %1573 = vmatprep.mubr.bf16.mxu0 0
    %1574 = vmatmul.mubr.bf16.gmra.mrb[0].mxu0 %v1520
    %v1575 = vpop.f32.mrb[0].mxu0
    %v1576 = vadd.f32 %v1455, %v1575
    %v1577 = vpop.f32.mrb[0].mxu0
    %v1578 = vpop.f32.mrb[0].mxu0
    %v1579 = vadd.f32 %v1458, %v1578
    %v1580 = vpop.f32.mrb[0].mxu0
    %1581 = vmatprep.mubr.bf16.mxu0 0
    %1582 = vmatmul.mubr.bf16.gmra.mrb[0].mxu0 %v1523
    %v1583 = vpop.f32.mrb[0].mxu0
    %v1584 = vadd.f32 %v1463, %v1583
    %v1585 = vpop.f32.mrb[0].mxu0
    %v1586 = vpop.f32.mrb[0].mxu0
    %v1587 = vadd.f32 %v1466, %v1586
    %v1588 = vpop.f32.mrb[0].mxu0
    %1589 = vdwg.mxu0
    %v1590 = vld [vmem:[#allocation3] sm:$0xe]
    %v1591 = vld [vmem:[#allocation3 + $0xc] sm:$0xe]
    %v1592 = vld [vmem:[#allocation3 + $0x18] sm:$0xe]
    %v1593 = vld [vmem:[#allocation3 + $0x24] sm:$0xe]
    %v1602 = vrot.slane %v1590, 5
    %v1603 = vrot.slane %v1602, 4
    %v1604 = vrot.slane %v1233, 5
    %v1605 = vsel %vm920, %v1603, %v1604
    %v1606 = vrot.slane %v1604, 4
    %v1607 = vrot.slane %v1248, 5
    %v1608 = vsel %vm920, %v1606, %v1607
    %v1609 = vrot.slane %v1591, 5
    %v1610 = vrot.slane %v1609, 4
    %v1611 = vrot.slane %v1235, 5
    %v1612 = vsel %vm920, %v1610, %v1611
    %v1613 = vrot.slane %v1611, 4
    %v1614 = vrot.slane %v1249, 5
    %v1615 = vsel %vm920, %v1613, %v1614
    %v1616 = vrot.slane %v1592, 5
    %v1617 = vrot.slane %v1616, 4
    %v1618 = vrot.slane %v1237, 5
    %v1619 = vsel %vm920, %v1617, %v1618
    %v1620 = vrot.slane %v1618, 4
    %v1621 = vrot.slane %v1250, 5
    %v1622 = vsel %vm920, %v1620, %v1621
    %v1623 = vrot.slane %v1593, 5
    %v1624 = vrot.slane %v1623, 4
    %v1625 = vrot.slane %v1239, 5
    %v1626 = vsel %vm920, %v1624, %v1625
    %v1627 = vrot.slane %v1625, 4
    %v1628 = vrot.slane %v1251, 5
    %v1629 = vsel %vm920, %v1627, %v1628
    %v1630 = vld [vmem:[%s9] sm:$0xf]
    %v1631 = vld [vmem:[%s9 + $0x4] sm:$0xf]
    %v1632 = vld [vmem:[%s9 + $0x8] sm:$0xf]
    %v1633 = vld [vmem:[%s9 + $0xc] sm:$0xf]
    %v1634 = vld [vmem:[%s9 + $0x10] sm:$0xf]
    %v1635 = vld [vmem:[%s9 + $0x14] sm:$0xf]
    %v1636 = vld [vmem:[%s9 + $0x18] sm:$0xf]
    %v1637 = vld [vmem:[%s9 + $0x1c] sm:$0xf]
    %v1638 = vunpack.c.l.b16 %v1605
    %v1639 = vunpack.c.l.b16 %v1608
    %v1640 = vunpack.c.l.b16 %v1612
    %v1641 = vunpack.c.l.b16 %v1615
    %v1642 = vunpack.c.l.b16 %v1619
    %v1643 = vunpack.c.l.b16 %v1622
    %v1644 = vunpack.c.l.b16 %v1626
    %v1645 = vunpack.c.l.b16 %v1629
    %v1646 = vpack.c.b16 %v1639, %v1638
    %v1647 = vpack.c.b16 %v1641, %v1640
    %v1648 = vpack.c.b16 %v1643, %v1642
    %v1649 = vpack.c.b16 %v1645, %v1644
    %v1658 = vunpack.c.l.b16 %v1630
    %v1659 = vunpack.c.l.b16 %v1631
    %v1660 = vunpack.c.l.b16 %v1632
    %v1661 = vunpack.c.l.b16 %v1633
    %v1662 = vunpack.c.l.b16 %v1634
    %v1663 = vunpack.c.l.b16 %v1635
    %v1664 = vunpack.c.l.b16 %v1636
    %v1665 = vunpack.c.l.b16 %v1637
    %v1666 = vpack.c.b16 %v1659, %v1658
    %v1667 = vpack.c.b16 %v1661, %v1660
    %v1668 = vpack.c.b16 %v1663, %v1662
    %v1669 = vpack.c.b16 %v1665, %v1664
    %v1675 = vsel %vm707, %v1646, 0
    %v1678 = vsel %vm707, %v1647, 0
    %v1681 = vsel %vm707, %v1648, 0
    %v1684 = vsel %vm707, %v1649, 0
    %1686 = vmatprep.subr.bf16.mxu0 0
    %1687 = vmatpush1.bf16.msra.mxu0 %v1666
    %1688 = vmatprep.subr.bf16.mxu0 0
    %1689 = vmatpush1.bf16.msra.mxu0 %v1667
    %1690 = vmatprep.subr.bf16.mxu0 0
    %1691 = vmatpush1.bf16.msra.mxu0 %v1668
    %1692 = vmatprep.subr.bf16.mxu0 0
    %1693 = vmatpush1.bf16.msra.mxu0 %v1669
    %1694 = vmatprep.subr.bf16.mxu0 0
    %1695 = vmatpush1.bf16.msra.mxu0 0
    %1696 = vmatprep.subr.bf16.mxu0 0
    %1697 = vmatpush1.bf16.msra.mxu0 0
    %1698 = vmatprep.subr.bf16.mxu0 0
    %1699 = vmatpush1.bf16.msra.mxu0 0
    %1700 = vmatprep.subr.bf16.mxu0 0
    %1701 = vmatpush1.bf16.msra.mxu0 0
    %1702 = vmatprep.subr.bf16.mxu0 0
    %1703 = vmatpush1.bf16.msra.mxu0 0
    %1704 = vmatprep.subr.bf16.mxu0 0
    %1705 = vmatpush1.bf16.msra.mxu0 0
    %1706 = vmatprep.subr.bf16.mxu0 0
    %1707 = vmatpush1.bf16.msra.mxu0 0
    %1708 = vmatprep.subr.bf16.mxu0 0
    %1709 = vmatpush1.bf16.msra.mxu0 0
    %1710 = vmatprep.subr.bf16.mxu0 0
    %1711 = vmatpush1.bf16.msra.mxu0 0
    %1712 = vmatprep.subr.bf16.mxu0 0
    %1713 = vmatpush1.bf16.msra.mxu0 0
    %1714 = vmatprep.subr.bf16.mxu0 0
    %1715 = vmatpush1.bf16.msra.mxu0 0
    %1716 = vmatprep.subr.bf16.mxu0 0
    %1717 = vmatpush1.bf16.msra.mxu0 0
    %1718 = vmatprep.mubr.bf16.mxu0 0
    %1719 = vmatmul.mubr.bf16.gmra.mrb[0].mxu0 %v1675
    %v1720 = vpop.f32.mrb[0].mxu0
    %v1721 = vadd.f32 0.0, %v1720
    %v1722 = vpop.f32.mrb[0].mxu0
    %v1723 = vpop.f32.mrb[0].mxu0
    %v1724 = vadd.f32 0.0, %v1723
    %v1725 = vpop.f32.mrb[0].mxu0
    %1726 = vmatprep.mubr.bf16.mxu0 0
    %1727 = vmatmul.mubr.bf16.gmra.mrb[0].mxu0 %v1678
    %v1728 = vpop.f32.mrb[0].mxu0
    %v1729 = vadd.f32 0.0, %v1728
    %v1730 = vpop.f32.mrb[0].mxu0
    %v1731 = vpop.f32.mrb[0].mxu0
    %v1732 = vadd.f32 0.0, %v1731
    %v1733 = vpop.f32.mrb[0].mxu0
    %1734 = vmatprep.mubr.bf16.mxu0 0
    %1735 = vmatmul.mubr.bf16.gmra.mrb[0].mxu0 %v1681
    %v1736 = vpop.f32.mrb[0].mxu0
    %v1737 = vadd.f32 0.0, %v1736
    %v1738 = vpop.f32.mrb[0].mxu0
    %v1739 = vpop.f32.mrb[0].mxu0
    %v1740 = vadd.f32 0.0, %v1739
    %v1741 = vpop.f32.mrb[0].mxu0
    %1742 = vmatprep.mubr.bf16.mxu0 0
    %1743 = vmatmul.mubr.bf16.gmra.mrb[0].mxu0 %v1684
    %v1744 = vpop.f32.mrb[0].mxu0
    %v1745 = vadd.f32 0.0, %v1744
    %v1746 = vpop.f32.mrb[0].mxu0
    %v1747 = vpop.f32.mrb[0].mxu0
    %v1748 = vadd.f32 0.0, %v1747
    %v1749 = vpop.f32.mrb[0].mxu0
    %1750 = vdwg.mxu0
    %v1751 = vadd.f32 %v1560, %v1721
    %v1752 = vadd.f32 %v1563, %v1724
    %v1753 = vadd.f32 %v1568, %v1729
    %v1754 = vadd.f32 %v1571, %v1732
    %v1755 = vadd.f32 %v1576, %v1737
    %v1756 = vadd.f32 %v1579, %v1740
    %v1757 = vadd.f32 %v1584, %v1745
    %v1758 = vadd.f32 %v1587, %v1748
    %v1759 = vld [vmem:[#allocation16] sm:$0x1]
    %v1761 = vlaneseq
    %v1762 = vshrl.u32 %v1761, 7
    %v1763 = vsub.s32 0, %v1762
    %v1764 = vrot.slane %v1759, %v1763
    %v1766 = vadd.f32 %v1751, %v1764
    %v1767 = vadd.f32 %v1752, %v1764
    %v1768 = vadd.f32 %v1753, %v1764
    %v1769 = vadd.f32 %v1754, %v1764
    %v1770 = vadd.f32 %v1755, %v1764
    %v1771 = vadd.f32 %v1756, %v1764
    %v1772 = vadd.f32 %v1757, %v1764
    %v1773 = vadd.f32 %v1758, %v1764
    %v1774 = vmax.f32 %v1766, 0.0
    %v1775 = vmax.f32 %v1767, 0.0
    %v1776 = vmax.f32 %v1768, 0.0
    %v1777 = vmax.f32 %v1769, 0.0
    %v1778 = vmax.f32 %v1770, 0.0
    %v1779 = vmax.f32 %v1771, 0.0
    %v1780 = vmax.f32 %v1772, 0.0
    %v1781 = vmax.f32 %v1773, 0.0
    %v1782 = vadd.f32 %v1774, %v1775
    %v1783 = vrot.slane %v1782, 4
    %v1784 = vadd.f32 %v1782, %v1783
    %v1785 = vrot.slane %v1784, 2
    %v1786 = vadd.f32 %v1784, %v1785
    %v1787 = vrot.slane %v1786, 1
    %v1788 = vadd.f32 %v1786, %v1787
    %v1789 = vadd.f32 %v1776, %v1777
    %v1790 = vrot.slane %v1789, 4
    %v1791 = vadd.f32 %v1789, %v1790
    %v1792 = vrot.slane %v1791, 2
    %v1793 = vadd.f32 %v1791, %v1792
    %v1794 = vrot.slane %v1793, 1
    %v1795 = vadd.f32 %v1793, %v1794
    %v1796 = vadd.f32 %v1778, %v1779
    %v1797 = vrot.slane %v1796, 4
    %v1798 = vadd.f32 %v1796, %v1797
    %v1799 = vrot.slane %v1798, 2
    %v1800 = vadd.f32 %v1798, %v1799
    %v1801 = vrot.slane %v1800, 1
    %v1802 = vadd.f32 %v1800, %v1801
    %v1803 = vadd.f32 %v1780, %v1781
    %v1804 = vrot.slane %v1803, 4
    %v1805 = vadd.f32 %v1803, %v1804
    %v1806 = vrot.slane %v1805, 2
    %v1807 = vadd.f32 %v1805, %v1806
    %v1808 = vrot.slane %v1807, 1
    %v1809 = vadd.f32 %v1807, %v1808
    %v1810 = vrcp.pop 16.0
    %v1811 = vmul.f32 %v1788, %v1810
    %v1812 = vmul.f32 %v1795, %v1810
    %v1813 = vmul.f32 %v1802, %v1810
    %v1814 = vmul.f32 %v1809, %v1810
    %v1815 = vpack.c.bf16 %v1811, %v1811
    %v1816 = vpack.c.bf16 %v1812, %v1812
    %v1817 = vpack.c.bf16 %v1813, %v1813
    %v1818 = vpack.c.bf16 %v1814, %v1814
    %v1819 = vld [vmem:[#allocation18] sm:$0xff]
    %v1820 = vld [vmem:[#allocation18 + $0x8] sm:$0xf]
    %v1821 = vld [vmem:[#allocation18 + $0xc] sm:$0xff]
    %v1822 = vld [vmem:[#allocation18 + $0x14] sm:$0xf]
    %v1823 = vld [vmem:[#allocation18 + $0x18] sm:$0xff]
    %v1824 = vld [vmem:[#allocation18 + $0x20] sm:$0xf]
    %v1825 = vld [vmem:[#allocation18 + $0x24] sm:$0xff]
    %v1826 = vld [vmem:[#allocation18 + $0x2c] sm:$0xf]
    %v1827 = vld [vmem:[#allocation18 + $0x30] sm:$0xff]
    %v1828 = vld [vmem:[#allocation18 + $0x38] sm:$0xf]
    %v1829 = vld [vmem:[#allocation18 + $0x3c] sm:$0xff]
    %v1830 = vld [vmem:[#allocation18 + $0x44] sm:$0xf]
    %v1831 = vld [vmem:[#allocation18 + $0x48] sm:$0xff]
    %v1832 = vld [vmem:[#allocation18 + $0x50] sm:$0xf]
    %v1833 = vld [vmem:[#allocation18 + $0x54] sm:$0xff]
    %v1834 = vld [vmem:[#allocation18 + $0x5c] sm:$0xf]
    %v1835 = vld [vmem:[#allocation18 + $0x60] sm:$0xff]
    %v1836 = vld [vmem:[#allocation18 + $0x68] sm:$0xf]
    %v1837 = vld [vmem:[#allocation18 + $0x6c] sm:$0xff]
    %v1838 = vld [vmem:[#allocation18 + $0x74] sm:$0xf]
    %v1839 = vld [vmem:[#allocation18 + $0x78] sm:$0xff]
    %v1840 = vld [vmem:[#allocation18 + $0x80] sm:$0xf]
    %v1841 = vld [vmem:[#allocation18 + $0x84] sm:$0xff]
    %v1842 = vld [vmem:[#allocation18 + $0x8c] sm:$0xf]
    %v1843 = vld [vmem:[#allocation18 + $0x90] sm:$0xff]
    %v1844 = vld [vmem:[#allocation18 + $0x98] sm:$0xf]
    %v1845 = vld [vmem:[#allocation18 + $0x9c] sm:$0xff]
    %v1846 = vld [vmem:[#allocation18 + $0xa4] sm:$0xf]
    %v1847 = vld [vmem:[#allocation18 + $0xa8] sm:$0xff]
    %v1848 = vld [vmem:[#allocation18 + $0xb0] sm:$0xf]
    %v1849 = vld [vmem:[#allocation18 + $0xb4] sm:$0xff]
    %v1850 = vld [vmem:[#allocation18 + $0xbc] sm:$0xf]
    %v1851 = vld [vmem:[%s12] sm:$0x7]
    %v1853 = vlaneseq
    %v1854 = vshrl.u32 %v1853, 7
    %v1855 = vsub.s32 0, %v1854
    %v1856 = vrot.slane %v1851, %v1855
    %v1857 = vlaneseq
    %v1858 = vshrl.u32 %v1857, 7
    %v1859 = vsub.s32 1, %v1858
    %v1860 = vrot.slane %v1851, %v1859
    %v1861 = vlaneseq
    %v1862 = vshrl.u32 %v1861, 7
    %v1863 = vsub.s32 2, %v1862
    %v1864 = vrot.slane %v1851, %v1863
    %v1872 = vunpack.c.l.b16 %v1815
    %v1873 = vunpack.c.l.b16 %v1816
    %v1874 = vunpack.c.l.b16 %v1817
    %v1875 = vunpack.c.l.b16 %v1818
    %vm1876 = vcmask 1041409
    %v1877 = vsel %vm1876, %v1873, %v1872
    %vm1878 = vcmask 1042434
    %v1879 = vsel %vm1878, %v1874, %v1877
    %vm1880 = vcmask 1043459
    %v1881 = vsel %vm1880, %v1875, %v1879
    %v1882 = vpack.c.b16 %v1881, %v1881
    %v1916 = vunpack.c.l.b16 %v1819
    %v1917 = vunpack.c.h.b16 %v1819
    %v1918 = vunpack.c.l.b16 %v1820
    %v1919 = vunpack.c.l.b16 %v1821
    %v1920 = vunpack.c.h.b16 %v1821
    %v1921 = vunpack.c.l.b16 %v1822
    %v1922 = vunpack.c.l.b16 %v1823
    %v1923 = vunpack.c.h.b16 %v1823
    %v1924 = vunpack.c.l.b16 %v1824
    %v1925 = vunpack.c.l.b16 %v1825
    %v1926 = vunpack.c.h.b16 %v1825
    %v1927 = vunpack.c.l.b16 %v1826
    %v1928 = vunpack.c.l.b16 %v1827
    %v1929 = vunpack.c.h.b16 %v1827
    %v1930 = vunpack.c.l.b16 %v1828
    %v1931 = vunpack.c.l.b16 %v1829
    %v1932 = vunpack.c.h.b16 %v1829
    %v1933 = vunpack.c.l.b16 %v1830
    %v1934 = vunpack.c.l.b16 %v1831
    %v1935 = vunpack.c.h.b16 %v1831
    %v1936 = vunpack.c.l.b16 %v1832
    %v1937 = vunpack.c.l.b16 %v1833
    %v1938 = vunpack.c.h.b16 %v1833
    %v1939 = vunpack.c.l.b16 %v1834
    %v1940 = vunpack.c.l.b16 %v1835
    %v1941 = vunpack.c.h.b16 %v1835
    %v1942 = vunpack.c.l.b16 %v1836
    %v1943 = vunpack.c.l.b16 %v1837
    %v1944 = vunpack.c.h.b16 %v1837
    %v1945 = vunpack.c.l.b16 %v1838
    %v1946 = vunpack.c.l.b16 %v1839
    %v1947 = vunpack.c.h.b16 %v1839
    %v1948 = vunpack.c.l.b16 %v1840
    %v1949 = vunpack.c.l.b16 %v1841
    %v1950 = vunpack.c.h.b16 %v1841
    %v1951 = vunpack.c.l.b16 %v1842
    %v1952 = vunpack.c.l.b16 %v1843
    %v1953 = vunpack.c.h.b16 %v1843
    %v1954 = vunpack.c.l.b16 %v1844
    %v1955 = vunpack.c.l.b16 %v1845
    %v1956 = vunpack.c.h.b16 %v1845
    %v1957 = vunpack.c.l.b16 %v1846
    %v1958 = vunpack.c.l.b16 %v1847
    %v1959 = vunpack.c.h.b16 %v1847
    %v1960 = vunpack.c.l.b16 %v1848
    %v1961 = vunpack.c.l.b16 %v1849
    %v1962 = vunpack.c.h.b16 %v1849
    %v1963 = vunpack.c.l.b16 %v1850
    %v1964 = vpack.c.b16 %v1919, %v1916
    %v1965 = vpack.c.b16 %v1920, %v1917
    %v1966 = vpack.c.b16 %v1921, %v1918
    %v1967 = vpack.c.b16 %v1925, %v1922
    %v1968 = vpack.c.b16 %v1926, %v1923
    %v1969 = vpack.c.b16 %v1927, %v1924
    %v1970 = vpack.c.b16 %v1931, %v1928
    %v1971 = vpack.c.b16 %v1932, %v1929
    %v1972 = vpack.c.b16 %v1933, %v1930
    %v1973 = vpack.c.b16 %v1937, %v1934
    %v1974 = vpack.c.b16 %v1938, %v1935
    %v1975 = vpack.c.b16 %v1939, %v1936
    %v1976 = vpack.c.b16 %v1943, %v1940
    %v1977 = vpack.c.b16 %v1944, %v1941
    %v1978 = vpack.c.b16 %v1945, %v1942
    %v1979 = vpack.c.b16 %v1949, %v1946
    %v1980 = vpack.c.b16 %v1950, %v1947
    %v1981 = vpack.c.b16 %v1951, %v1948
    %v1982 = vpack.c.b16 %v1955, %v1952
    %v1983 = vpack.c.b16 %v1956, %v1953
    %v1984 = vpack.c.b16 %v1957, %v1954
    %v1985 = vpack.c.b16 %v1961, %v1958
    %v1986 = vpack.c.b16 %v1962, %v1959
    %v1987 = vpack.c.b16 %v1963, %v1960
    %2012 = vmatprep.subr.bf16.mxu0 %v1965
    %2013 = vmatpush1.bf16.msra.mxu0 %v1964
    %2014 = vmatprep.subr.bf16.mxu0 %v1968
    %2015 = vmatpush1.bf16.msra.mxu0 %v1967
    %2016 = vmatprep.subr.bf16.mxu0 %v1971
    %2017 = vmatpush1.bf16.msra.mxu0 %v1970
    %2018 = vmatprep.subr.bf16.mxu0 %v1974
    %2019 = vmatpush1.bf16.msra.mxu0 %v1973
    %2020 = vmatprep.subr.bf16.mxu0 %v1977
    %2021 = vmatpush1.bf16.msra.mxu0 %v1976
    %2022 = vmatprep.subr.bf16.mxu0 %v1980
    %2023 = vmatpush1.bf16.msra.mxu0 %v1979
    %2024 = vmatprep.subr.bf16.mxu0 %v1983
    %2025 = vmatpush1.bf16.msra.mxu0 %v1982
    %2026 = vmatprep.subr.bf16.mxu0 %v1986
    %2027 = vmatpush1.bf16.msra.mxu0 %v1985
    %2028 = vmatprep.subr.bf16.mxu0 0
    %2029 = vmatpush1.bf16.msra.mxu0 0
    %2030 = vmatprep.subr.bf16.mxu0 0
    %2031 = vmatpush1.bf16.msra.mxu0 0
    %2032 = vmatprep.subr.bf16.mxu0 0
    %2033 = vmatpush1.bf16.msra.mxu0 0
    %2034 = vmatprep.subr.bf16.mxu0 0
    %2035 = vmatpush1.bf16.msra.mxu0 0
    %2036 = vmatprep.subr.bf16.mxu0 0
    %2037 = vmatpush1.bf16.msra.mxu0 0
    %2038 = vmatprep.subr.bf16.mxu0 0
    %2039 = vmatpush1.bf16.msra.mxu0 0
    %2040 = vmatprep.subr.bf16.mxu0 0
    %2041 = vmatpush1.bf16.msra.mxu0 0
    %2042 = vmatprep.subr.bf16.mxu0 0
    %2043 = vmatpush1.bf16.msra.mxu0 0
    %2044 = vmatprep.mubr.bf16.mxu0 0
    %2045 = vmatmul.mubr.bf16.gmra.mrb[0].mxu0 %v1882
    %v2046 = vpop.f32.mrb[0].mxu0
    %v2047 = vadd.f32 %v1856, %v2046
    %v2048 = vpop.f32.mrb[0].mxu0
    %v2049 = vadd.f32 %v1860, %v2048
    %v2050 = vpop.f32.mrb[0].mxu0
    %v2051 = vpop.f32.mrb[0].mxu0
    %2052 = vdwg.mxu0
    %2053 = vmatprep.subr.bf16.mxu0 0
    %2054 = vmatpush1.bf16.msra.mxu0 %v1966
    %2055 = vmatprep.subr.bf16.mxu0 0
    %2056 = vmatpush1.bf16.msra.mxu0 %v1969
    %2057 = vmatprep.subr.bf16.mxu0 0
    %2058 = vmatpush1.bf16.msra.mxu0 %v1972
    %2059 = vmatprep.subr.bf16.mxu0 0
    %2060 = vmatpush1.bf16.msra.mxu0 %v1975
    %2061 = vmatprep.subr.bf16.mxu0 0
    %2062 = vmatpush1.bf16.msra.mxu0 %v1978
    %2063 = vmatprep.subr.bf16.mxu0 0
    %2064 = vmatpush1.bf16.msra.mxu0 %v1981
    %2065 = vmatprep.subr.bf16.mxu0 0
    %2066 = vmatpush1.bf16.msra.mxu0 %v1984
    %2067 = vmatprep.subr.bf16.mxu0 0
    %2068 = vmatpush1.bf16.msra.mxu0 %v1987
    %2069 = vmatprep.subr.bf16.mxu0 0
    %2070 = vmatpush1.bf16.msra.mxu0 0
    %2071 = vmatprep.subr.bf16.mxu0 0
    %2072 = vmatpush1.bf16.msra.mxu0 0
    %2073 = vmatprep.subr.bf16.mxu0 0
    %2074 = vmatpush1.bf16.msra.mxu0 0
    %2075 = vmatprep.subr.bf16.mxu0 0
    %2076 = vmatpush1.bf16.msra.mxu0 0
    %2077 = vmatprep.subr.bf16.mxu0 0
    %2078 = vmatpush1.bf16.msra.mxu0 0
    %2079 = vmatprep.subr.bf16.mxu0 0
    %2080 = vmatpush1.bf16.msra.mxu0 0
    %2081 = vmatprep.subr.bf16.mxu0 0
    %2082 = vmatpush1.bf16.msra.mxu0 0
    %2083 = vmatprep.subr.bf16.mxu0 0
    %2084 = vmatpush1.bf16.msra.mxu0 0
    %2085 = vmatprep.mubr.bf16.mxu0 0
    %2086 = vmatmul.mubr.bf16.gmra.mrb[0].mxu0 %v1882
    %v2087 = vpop.f32.mrb[0].mxu0
    %v2088 = vadd.f32 %v1864, %v2087
    %v2089 = vpop.f32.mrb[0].mxu0
    %v2090 = vpop.f32.mrb[0].mxu0
    %v2091 = vpop.f32.mrb[0].mxu0
    %2092 = vdwg.mxu0
    %2094 = vrot.lane.b32.xlu0 %v2047, 112
    %v2095 = vpop.permute.xlu0 %2094
    %2097 = vrot.lane.b32.xlu0 %v2047, 96
    %v2098 = vpop.permute.xlu0 %2097
    %2100 = vrot.lane.b32.xlu0 %v2047, 80
    %v2101 = vpop.permute.xlu0 %2100
    %2103 = vrot.lane.b32.xlu0 %v2047, 64
    %v2104 = vpop.permute.xlu0 %2103
    %2106 = vrot.lane.b32.xlu0 %v2047, 48
    %v2107 = vpop.permute.xlu0 %2106
    %2109 = vrot.lane.b32.xlu0 %v2047, 32
    %v2110 = vpop.permute.xlu0 %2109
    %2112 = vrot.lane.b32.xlu0 %v2047, 16
    %v2113 = vpop.permute.xlu0 %2112
    %v2115 = vcombine.low %v2047, %v2098
    %v2117 = vunpack.c.l.s4 1983009808
    %v2118 = vunpack.c.0.s8 %v2117
    %v2119 = vlaneseq
    %v2120 = vshrl.u32 %v2119, 7
    %v2121 = vsub.s32 %v2118, %v2120
    %v2122 = vrot.slane %v2115, %v2121
    %v2123 = vcombine.low %v2095, %v2101
    %v2125 = vunpack.c.l.s4 1983009808
    %v2126 = vunpack.c.0.s8 %v2125
    %v2127 = vlaneseq
    %v2128 = vshrl.u32 %v2127, 7
    %v2129 = vsub.s32 %v2126, %v2128
    %v2130 = vrot.slane %v2123, %v2129
    %v2131 = vcombine.low %v2104, %v2110
    %v2133 = vunpack.c.l.s4 1983009808
    %v2134 = vunpack.c.0.s8 %v2133
    %v2135 = vlaneseq
    %v2136 = vshrl.u32 %v2135, 7
    %v2137 = vsub.s32 %v2134, %v2136
    %v2138 = vrot.slane %v2131, %v2137
    %v2139 = vcombine.low %v2107, %v2113
    %v2141 = vunpack.c.l.s4 1983009808
    %v2142 = vunpack.c.0.s8 %v2141
    %v2143 = vlaneseq
    %v2144 = vshrl.u32 %v2143, 7
    %v2145 = vsub.s32 %v2142, %v2144
    %v2146 = vrot.slane %v2139, %v2145
    %v2147 = vcombine.low %v2122, %v2130
    %v2148 = vcombine.high %v2122, %v2130
    %v2150 = vunpack.c.l.s4 1934713408
    %v2151 = vunpack.c.0.s8 %v2150
    %v2152 = vlaneseq
    %v2153 = vshrl.u32 %v2152, 7
    %v2154 = vsub.s32 %v2151, %v2153
    %v2155 = vrot.slane %v2147, %v2154
    %v2157 = vunpack.c.l.s4 1934713408
    %v2158 = vunpack.c.0.s8 %v2157
    %v2159 = vlaneseq
    %v2160 = vshrl.u32 %v2159, 7
    %v2161 = vsub.s32 %v2158, %v2160
    %v2162 = vrot.slane %v2148, %v2161
    %v2163 = vcombine.low %v2138, %v2146
    %v2164 = vcombine.high %v2138, %v2146
    %v2166 = vunpack.c.l.s4 1934713408
    %v2167 = vunpack.c.0.s8 %v2166
    %v2168 = vlaneseq
    %v2169 = vshrl.u32 %v2168, 7
    %v2170 = vsub.s32 %v2167, %v2169
    %v2171 = vrot.slane %v2163, %v2170
    %v2173 = vunpack.c.l.s4 1934713408
    %v2174 = vunpack.c.0.s8 %v2173
    %v2175 = vlaneseq
    %v2176 = vshrl.u32 %v2175, 7
    %v2177 = vsub.s32 %v2174, %v2176
    %v2178 = vrot.slane %v2164, %v2177
    %v2179 = vcombine.low %v2155, %v2171
    %v2180 = vcombine.high %v2155, %v2171
    %v2181 = vcombine.low %v2162, %v2178
    %v2182 = vcombine.high %v2162, %v2178
    %2184 = vrot.lane.b32.xlu0 %v2049, 112
    %v2185 = vpop.permute.xlu0 %2184
    %2187 = vrot.lane.b32.xlu0 %v2049, 96
    %v2188 = vpop.permute.xlu0 %2187
    %2190 = vrot.lane.b32.xlu0 %v2049, 80
    %v2191 = vpop.permute.xlu0 %2190
    %2193 = vrot.lane.b32.xlu0 %v2049, 64
    %v2194 = vpop.permute.xlu0 %2193
    %2196 = vrot.lane.b32.xlu0 %v2049, 48
    %v2197 = vpop.permute.xlu0 %2196
    %2199 = vrot.lane.b32.xlu0 %v2049, 32
    %v2200 = vpop.permute.xlu0 %2199
    %2202 = vrot.lane.b32.xlu0 %v2049, 16
    %v2203 = vpop.permute.xlu0 %2202
    %v2205 = vcombine.low %v2049, %v2188
    %v2207 = vunpack.c.l.s4 1983009808
    %v2208 = vunpack.c.0.s8 %v2207
    %v2209 = vlaneseq
    %v2210 = vshrl.u32 %v2209, 7
    %v2211 = vsub.s32 %v2208, %v2210
    %v2212 = vrot.slane %v2205, %v2211
    %v2213 = vcombine.low %v2185, %v2191
    %v2215 = vunpack.c.l.s4 1983009808
    %v2216 = vunpack.c.0.s8 %v2215
    %v2217 = vlaneseq
    %v2218 = vshrl.u32 %v2217, 7
    %v2219 = vsub.s32 %v2216, %v2218
    %v2220 = vrot.slane %v2213, %v2219
    %v2221 = vcombine.low %v2194, %v2200
    %v2223 = vunpack.c.l.s4 1983009808
    %v2224 = vunpack.c.0.s8 %v2223
    %v2225 = vlaneseq
    %v2226 = vshrl.u32 %v2225, 7
    %v2227 = vsub.s32 %v2224, %v2226
    %v2228 = vrot.slane %v2221, %v2227
    %v2229 = vcombine.low %v2197, %v2203
    %v2231 = vunpack.c.l.s4 1983009808
    %v2232 = vunpack.c.0.s8 %v2231
    %v2233 = vlaneseq
    %v2234 = vshrl.u32 %v2233, 7
    %v2235 = vsub.s32 %v2232, %v2234
    %v2236 = vrot.slane %v2229, %v2235
    %v2237 = vcombine.low %v2212, %v2220
    %v2238 = vcombine.high %v2212, %v2220
    %v2240 = vunpack.c.l.s4 1934713408
    %v2241 = vunpack.c.0.s8 %v2240
    %v2242 = vlaneseq
    %v2243 = vshrl.u32 %v2242, 7
    %v2244 = vsub.s32 %v2241, %v2243
    %v2245 = vrot.slane %v2237, %v2244
    %v2247 = vunpack.c.l.s4 1934713408
    %v2248 = vunpack.c.0.s8 %v2247
    %v2249 = vlaneseq
    %v2250 = vshrl.u32 %v2249, 7
    %v2251 = vsub.s32 %v2248, %v2250
    %v2252 = vrot.slane %v2238, %v2251
    %v2253 = vcombine.low %v2228, %v2236
    %v2254 = vcombine.high %v2228, %v2236
    %v2256 = vunpack.c.l.s4 1934713408
    %v2257 = vunpack.c.0.s8 %v2256
    %v2258 = vlaneseq
    %v2259 = vshrl.u32 %v2258, 7
    %v2260 = vsub.s32 %v2257, %v2259
    %v2261 = vrot.slane %v2253, %v2260
    %v2263 = vunpack.c.l.s4 1934713408
    %v2264 = vunpack.c.0.s8 %v2263
    %v2265 = vlaneseq
    %v2266 = vshrl.u32 %v2265, 7
    %v2267 = vsub.s32 %v2264, %v2266
    %v2268 = vrot.slane %v2254, %v2267
    %v2269 = vcombine.low %v2245, %v2261
    %v2270 = vcombine.high %v2245, %v2261
    %v2271 = vcombine.low %v2252, %v2268
    %v2272 = vcombine.high %v2252, %v2268
    %v2273 = vpack.c.bf16 %v2269, %v2269
    %v2274 = vpack.c.bf16 %v2270, %v2270
    %v2275 = vpack.c.bf16 %v2271, %v2271
    %v2276 = vpack.c.bf16 %v2272, %v2272
    %2278 = vrot.lane.b32.xlu0 %v2088, 112
    %v2279 = vpop.permute.xlu0 %2278
    %2281 = vrot.lane.b32.xlu0 %v2088, 96
    %v2282 = vpop.permute.xlu0 %2281
    %2284 = vrot.lane.b32.xlu0 %v2088, 80
    %v2285 = vpop.permute.xlu0 %2284
    %2287 = vrot.lane.b32.xlu0 %v2088, 64
    %v2288 = vpop.permute.xlu0 %2287
    %2290 = vrot.lane.b32.xlu0 %v2088, 48
    %v2291 = vpop.permute.xlu0 %2290
    %2293 = vrot.lane.b32.xlu0 %v2088, 32
    %v2294 = vpop.permute.xlu0 %2293
    %2296 = vrot.lane.b32.xlu0 %v2088, 16
    %v2297 = vpop.permute.xlu0 %2296
    %v2299 = vcombine.low %v2088, %v2282
    %v2301 = vunpack.c.l.s4 1983009808
    %v2302 = vunpack.c.0.s8 %v2301
    %v2303 = vlaneseq
    %v2304 = vshrl.u32 %v2303, 7
    %v2305 = vsub.s32 %v2302, %v2304
    %v2306 = vrot.slane %v2299, %v2305
    %v2307 = vcombine.low %v2279, %v2285
    %v2309 = vunpack.c.l.s4 1983009808
    %v2310 = vunpack.c.0.s8 %v2309
    %v2311 = vlaneseq
    %v2312 = vshrl.u32 %v2311, 7
    %v2313 = vsub.s32 %v2310, %v2312
    %v2314 = vrot.slane %v2307, %v2313
    %v2315 = vcombine.low %v2288, %v2294
    %v2317 = vunpack.c.l.s4 1983009808
    %v2318 = vunpack.c.0.s8 %v2317
    %v2319 = vlaneseq
    %v2320 = vshrl.u32 %v2319, 7
    %v2321 = vsub.s32 %v2318, %v2320
    %v2322 = vrot.slane %v2315, %v2321
    %v2323 = vcombine.low %v2291, %v2297
    %v2325 = vunpack.c.l.s4 1983009808
    %v2326 = vunpack.c.0.s8 %v2325
    %v2327 = vlaneseq
    %v2328 = vshrl.u32 %v2327, 7
    %v2329 = vsub.s32 %v2326, %v2328
    %v2330 = vrot.slane %v2323, %v2329
    %v2331 = vcombine.low %v2306, %v2314
    %v2332 = vcombine.high %v2306, %v2314
    %v2334 = vunpack.c.l.s4 1934713408
    %v2335 = vunpack.c.0.s8 %v2334
    %v2336 = vlaneseq
    %v2337 = vshrl.u32 %v2336, 7
    %v2338 = vsub.s32 %v2335, %v2337
    %v2339 = vrot.slane %v2331, %v2338
    %v2341 = vunpack.c.l.s4 1934713408
    %v2342 = vunpack.c.0.s8 %v2341
    %v2343 = vlaneseq
    %v2344 = vshrl.u32 %v2343, 7
    %v2345 = vsub.s32 %v2342, %v2344
    %v2346 = vrot.slane %v2332, %v2345
    %v2347 = vcombine.low %v2322, %v2330
    %v2348 = vcombine.high %v2322, %v2330
    %v2350 = vunpack.c.l.s4 1934713408
    %v2351 = vunpack.c.0.s8 %v2350
    %v2352 = vlaneseq
    %v2353 = vshrl.u32 %v2352, 7
    %v2354 = vsub.s32 %v2351, %v2353
    %v2355 = vrot.slane %v2347, %v2354
    %v2357 = vunpack.c.l.s4 1934713408
    %v2358 = vunpack.c.0.s8 %v2357
    %v2359 = vlaneseq
    %v2360 = vshrl.u32 %v2359, 7
    %v2361 = vsub.s32 %v2358, %v2360
    %v2362 = vrot.slane %v2348, %v2361
    %v2363 = vcombine.low %v2339, %v2355
    %v2364 = vcombine.high %v2339, %v2355
    %v2365 = vcombine.low %v2346, %v2362
    %v2366 = vcombine.high %v2346, %v2362
    %v2367 = vpack.c.bf16 %v2363, %v2363
    %v2368 = vpack.c.bf16 %v2364, %v2364
    %v2369 = vpack.c.bf16 %v2365, %v2365
    %v2370 = vpack.c.bf16 %v2366, %v2366
    %v2371 = vpack.c.bf16 %v2179, %v2179
    %v2373 = vunpack.c.l.s4 1983009808
    %v2374 = vunpack.c.0.s8 %v2373
    %v2375 = vlaneseq
    %v2376 = vshrl.u32 %v2375, 7
    %v2377 = vsub.s32 %v2374, %v2376
    %v2378 = vrot.slane %v2371, %v2377
    %v2379 = vpack.c.bf16 %v2181, %v2181
    %v2381 = vunpack.c.l.s4 1983009808
    %v2382 = vunpack.c.0.s8 %v2381
    %v2383 = vlaneseq
    %v2384 = vshrl.u32 %v2383, 7
    %v2385 = vsub.s32 %v2382, %v2384
    %v2386 = vrot.slane %v2379, %v2385
    %v2387 = vcombine.low %v2378, %v2386
    %v2388 = vcombine.high %v2378, %v2386
    %v2390 = vunpack.c.l.s4 1934713408
    %v2391 = vunpack.c.0.s8 %v2390
    %v2392 = vlaneseq
    %v2393 = vshrl.u32 %v2392, 7
    %v2394 = vsub.s32 %v2391, %v2393
    %v2395 = vrot.slane %v2387, %v2394
    %v2397 = vunpack.c.l.s4 1934713408
    %v2398 = vunpack.c.0.s8 %v2397
    %v2399 = vlaneseq
    %v2400 = vshrl.u32 %v2399, 7
    %v2401 = vsub.s32 %v2398, %v2400
    %v2402 = vrot.slane %v2388, %v2401
    %v2403 = vcombine.high %v2395, 0
    %v2404 = vcombine.high %v2402, 0
    %v2405 = vpack.c.bf16 %v2180, %v2180
    %v2407 = vunpack.c.l.s4 1983009808
    %v2408 = vunpack.c.0.s8 %v2407
    %v2409 = vlaneseq
    %v2410 = vshrl.u32 %v2409, 7
    %v2411 = vsub.s32 %v2408, %v2410
    %v2412 = vrot.slane %v2405, %v2411
    %v2413 = vpack.c.bf16 %v2182, %v2182
    %v2415 = vunpack.c.l.s4 1983009808
    %v2416 = vunpack.c.0.s8 %v2415
    %v2417 = vlaneseq
    %v2418 = vshrl.u32 %v2417, 7
    %v2419 = vsub.s32 %v2416, %v2418
    %v2420 = vrot.slane %v2413, %v2419
    %v2421 = vcombine.low %v2412, %v2420
    %v2422 = vcombine.high %v2412, %v2420
    %v2424 = vunpack.c.l.s4 1934713408
    %v2425 = vunpack.c.0.s8 %v2424
    %v2426 = vlaneseq
    %v2427 = vshrl.u32 %v2426, 7
    %v2428 = vsub.s32 %v2425, %v2427
    %v2429 = vrot.slane %v2421, %v2428
    %v2431 = vunpack.c.l.s4 1934713408
    %v2432 = vunpack.c.0.s8 %v2431
    %v2433 = vlaneseq
    %v2434 = vshrl.u32 %v2433, 7
    %v2435 = vsub.s32 %v2432, %v2434
    %v2436 = vrot.slane %v2422, %v2435
    %v2437 = vcombine.high %v2429, 0
    %v2438 = vcombine.high %v2436, 0
    %v2441 = vpack.i.b16 %v2429, %v2395
    %v2442 = vshrl.u32 %v2395, 16
    %v2443 = vshrl.u32 %v2429, 16
    %v2444 = vpack.i.b16 %v2443, %v2442
    %v2447 = vpack.i.b16 %v2437, %v2403
    %v2448 = vshrl.u32 %v2403, 16
    %v2449 = vshrl.u32 %v2437, 16
    %v2450 = vpack.i.b16 %v2449, %v2448
    %v2453 = vpack.i.b16 %v2436, %v2402
    %v2454 = vshrl.u32 %v2402, 16
    %v2455 = vshrl.u32 %v2436, 16
    %v2456 = vpack.i.b16 %v2455, %v2454
    %v2459 = vpack.i.b16 %v2438, %v2404
    %v2460 = vshrl.u32 %v2404, 16
    %v2461 = vshrl.u32 %v2438, 16
    %v2462 = vpack.i.b16 %v2461, %v2460
    %2463 = vxpose.xlu0.c.b16.start [1/8] %v2273, 128
    %2464 = vxpose.xlu0.c.b16.cont [2/8] 0, 128
    %2465 = vxpose.xlu0.c.b16.cont [3/8] 0, 128
    %2466 = vxpose.xlu0.c.b16.cont [4/8] 0, 128
    %2467 = vxpose.xlu0.c.b16.cont [5/8] 0, 128
    %2468 = vxpose.xlu0.c.b16.cont [6/8] 0, 128
    %2469 = vxpose.xlu0.c.b16.cont [7/8] 0, 128
    %2470 = vxpose.xlu0.c.b16.end [8/8] 0, 128
    %v2471 = vpop.trf.xlu0
    %v2472 = vpop.trf.xlu0
    %v2473 = vpop.trf.xlu0
    %v2474 = vpop.trf.xlu0
    %v2475 = vpop.trf.xlu0
    %v2476 = vpop.trf.xlu0
    %v2477 = vpop.trf.xlu0
    %v2478 = vpop.trf.xlu0
    %2479 = vxpose.xlu0.c.b16.start [1/8] %v2274, 128
    %2480 = vxpose.xlu0.c.b16.cont [2/8] 0, 128
    %2481 = vxpose.xlu0.c.b16.cont [3/8] 0, 128
    %2482 = vxpose.xlu0.c.b16.cont [4/8] 0, 128
    %2483 = vxpose.xlu0.c.b16.cont [5/8] 0, 128
    %2484 = vxpose.xlu0.c.b16.cont [6/8] 0, 128
    %2485 = vxpose.xlu0.c.b16.cont [7/8] 0, 128
    %2486 = vxpose.xlu0.c.b16.end [8/8] 0, 128
    %v2487 = vpop.trf.xlu0
    %v2488 = vpop.trf.xlu0
    %v2489 = vpop.trf.xlu0
    %v2490 = vpop.trf.xlu0
    %v2491 = vpop.trf.xlu0
    %v2492 = vpop.trf.xlu0
    %v2493 = vpop.trf.xlu0
    %v2494 = vpop.trf.xlu0
    %2495 = vxpose.xlu0.c.b16.start [1/8] %v2275, 128
    %2496 = vxpose.xlu0.c.b16.cont [2/8] 0, 128
    %2497 = vxpose.xlu0.c.b16.cont [3/8] 0, 128
    %2498 = vxpose.xlu0.c.b16.cont [4/8] 0, 128
    %2499 = vxpose.xlu0.c.b16.cont [5/8] 0, 128
    %2500 = vxpose.xlu0.c.b16.cont [6/8] 0, 128
    %2501 = vxpose.xlu0.c.b16.cont [7/8] 0, 128
    %2502 = vxpose.xlu0.c.b16.end [8/8] 0, 128
    %v2503 = vpop.trf.xlu0
    %v2504 = vpop.trf.xlu0
    %v2505 = vpop.trf.xlu0
    %v2506 = vpop.trf.xlu0
    %v2507 = vpop.trf.xlu0
    %v2508 = vpop.trf.xlu0
    %v2509 = vpop.trf.xlu0
    %v2510 = vpop.trf.xlu0
    %2511 = vxpose.xlu0.c.b16.start [1/8] %v2276, 128
    %2512 = vxpose.xlu0.c.b16.cont [2/8] 0, 128
    %2513 = vxpose.xlu0.c.b16.cont [3/8] 0, 128
    %2514 = vxpose.xlu0.c.b16.cont [4/8] 0, 128
    %2515 = vxpose.xlu0.c.b16.cont [5/8] 0, 128
    %2516 = vxpose.xlu0.c.b16.cont [6/8] 0, 128
    %2517 = vxpose.xlu0.c.b16.cont [7/8] 0, 128
    %2518 = vxpose.xlu0.c.b16.end [8/8] 0, 128
    %v2519 = vpop.trf.xlu0
    %v2520 = vpop.trf.xlu0
    %v2521 = vpop.trf.xlu0
    %v2522 = vpop.trf.xlu0
    %v2523 = vpop.trf.xlu0
    %v2524 = vpop.trf.xlu0
    %v2525 = vpop.trf.xlu0
    %v2526 = vpop.trf.xlu0
    %v2529 = vpack.i.b16 %v2487, %v2471
    %v2531 = vshrl.u32 %v2471, 16
    %v2532 = vshrl.u32 %v2487, 16
    %v2533 = vpack.i.b16 %v2532, %v2531
    %v2537 = vpack.i.b16 %v2519, %v2503
    %v2539 = vshrl.u32 %v2503, 16
    %v2540 = vshrl.u32 %v2519, 16
    %v2541 = vpack.i.b16 %v2540, %v2539
    %v2544 = vpack.i.b16 0, 0
    %v2546 = vshrl.u32 0, 16
    %v2547 = vpack.i.b16 %v2546, %v2546
    %v2549 = vcombine.high %v2529, %v2544
    %v2551 = vunpack.c.l.s4 1983009808
    %v2552 = vunpack.c.0.s8 %v2551
    %v2553 = vlaneseq
    %v2554 = vshrl.u32 %v2553, 7
    %v2555 = vsub.s32 %v2552, %v2554
    %v2556 = vrot.slane %v2529, %v2555
    %v2558 = vunpack.c.l.s4 1983009808
    %v2559 = vunpack.c.0.s8 %v2558
    %v2560 = vlaneseq
    %v2561 = vshrl.u32 %v2560, 7
    %v2562 = vsub.s32 %v2559, %v2561
    %v2563 = vrot.slane %v2549, %v2562
    %v2564 = vcombine.high %v2537, %v2544
    %v2566 = vunpack.c.l.s4 1983009808
    %v2567 = vunpack.c.0.s8 %v2566
    %v2568 = vlaneseq
    %v2569 = vshrl.u32 %v2568, 7
    %v2570 = vsub.s32 %v2567, %v2569
    %v2571 = vrot.slane %v2537, %v2570
    %v2573 = vunpack.c.l.s4 1983009808
    %v2574 = vunpack.c.0.s8 %v2573
    %v2575 = vlaneseq
    %v2576 = vshrl.u32 %v2575, 7
    %v2577 = vsub.s32 %v2574, %v2576
    %v2578 = vrot.slane %v2564, %v2577
    %v2579 = vcombine.low %v2556, %v2571
    %v2580 = vcombine.high %v2556, %v2571
    %v2582 = vunpack.c.l.s4 1934713408
    %v2583 = vunpack.c.0.s8 %v2582
    %v2584 = vlaneseq
    %v2585 = vshrl.u32 %v2584, 7
    %v2586 = vsub.s32 %v2583, %v2585
    %v2587 = vrot.slane %v2579, %v2586
    %v2589 = vunpack.c.l.s4 1934713408
    %v2590 = vunpack.c.0.s8 %v2589
    %v2591 = vlaneseq
    %v2592 = vshrl.u32 %v2591, 7
    %v2593 = vsub.s32 %v2590, %v2592
    %v2594 = vrot.slane %v2580, %v2593
    %v2595 = vcombine.low %v2563, %v2578
    %v2596 = vcombine.high %v2563, %v2578
    %v2598 = vunpack.c.l.s4 1934713408
    %v2599 = vunpack.c.0.s8 %v2598
    %v2600 = vlaneseq
    %v2601 = vshrl.u32 %v2600, 7
    %v2602 = vsub.s32 %v2599, %v2601
    %v2603 = vrot.slane %v2595, %v2602
    %v2605 = vunpack.c.l.s4 1934713408
    %v2606 = vunpack.c.0.s8 %v2605
    %v2607 = vlaneseq
    %v2608 = vshrl.u32 %v2607, 7
    %v2609 = vsub.s32 %v2606, %v2608
    %v2610 = vrot.slane %v2596, %v2609
    %v2611 = vcombine.high %v2587, 0
    %v2612 = vcombine.high %v2594, 0
    %v2613 = vcombine.high %v2603, 0
    %v2614 = vcombine.high %v2610, 0
    %v2615 = vcombine.high %v2533, %v2547
    %v2617 = vunpack.c.l.s4 1983009808
    %v2618 = vunpack.c.0.s8 %v2617
    %v2619 = vlaneseq
    %v2620 = vshrl.u32 %v2619, 7
    %v2621 = vsub.s32 %v2618, %v2620
    %v2622 = vrot.slane %v2533, %v2621
    %v2624 = vunpack.c.l.s4 1983009808
    %v2625 = vunpack.c.0.s8 %v2624
    %v2626 = vlaneseq
    %v2627 = vshrl.u32 %v2626, 7
    %v2628 = vsub.s32 %v2625, %v2627
    %v2629 = vrot.slane %v2615, %v2628
    %v2630 = vcombine.high %v2541, %v2547
    %v2632 = vunpack.c.l.s4 1983009808
    %v2633 = vunpack.c.0.s8 %v2632
    %v2634 = vlaneseq
    %v2635 = vshrl.u32 %v2634, 7
    %v2636 = vsub.s32 %v2633, %v2635
    %v2637 = vrot.slane %v2541, %v2636
    %v2639 = vunpack.c.l.s4 1983009808
    %v2640 = vunpack.c.0.s8 %v2639
    %v2641 = vlaneseq
    %v2642 = vshrl.u32 %v2641, 7
    %v2643 = vsub.s32 %v2640, %v2642
    %v2644 = vrot.slane %v2630, %v2643
    %v2645 = vcombine.low %v2622, %v2637
    %v2646 = vcombine.high %v2622, %v2637
    %v2648 = vunpack.c.l.s4 1934713408
    %v2649 = vunpack.c.0.s8 %v2648
    %v2650 = vlaneseq
    %v2651 = vshrl.u32 %v2650, 7
    %v2652 = vsub.s32 %v2649, %v2651
    %v2653 = vrot.slane %v2645, %v2652
    %v2655 = vunpack.c.l.s4 1934713408
    %v2656 = vunpack.c.0.s8 %v2655
    %v2657 = vlaneseq
    %v2658 = vshrl.u32 %v2657, 7
    %v2659 = vsub.s32 %v2656, %v2658
    %v2660 = vrot.slane %v2646, %v2659
    %v2661 = vcombine.low %v2629, %v2644
    %v2662 = vcombine.high %v2629, %v2644
    %v2664 = vunpack.c.l.s4 1934713408
    %v2665 = vunpack.c.0.s8 %v2664
    %v2666 = vlaneseq
    %v2667 = vshrl.u32 %v2666, 7
    %v2668 = vsub.s32 %v2665, %v2667
    %v2669 = vrot.slane %v2661, %v2668
    %v2671 = vunpack.c.l.s4 1934713408
    %v2672 = vunpack.c.0.s8 %v2671
    %v2673 = vlaneseq
    %v2674 = vshrl.u32 %v2673, 7
    %v2675 = vsub.s32 %v2672, %v2674
    %v2676 = vrot.slane %v2662, %v2675
    %v2677 = vcombine.high %v2653, 0
    %v2678 = vcombine.high %v2660, 0
    %v2679 = vcombine.high %v2669, 0
    %v2680 = vcombine.high %v2676, 0
    %2681 = vxpose.xlu0.c.b16.start [1/8] %v2587, 128
    %2682 = vxpose.xlu0.c.b16.cont [2/8] 0, 128
    %2683 = vxpose.xlu0.c.b16.cont [3/8] 0, 128
    %2684 = vxpose.xlu0.c.b16.cont [4/8] 0, 128
    %2685 = vxpose.xlu0.c.b16.cont [5/8] 0, 128
    %2686 = vxpose.xlu0.c.b16.cont [6/8] 0, 128
    %2687 = vxpose.xlu0.c.b16.cont [7/8] 0, 128
    %2688 = vxpose.xlu0.c.b16.end [8/8] 0, 128
    %v2689 = vpop.trf.xlu0
    %v2690 = vpop.trf.xlu0
    %v2691 = vpop.trf.xlu0
    %v2692 = vpop.trf.xlu0
    %v2693 = vpop.trf.xlu0
    %v2694 = vpop.trf.xlu0
    %v2695 = vpop.trf.xlu0
    %v2696 = vpop.trf.xlu0
    %2697 = vxpose.xlu0.c.b16.start [1/8] %v2653, 128
    %2698 = vxpose.xlu0.c.b16.cont [2/8] 0, 128
    %2699 = vxpose.xlu0.c.b16.cont [3/8] 0, 128
    %2700 = vxpose.xlu0.c.b16.cont [4/8] 0, 128
    %2701 = vxpose.xlu0.c.b16.cont [5/8] 0, 128
    %2702 = vxpose.xlu0.c.b16.cont [6/8] 0, 128
    %2703 = vxpose.xlu0.c.b16.cont [7/8] 0, 128
    %2704 = vxpose.xlu0.c.b16.end [8/8] 0, 128
    %v2705 = vpop.trf.xlu0
    %v2706 = vpop.trf.xlu0
    %v2707 = vpop.trf.xlu0
    %v2708 = vpop.trf.xlu0
    %v2709 = vpop.trf.xlu0
    %v2710 = vpop.trf.xlu0
    %v2711 = vpop.trf.xlu0
    %v2712 = vpop.trf.xlu0
    %2713 = vxpose.xlu0.c.b16.start [1/8] %v2611, 128
    %2714 = vxpose.xlu0.c.b16.cont [2/8] 0, 128
    %2715 = vxpose.xlu0.c.b16.cont [3/8] 0, 128
    %2716 = vxpose.xlu0.c.b16.cont [4/8] 0, 128
    %2717 = vxpose.xlu0.c.b16.cont [5/8] 0, 128
    %2718 = vxpose.xlu0.c.b16.cont [6/8] 0, 128
    %2719 = vxpose.xlu0.c.b16.cont [7/8] 0, 128
    %2720 = vxpose.xlu0.c.b16.end [8/8] 0, 128
    %v2721 = vpop.trf.xlu0
    %v2722 = vpop.trf.xlu0
    %v2723 = vpop.trf.xlu0
    %v2724 = vpop.trf.xlu0
    %v2725 = vpop.trf.xlu0
    %v2726 = vpop.trf.xlu0
    %v2727 = vpop.trf.xlu0
    %v2728 = vpop.trf.xlu0
    %2729 = vxpose.xlu0.c.b16.start [1/8] %v2677, 128
    %2730 = vxpose.xlu0.c.b16.cont [2/8] 0, 128
    %2731 = vxpose.xlu0.c.b16.cont [3/8] 0, 128
    %2732 = vxpose.xlu0.c.b16.cont [4/8] 0, 128
    %2733 = vxpose.xlu0.c.b16.cont [5/8] 0, 128
    %2734 = vxpose.xlu0.c.b16.cont [6/8] 0, 128
    %2735 = vxpose.xlu0.c.b16.cont [7/8] 0, 128
    %2736 = vxpose.xlu0.c.b16.end [8/8] 0, 128
    %v2737 = vpop.trf.xlu0
    %v2738 = vpop.trf.xlu0
    %v2739 = vpop.trf.xlu0
    %v2740 = vpop.trf.xlu0
    %v2741 = vpop.trf.xlu0
    %v2742 = vpop.trf.xlu0
    %v2743 = vpop.trf.xlu0
    %v2744 = vpop.trf.xlu0
    %2745 = vxpose.xlu0.c.b16.start [1/8] %v2594, 128
    %2746 = vxpose.xlu0.c.b16.cont [2/8] 0, 128
    %2747 = vxpose.xlu0.c.b16.cont [3/8] 0, 128
    %2748 = vxpose.xlu0.c.b16.cont [4/8] 0, 128
    %2749 = vxpose.xlu0.c.b16.cont [5/8] 0, 128
    %2750 = vxpose.xlu0.c.b16.cont [6/8] 0, 128
    %2751 = vxpose.xlu0.c.b16.cont [7/8] 0, 128
    %2752 = vxpose.xlu0.c.b16.end [8/8] 0, 128
    %v2753 = vpop.trf.xlu0
    %v2754 = vpop.trf.xlu0
    %v2755 = vpop.trf.xlu0
    %v2756 = vpop.trf.xlu0
    %v2757 = vpop.trf.xlu0
    %v2758 = vpop.trf.xlu0
    %v2759 = vpop.trf.xlu0
    %v2760 = vpop.trf.xlu0
    %2761 = vxpose.xlu0.c.b16.start [1/8] %v2660, 128
    %2762 = vxpose.xlu0.c.b16.cont [2/8] 0, 128
    %2763 = vxpose.xlu0.c.b16.cont [3/8] 0, 128
    %2764 = vxpose.xlu0.c.b16.cont [4/8] 0, 128
    %2765 = vxpose.xlu0.c.b16.cont [5/8] 0, 128
    %2766 = vxpose.xlu0.c.b16.cont [6/8] 0, 128
    %2767 = vxpose.xlu0.c.b16.cont [7/8] 0, 128
    %2768 = vxpose.xlu0.c.b16.end [8/8] 0, 128
    %v2769 = vpop.trf.xlu0
    %v2770 = vpop.trf.xlu0
    %v2771 = vpop.trf.xlu0
    %v2772 = vpop.trf.xlu0
    %v2773 = vpop.trf.xlu0
    %v2774 = vpop.trf.xlu0
    %v2775 = vpop.trf.xlu0
    %v2776 = vpop.trf.xlu0
    %2777 = vxpose.xlu0.c.b16.start [1/8] %v2612, 128
    %2778 = vxpose.xlu0.c.b16.cont [2/8] 0, 128
    %2779 = vxpose.xlu0.c.b16.cont [3/8] 0, 128
    %2780 = vxpose.xlu0.c.b16.cont [4/8] 0, 128
    %2781 = vxpose.xlu0.c.b16.cont [5/8] 0, 128
    %2782 = vxpose.xlu0.c.b16.cont [6/8] 0, 128
    %2783 = vxpose.xlu0.c.b16.cont [7/8] 0, 128
    %2784 = vxpose.xlu0.c.b16.end [8/8] 0, 128
    %v2785 = vpop.trf.xlu0
    %v2786 = vpop.trf.xlu0
    %v2787 = vpop.trf.xlu0
    %v2788 = vpop.trf.xlu0
    %v2789 = vpop.trf.xlu0
    %v2790 = vpop.trf.xlu0
    %v2791 = vpop.trf.xlu0
    %v2792 = vpop.trf.xlu0
    %2793 = vxpose.xlu0.c.b16.start [1/8] %v2678, 128
    %2794 = vxpose.xlu0.c.b16.cont [2/8] 0, 128
    %2795 = vxpose.xlu0.c.b16.cont [3/8] 0, 128
    %2796 = vxpose.xlu0.c.b16.cont [4/8] 0, 128
    %2797 = vxpose.xlu0.c.b16.cont [5/8] 0, 128
    %2798 = vxpose.xlu0.c.b16.cont [6/8] 0, 128
    %2799 = vxpose.xlu0.c.b16.cont [7/8] 0, 128
    %2800 = vxpose.xlu0.c.b16.end [8/8] 0, 128
    %v2801 = vpop.trf.xlu0
    %v2802 = vpop.trf.xlu0
    %v2803 = vpop.trf.xlu0
    %v2804 = vpop.trf.xlu0
    %v2805 = vpop.trf.xlu0
    %v2806 = vpop.trf.xlu0
    %v2807 = vpop.trf.xlu0
    %v2808 = vpop.trf.xlu0
    %2809 = vxpose.xlu0.c.b16.start [1/8] %v2603, 128
    %2810 = vxpose.xlu0.c.b16.cont [2/8] 0, 128
    %2811 = vxpose.xlu0.c.b16.cont [3/8] 0, 128
    %2812 = vxpose.xlu0.c.b16.cont [4/8] 0, 128
    %2813 = vxpose.xlu0.c.b16.cont [5/8] 0, 128
    %2814 = vxpose.xlu0.c.b16.cont [6/8] 0, 128
    %2815 = vxpose.xlu0.c.b16.cont [7/8] 0, 128
    %2816 = vxpose.xlu0.c.b16.end [8/8] 0, 128
    %v2817 = vpop.trf.xlu0
    %v2818 = vpop.trf.xlu0
    %v2819 = vpop.trf.xlu0
    %v2820 = vpop.trf.xlu0
    %v2821 = vpop.trf.xlu0
    %v2822 = vpop.trf.xlu0
    %v2823 = vpop.trf.xlu0
    %v2824 = vpop.trf.xlu0
    %2825 = vxpose.xlu0.c.b16.start [1/8] %v2669, 128
    %2826 = vxpose.xlu0.c.b16.cont [2/8] 0, 128
    %2827 = vxpose.xlu0.c.b16.cont [3/8] 0, 128
    %2828 = vxpose.xlu0.c.b16.cont [4/8] 0, 128
    %2829 = vxpose.xlu0.c.b16.cont [5/8] 0, 128
    %2830 = vxpose.xlu0.c.b16.cont [6/8] 0, 128
    %2831 = vxpose.xlu0.c.b16.cont [7/8] 0, 128
    %2832 = vxpose.xlu0.c.b16.end [8/8] 0, 128
    %v2833 = vpop.trf.xlu0
    %v2834 = vpop.trf.xlu0
    %v2835 = vpop.trf.xlu0
    %v2836 = vpop.trf.xlu0
    %v2837 = vpop.trf.xlu0
    %v2838 = vpop.trf.xlu0
    %v2839 = vpop.trf.xlu0
    %v2840 = vpop.trf.xlu0
    %2841 = vxpose.xlu0.c.b16.start [1/8] %v2613, 128
    %2842 = vxpose.xlu0.c.b16.cont [2/8] 0, 128
    %2843 = vxpose.xlu0.c.b16.cont [3/8] 0, 128
    %2844 = vxpose.xlu0.c.b16.cont [4/8] 0, 128
    %2845 = vxpose.xlu0.c.b16.cont [5/8] 0, 128
    %2846 = vxpose.xlu0.c.b16.cont [6/8] 0, 128
    %2847 = vxpose.xlu0.c.b16.cont [7/8] 0, 128
    %2848 = vxpose.xlu0.c.b16.end [8/8] 0, 128
    %v2849 = vpop.trf.xlu0
    %v2850 = vpop.trf.xlu0
    %v2851 = vpop.trf.xlu0
    %v2852 = vpop.trf.xlu0
    %v2853 = vpop.trf.xlu0
    %v2854 = vpop.trf.xlu0
    %v2855 = vpop.trf.xlu0
    %v2856 = vpop.trf.xlu0
    %2857 = vxpose.xlu0.c.b16.start [1/8] %v2679, 128
    %2858 = vxpose.xlu0.c.b16.cont [2/8] 0, 128
    %2859 = vxpose.xlu0.c.b16.cont [3/8] 0, 128
    %2860 = vxpose.xlu0.c.b16.cont [4/8] 0, 128
    %2861 = vxpose.xlu0.c.b16.cont [5/8] 0, 128
    %2862 = vxpose.xlu0.c.b16.cont [6/8] 0, 128
    %2863 = vxpose.xlu0.c.b16.cont [7/8] 0, 128
    %2864 = vxpose.xlu0.c.b16.end [8/8] 0, 128
    %v2865 = vpop.trf.xlu0
    %v2866 = vpop.trf.xlu0
    %v2867 = vpop.trf.xlu0
    %v2868 = vpop.trf.xlu0
    %v2869 = vpop.trf.xlu0
    %v2870 = vpop.trf.xlu0
    %v2871 = vpop.trf.xlu0
    %v2872 = vpop.trf.xlu0
    %2873 = vxpose.xlu0.c.b16.start [1/8] %v2610, 128
    %2874 = vxpose.xlu0.c.b16.cont [2/8] 0, 128
    %2875 = vxpose.xlu0.c.b16.cont [3/8] 0, 128
    %2876 = vxpose.xlu0.c.b16.cont [4/8] 0, 128
    %2877 = vxpose.xlu0.c.b16.cont [5/8] 0, 128
    %2878 = vxpose.xlu0.c.b16.cont [6/8] 0, 128
    %2879 = vxpose.xlu0.c.b16.cont [7/8] 0, 128
    %2880 = vxpose.xlu0.c.b16.end [8/8] 0, 128
    %v2881 = vpop.trf.xlu0
    %v2882 = vpop.trf.xlu0
    %v2883 = vpop.trf.xlu0
    %v2884 = vpop.trf.xlu0
    %v2885 = vpop.trf.xlu0
    %v2886 = vpop.trf.xlu0
    %v2887 = vpop.trf.xlu0
    %v2888 = vpop.trf.xlu0
    %2889 = vxpose.xlu0.c.b16.start [1/8] %v2676, 128
    %2890 = vxpose.xlu0.c.b16.cont [2/8] 0, 128
    %2891 = vxpose.xlu0.c.b16.cont [3/8] 0, 128
    %2892 = vxpose.xlu0.c.b16.cont [4/8] 0, 128
    %2893 = vxpose.xlu0.c.b16.cont [5/8] 0, 128
    %2894 = vxpose.xlu0.c.b16.cont [6/8] 0, 128
    %2895 = vxpose.xlu0.c.b16.cont [7/8] 0, 128
    %2896 = vxpose.xlu0.c.b16.end [8/8] 0, 128
    %v2897 = vpop.trf.xlu0
    %v2898 = vpop.trf.xlu0
    %v2899 = vpop.trf.xlu0
    %v2900 = vpop.trf.xlu0
    %v2901 = vpop.trf.xlu0
    %v2902 = vpop.trf.xlu0
    %v2903 = vpop.trf.xlu0
    %v2904 = vpop.trf.xlu0
    %2905 = vxpose.xlu0.c.b16.start [1/8] %v2614, 128
    %2906 = vxpose.xlu0.c.b16.cont [2/8] 0, 128
    %2907 = vxpose.xlu0.c.b16.cont [3/8] 0, 128
    %2908 = vxpose.xlu0.c.b16.cont [4/8] 0, 128
    %2909 = vxpose.xlu0.c.b16.cont [5/8] 0, 128
    %2910 = vxpose.xlu0.c.b16.cont [6/8] 0, 128
    %2911 = vxpose.xlu0.c.b16.cont [7/8] 0, 128
    %2912 = vxpose.xlu0.c.b16.end [8/8] 0, 128
    %v2913 = vpop.trf.xlu0
    %v2914 = vpop.trf.xlu0
    %v2915 = vpop.trf.xlu0
    %v2916 = vpop.trf.xlu0
    %v2917 = vpop.trf.xlu0
    %v2918 = vpop.trf.xlu0
    %v2919 = vpop.trf.xlu0
    %v2920 = vpop.trf.xlu0
    %2921 = vxpose.xlu0.c.b16.start [1/8] %v2680, 128
    %2922 = vxpose.xlu0.c.b16.cont [2/8] 0, 128
    %2923 = vxpose.xlu0.c.b16.cont [3/8] 0, 128
    %2924 = vxpose.xlu0.c.b16.cont [4/8] 0, 128
    %2925 = vxpose.xlu0.c.b16.cont [5/8] 0, 128
    %2926 = vxpose.xlu0.c.b16.cont [6/8] 0, 128
    %2927 = vxpose.xlu0.c.b16.cont [7/8] 0, 128
    %2928 = vxpose.xlu0.c.b16.end [8/8] 0, 128
    %v2929 = vpop.trf.xlu0
    %v2930 = vpop.trf.xlu0
    %v2931 = vpop.trf.xlu0
    %v2932 = vpop.trf.xlu0
    %v2933 = vpop.trf.xlu0
    %v2934 = vpop.trf.xlu0
    %v2935 = vpop.trf.xlu0
    %v2936 = vpop.trf.xlu0
    %v2937 = vcombine.low %v2689, %v2753
    %v2939 = vunpack.c.l.s4 1983009808
    %v2940 = vunpack.c.0.s8 %v2939
    %v2941 = vlaneseq
    %v2942 = vshrl.u32 %v2941, 7
    %v2943 = vsub.s32 %v2940, %v2942
    %v2944 = vrot.slane %v2937, %v2943
    %v2945 = vcombine.low %v2721, %v2785
    %v2947 = vunpack.c.l.s4 1983009808
    %v2948 = vunpack.c.0.s8 %v2947
    %v2949 = vlaneseq
    %v2950 = vshrl.u32 %v2949, 7
    %v2951 = vsub.s32 %v2948, %v2950
    %v2952 = vrot.slane %v2945, %v2951
    %v2953 = vcombine.low %v2817, %v2881
    %v2955 = vunpack.c.l.s4 1983009808
    %v2956 = vunpack.c.0.s8 %v2955
    %v2957 = vlaneseq
    %v2958 = vshrl.u32 %v2957, 7
    %v2959 = vsub.s32 %v2956, %v2958
    %v2960 = vrot.slane %v2953, %v2959
    %v2961 = vcombine.low %v2849, %v2913
    %v2963 = vunpack.c.l.s4 1983009808
    %v2964 = vunpack.c.0.s8 %v2963
    %v2965 = vlaneseq
    %v2966 = vshrl.u32 %v2965, 7
    %v2967 = vsub.s32 %v2964, %v2966
    %v2968 = vrot.slane %v2961, %v2967
    %v2969 = vcombine.low %v2944, %v2952
    %v2970 = vcombine.high %v2944, %v2952
    %v2972 = vunpack.c.l.s4 1934713408
    %v2973 = vunpack.c.0.s8 %v2972
    %v2974 = vlaneseq
    %v2975 = vshrl.u32 %v2974, 7
    %v2976 = vsub.s32 %v2973, %v2975
    %v2977 = vrot.slane %v2969, %v2976
    %v2979 = vunpack.c.l.s4 1934713408
    %v2980 = vunpack.c.0.s8 %v2979
    %v2981 = vlaneseq
    %v2982 = vshrl.u32 %v2981, 7
    %v2983 = vsub.s32 %v2980, %v2982
    %v2984 = vrot.slane %v2970, %v2983
    %v2985 = vcombine.low %v2960, %v2968
    %v2986 = vcombine.high %v2960, %v2968
    %v2988 = vunpack.c.l.s4 1934713408
    %v2989 = vunpack.c.0.s8 %v2988
    %v2990 = vlaneseq
    %v2991 = vshrl.u32 %v2990, 7
    %v2992 = vsub.s32 %v2989, %v2991
    %v2993 = vrot.slane %v2985, %v2992
    %v2995 = vunpack.c.l.s4 1934713408
    %v2996 = vunpack.c.0.s8 %v2995
    %v2997 = vlaneseq
    %v2998 = vshrl.u32 %v2997, 7
    %v2999 = vsub.s32 %v2996, %v2998
    %v3000 = vrot.slane %v2986, %v2999
    %v3001 = vcombine.low %v2977, %v2993
    %v3002 = vcombine.high %v2977, %v2993
    %v3003 = vcombine.low %v2984, %v3000
    %v3004 = vcombine.high %v2984, %v3000
    %v3005 = vcombine.low %v2705, %v2769
    %v3007 = vunpack.c.l.s4 1983009808
    %v3008 = vunpack.c.0.s8 %v3007
    %v3009 = vlaneseq
    %v3010 = vshrl.u32 %v3009, 7
    %v3011 = vsub.s32 %v3008, %v3010
    %v3012 = vrot.slane %v3005, %v3011
    %v3013 = vcombine.low %v2737, %v2801
    %v3015 = vunpack.c.l.s4 1983009808
    %v3016 = vunpack.c.0.s8 %v3015
    %v3017 = vlaneseq
    %v3018 = vshrl.u32 %v3017, 7
    %v3019 = vsub.s32 %v3016, %v3018
    %v3020 = vrot.slane %v3013, %v3019
    %v3021 = vcombine.low %v2833, %v2897
    %v3023 = vunpack.c.l.s4 1983009808
    %v3024 = vunpack.c.0.s8 %v3023
    %v3025 = vlaneseq
    %v3026 = vshrl.u32 %v3025, 7
    %v3027 = vsub.s32 %v3024, %v3026
    %v3028 = vrot.slane %v3021, %v3027
    %v3029 = vcombine.low %v2865, %v2929
    %v3031 = vunpack.c.l.s4 1983009808
    %v3032 = vunpack.c.0.s8 %v3031
    %v3033 = vlaneseq
    %v3034 = vshrl.u32 %v3033, 7
    %v3035 = vsub.s32 %v3032, %v3034
    %v3036 = vrot.slane %v3029, %v3035
    %v3037 = vcombine.low %v3012, %v3020
    %v3038 = vcombine.high %v3012, %v3020
    %v3040 = vunpack.c.l.s4 1934713408
    %v3041 = vunpack.c.0.s8 %v3040
    %v3042 = vlaneseq
    %v3043 = vshrl.u32 %v3042, 7
    %v3044 = vsub.s32 %v3041, %v3043
    %v3045 = vrot.slane %v3037, %v3044
    %v3047 = vunpack.c.l.s4 1934713408
    %v3048 = vunpack.c.0.s8 %v3047
    %v3049 = vlaneseq
    %v3050 = vshrl.u32 %v3049, 7
    %v3051 = vsub.s32 %v3048, %v3050
    %v3052 = vrot.slane %v3038, %v3051
    %v3053 = vcombine.low %v3028, %v3036
    %v3054 = vcombine.high %v3028, %v3036
    %v3056 = vunpack.c.l.s4 1934713408
    %v3057 = vunpack.c.0.s8 %v3056
    %v3058 = vlaneseq
    %v3059 = vshrl.u32 %v3058, 7
    %v3060 = vsub.s32 %v3057, %v3059
    %v3061 = vrot.slane %v3053, %v3060
    %v3063 = vunpack.c.l.s4 1934713408
    %v3064 = vunpack.c.0.s8 %v3063
    %v3065 = vlaneseq
    %v3066 = vshrl.u32 %v3065, 7
    %v3067 = vsub.s32 %v3064, %v3066
    %v3068 = vrot.slane %v3054, %v3067
    %v3069 = vcombine.low %v3045, %v3061
    %v3070 = vcombine.high %v3045, %v3061
    %v3071 = vcombine.low %v3052, %v3068
    %v3072 = vcombine.high %v3052, %v3068
    %v3075 = vpack.i.b16 %v3069, %v3001
    %v3077 = vshrl.u32 %v3001, 16
    %v3078 = vshrl.u32 %v3069, 16
    %v3079 = vpack.i.b16 %v3078, %v3077
    %v3083 = vpack.i.b16 %v3070, %v3002
    %v3085 = vshrl.u32 %v3002, 16
    %v3086 = vshrl.u32 %v3070, 16
    %v3087 = vpack.i.b16 %v3086, %v3085
    %v3091 = vpack.i.b16 %v3071, %v3003
    %v3093 = vshrl.u32 %v3003, 16
    %v3094 = vshrl.u32 %v3071, 16
    %v3095 = vpack.i.b16 %v3094, %v3093
    %v3099 = vpack.i.b16 %v3072, %v3004
    %v3101 = vshrl.u32 %v3004, 16
    %v3102 = vshrl.u32 %v3072, 16
    %v3103 = vpack.i.b16 %v3102, %v3101
    %vm3105 = vcmask 130048
    %v3107 = vsel %vm3105, %v2441, 0
    %3109 = vmatprep.subr.bf16.mxu0 0
    %3110 = vmatpush1.bf16.msra.mxu0 %v3075
    %3111 = vmatprep.subr.bf16.mxu0 0
    %3112 = vmatpush1.bf16.msra.mxu0 0
    %3113 = vmatprep.subr.bf16.mxu0 0
    %3114 = vmatpush1.bf16.msra.mxu0 0
    %3115 = vmatprep.subr.bf16.mxu0 0
    %3116 = vmatpush1.bf16.msra.mxu0 0
    %3117 = vmatprep.subr.bf16.mxu0 0
    %3118 = vmatpush1.bf16.msra.mxu0 0
    %3119 = vmatprep.subr.bf16.mxu0 0
    %3120 = vmatpush1.bf16.msra.mxu0 0
    %3121 = vmatprep.subr.bf16.mxu0 0
    %3122 = vmatpush1.bf16.msra.mxu0 0
    %3123 = vmatprep.subr.bf16.mxu0 0
    %3124 = vmatpush1.bf16.msra.mxu0 0
    %3125 = vmatprep.subr.bf16.mxu0 0
    %3126 = vmatpush1.bf16.msra.mxu0 0
    %3127 = vmatprep.subr.bf16.mxu0 0
    %3128 = vmatpush1.bf16.msra.mxu0 0
    %3129 = vmatprep.subr.bf16.mxu0 0
    %3130 = vmatpush1.bf16.msra.mxu0 0
    %3131 = vmatprep.subr.bf16.mxu0 0
    %3132 = vmatpush1.bf16.msra.mxu0 0
    %3133 = vmatprep.subr.bf16.mxu0 0
    %3134 = vmatpush1.bf16.msra.mxu0 0
    %3135 = vmatprep.subr.bf16.mxu0 0
    %3136 = vmatpush1.bf16.msra.mxu0 0
    %3137 = vmatprep.subr.bf16.mxu0 0
    %3138 = vmatpush1.bf16.msra.mxu0 0
    %3139 = vmatprep.subr.bf16.mxu0 0
    %3140 = vmatpush1.bf16.msra.mxu0 0
    %3141 = vmatprep.mubr.bf16.mxu0 0
    %3142 = vmatmul.mubr.bf16.gmra.mrb[0].mxu0 %v3107
    %v3143 = vpop.f32.mrb[0].mxu0
    %v3144 = vadd.f32 0.0, %v3143
    %v3145 = vpop.f32.mrb[0].mxu0
    %v3146 = vpop.f32.mrb[0].mxu0
    %v3147 = vpop.f32.mrb[0].mxu0
    %3148 = vdwg.mxu0
    %v3150 = vsel %vm3105, %v2444, 0
    %3152 = vmatprep.subr.bf16.mxu0 0
    %3153 = vmatpush1.bf16.msra.mxu0 %v3079
    %3154 = vmatprep.subr.bf16.mxu0 0
    %3155 = vmatpush1.bf16.msra.mxu0 0
    %3156 = vmatprep.subr.bf16.mxu0 0
    %3157 = vmatpush1.bf16.msra.mxu0 0
    %3158 = vmatprep.subr.bf16.mxu0 0
    %3159 = vmatpush1.bf16.msra.mxu0 0
    %3160 = vmatprep.subr.bf16.mxu0 0
    %3161 = vmatpush1.bf16.msra.mxu0 0
    %3162 = vmatprep.subr.bf16.mxu0 0
    %3163 = vmatpush1.bf16.msra.mxu0 0
    %3164 = vmatprep.subr.bf16.mxu0 0
    %3165 = vmatpush1.bf16.msra.mxu0 0
    %3166 = vmatprep.subr.bf16.mxu0 0
    %3167 = vmatpush1.bf16.msra.mxu0 0
    %3168 = vmatprep.subr.bf16.mxu0 0
    %3169 = vmatpush1.bf16.msra.mxu0 0
    %3170 = vmatprep.subr.bf16.mxu0 0
    %3171 = vmatpush1.bf16.msra.mxu0 0
    %3172 = vmatprep.subr.bf16.mxu0 0
    %3173 = vmatpush1.bf16.msra.mxu0 0
    %3174 = vmatprep.subr.bf16.mxu0 0
    %3175 = vmatpush1.bf16.msra.mxu0 0
    %3176 = vmatprep.subr.bf16.mxu0 0
    %3177 = vmatpush1.bf16.msra.mxu0 0
    %3178 = vmatprep.subr.bf16.mxu0 0
    %3179 = vmatpush1.bf16.msra.mxu0 0
    %3180 = vmatprep.subr.bf16.mxu0 0
    %3181 = vmatpush1.bf16.msra.mxu0 0
    %3182 = vmatprep.subr.bf16.mxu0 0
    %3183 = vmatpush1.bf16.msra.mxu0 0
    %3184 = vmatprep.mubr.bf16.mxu0 0
    %3185 = vmatmul.mubr.bf16.gmra.mrb[0].mxu0 %v3150
    %v3186 = vpop.f32.mrb[0].mxu0
    %v3187 = vadd.f32 0.0, %v3186
    %v3188 = vpop.f32.mrb[0].mxu0
    %v3189 = vpop.f32.mrb[0].mxu0
    %v3190 = vpop.f32.mrb[0].mxu0
    %3191 = vdwg.mxu0
    %v3193 = vsel %vm3105, %v2447, 0
    %3195 = vmatprep.subr.bf16.mxu0 0
    %3196 = vmatpush1.bf16.msra.mxu0 %v3083
    %3197 = vmatprep.subr.bf16.mxu0 0
    %3198 = vmatpush1.bf16.msra.mxu0 0
    %3199 = vmatprep.subr.bf16.mxu0 0
    %3200 = vmatpush1.bf16.msra.mxu0 0
    %3201 = vmatprep.subr.bf16.mxu0 0
    %3202 = vmatpush1.bf16.msra.mxu0 0
    %3203 = vmatprep.subr.bf16.mxu0 0
    %3204 = vmatpush1.bf16.msra.mxu0 0
    %3205 = vmatprep.subr.bf16.mxu0 0
    %3206 = vmatpush1.bf16.msra.mxu0 0
    %3207 = vmatprep.subr.bf16.mxu0 0
    %3208 = vmatpush1.bf16.msra.mxu0 0
    %3209 = vmatprep.subr.bf16.mxu0 0
    %3210 = vmatpush1.bf16.msra.mxu0 0
    %3211 = vmatprep.subr.bf16.mxu0 0
    %3212 = vmatpush1.bf16.msra.mxu0 0
    %3213 = vmatprep.subr.bf16.mxu0 0
    %3214 = vmatpush1.bf16.msra.mxu0 0
    %3215 = vmatprep.subr.bf16.mxu0 0
    %3216 = vmatpush1.bf16.msra.mxu0 0
    %3217 = vmatprep.subr.bf16.mxu0 0
    %3218 = vmatpush1.bf16.msra.mxu0 0
    %3219 = vmatprep.subr.bf16.mxu0 0
    %3220 = vmatpush1.bf16.msra.mxu0 0
    %3221 = vmatprep.subr.bf16.mxu0 0
    %3222 = vmatpush1.bf16.msra.mxu0 0
    %3223 = vmatprep.subr.bf16.mxu0 0
    %3224 = vmatpush1.bf16.msra.mxu0 0
    %3225 = vmatprep.subr.bf16.mxu0 0
    %3226 = vmatpush1.bf16.msra.mxu0 0
    %3227 = vmatprep.mubr.bf16.mxu0 0
    %3228 = vmatmul.mubr.bf16.gmra.mrb[0].mxu0 %v3193
    %v3229 = vpop.f32.mrb[0].mxu0
    %v3230 = vadd.f32 0.0, %v3229
    %v3231 = vpop.f32.mrb[0].mxu0
    %v3232 = vpop.f32.mrb[0].mxu0
    %v3233 = vpop.f32.mrb[0].mxu0
    %3234 = vdwg.mxu0
    %v3236 = vsel %vm3105, %v2450, 0
    %3238 = vmatprep.subr.bf16.mxu0 0
    %3239 = vmatpush1.bf16.msra.mxu0 %v3087
    %3240 = vmatprep.subr.bf16.mxu0 0
    %3241 = vmatpush1.bf16.msra.mxu0 0
    %3242 = vmatprep.subr.bf16.mxu0 0
    %3243 = vmatpush1.bf16.msra.mxu0 0
    %3244 = vmatprep.subr.bf16.mxu0 0
    %3245 = vmatpush1.bf16.msra.mxu0 0
    %3246 = vmatprep.subr.bf16.mxu0 0
    %3247 = vmatpush1.bf16.msra.mxu0 0
    %3248 = vmatprep.subr.bf16.mxu0 0
    %3249 = vmatpush1.bf16.msra.mxu0 0
    %3250 = vmatprep.subr.bf16.mxu0 0
    %3251 = vmatpush1.bf16.msra.mxu0 0
    %3252 = vmatprep.subr.bf16.mxu0 0
    %3253 = vmatpush1.bf16.msra.mxu0 0
    %3254 = vmatprep.subr.bf16.mxu0 0
    %3255 = vmatpush1.bf16.msra.mxu0 0
    %3256 = vmatprep.subr.bf16.mxu0 0
    %3257 = vmatpush1.bf16.msra.mxu0 0
    %3258 = vmatprep.subr.bf16.mxu0 0
    %3259 = vmatpush1.bf16.msra.mxu0 0
    %3260 = vmatprep.subr.bf16.mxu0 0
    %3261 = vmatpush1.bf16.msra.mxu0 0
    %3262 = vmatprep.subr.bf16.mxu0 0
    %3263 = vmatpush1.bf16.msra.mxu0 0
    %3264 = vmatprep.subr.bf16.mxu0 0
    %3265 = vmatpush1.bf16.msra.mxu0 0
    %3266 = vmatprep.subr.bf16.mxu0 0
    %3267 = vmatpush1.bf16.msra.mxu0 0
    %3268 = vmatprep.subr.bf16.mxu0 0
    %3269 = vmatpush1.bf16.msra.mxu0 0
    %3270 = vmatprep.mubr.bf16.mxu0 0
    %3271 = vmatmul.mubr.bf16.gmra.mrb[0].mxu0 %v3236
    %v3272 = vpop.f32.mrb[0].mxu0
    %v3273 = vadd.f32 0.0, %v3272
    %v3274 = vpop.f32.mrb[0].mxu0
    %v3275 = vpop.f32.mrb[0].mxu0
    %v3276 = vpop.f32.mrb[0].mxu0
    %3277 = vdwg.mxu0
    %v3279 = vsel %vm3105, %v2453, 0
    %3281 = vmatprep.subr.bf16.mxu0 0
    %3282 = vmatpush1.bf16.msra.mxu0 %v3091
    %3283 = vmatprep.subr.bf16.mxu0 0
    %3284 = vmatpush1.bf16.msra.mxu0 0
    %3285 = vmatprep.subr.bf16.mxu0 0
    %3286 = vmatpush1.bf16.msra.mxu0 0
    %3287 = vmatprep.subr.bf16.mxu0 0
    %3288 = vmatpush1.bf16.msra.mxu0 0
    %3289 = vmatprep.subr.bf16.mxu0 0
    %3290 = vmatpush1.bf16.msra.mxu0 0
    %3291 = vmatprep.subr.bf16.mxu0 0
    %3292 = vmatpush1.bf16.msra.mxu0 0
    %3293 = vmatprep.subr.bf16.mxu0 0
    %3294 = vmatpush1.bf16.msra.mxu0 0
    %3295 = vmatprep.subr.bf16.mxu0 0
    %3296 = vmatpush1.bf16.msra.mxu0 0
    %3297 = vmatprep.subr.bf16.mxu0 0
    %3298 = vmatpush1.bf16.msra.mxu0 0
    %3299 = vmatprep.subr.bf16.mxu0 0
    %3300 = vmatpush1.bf16.msra.mxu0 0
    %3301 = vmatprep.subr.bf16.mxu0 0
    %3302 = vmatpush1.bf16.msra.mxu0 0
    %3303 = vmatprep.subr.bf16.mxu0 0
    %3304 = vmatpush1.bf16.msra.mxu0 0
    %3305 = vmatprep.subr.bf16.mxu0 0
    %3306 = vmatpush1.bf16.msra.mxu0 0
    %3307 = vmatprep.subr.bf16.mxu0 0
    %3308 = vmatpush1.bf16.msra.mxu0 0
    %3309 = vmatprep.subr.bf16.mxu0 0
    %3310 = vmatpush1.bf16.msra.mxu0 0
    %3311 = vmatprep.subr.bf16.mxu0 0
    %3312 = vmatpush1.bf16.msra.mxu0 0
    %3313 = vmatprep.mubr.bf16.mxu0 0
    %3314 = vmatmul.mubr.bf16.gmra.mrb[0].mxu0 %v3279
    %v3315 = vpop.f32.mrb[0].mxu0
    %v3316 = vadd.f32 0.0, %v3315
    %v3317 = vpop.f32.mrb[0].mxu0
    %v3318 = vpop.f32.mrb[0].mxu0
    %v3319 = vpop.f32.mrb[0].mxu0
    %3320 = vdwg.mxu0
    %v3322 = vsel %vm3105, %v2456, 0
    %3324 = vmatprep.subr.bf16.mxu0 0
    %3325 = vmatpush1.bf16.msra.mxu0 %v3095
    %3326 = vmatprep.subr.bf16.mxu0 0
    %3327 = vmatpush1.bf16.msra.mxu0 0
    %3328 = vmatprep.subr.bf16.mxu0 0
    %3329 = vmatpush1.bf16.msra.mxu0 0
    %3330 = vmatprep.subr.bf16.mxu0 0
    %3331 = vmatpush1.bf16.msra.mxu0 0
    %3332 = vmatprep.subr.bf16.mxu0 0
    %3333 = vmatpush1.bf16.msra.mxu0 0
    %3334 = vmatprep.subr.bf16.mxu0 0
    %3335 = vmatpush1.bf16.msra.mxu0 0
    %3336 = vmatprep.subr.bf16.mxu0 0
    %3337 = vmatpush1.bf16.msra.mxu0 0
    %3338 = vmatprep.subr.bf16.mxu0 0
    %3339 = vmatpush1.bf16.msra.mxu0 0
    %3340 = vmatprep.subr.bf16.mxu0 0
    %3341 = vmatpush1.bf16.msra.mxu0 0
    %3342 = vmatprep.subr.bf16.mxu0 0
    %3343 = vmatpush1.bf16.msra.mxu0 0
    %3344 = vmatprep.subr.bf16.mxu0 0
    %3345 = vmatpush1.bf16.msra.mxu0 0
    %3346 = vmatprep.subr.bf16.mxu0 0
    %3347 = vmatpush1.bf16.msra.mxu0 0
    %3348 = vmatprep.subr.bf16.mxu0 0
    %3349 = vmatpush1.bf16.msra.mxu0 0
    %3350 = vmatprep.subr.bf16.mxu0 0
    %3351 = vmatpush1.bf16.msra.mxu0 0
    %3352 = vmatprep.subr.bf16.mxu0 0
    %3353 = vmatpush1.bf16.msra.mxu0 0
    %3354 = vmatprep.subr.bf16.mxu0 0
    %3355 = vmatpush1.bf16.msra.mxu0 0
    %3356 = vmatprep.mubr.bf16.mxu0 0
    %3357 = vmatmul.mubr.bf16.gmra.mrb[0].mxu0 %v3322
    %v3358 = vpop.f32.mrb[0].mxu0
    %v3359 = vadd.f32 0.0, %v3358
    %v3360 = vpop.f32.mrb[0].mxu0
    %v3361 = vpop.f32.mrb[0].mxu0
    %v3362 = vpop.f32.mrb[0].mxu0
    %3363 = vdwg.mxu0
    %v3365 = vsel %vm3105, %v2459, 0
    %3367 = vmatprep.subr.bf16.mxu0 0
    %3368 = vmatpush1.bf16.msra.mxu0 %v3099
    %3369 = vmatprep.subr.bf16.mxu0 0
    %3370 = vmatpush1.bf16.msra.mxu0 0
    %3371 = vmatprep.subr.bf16.mxu0 0
    %3372 = vmatpush1.bf16.msra.mxu0 0
    %3373 = vmatprep.subr.bf16.mxu0 0
    %3374 = vmatpush1.bf16.msra.mxu0 0
    %3375 = vmatprep.subr.bf16.mxu0 0
    %3376 = vmatpush1.bf16.msra.mxu0 0
    %3377 = vmatprep.subr.bf16.mxu0 0
    %3378 = vmatpush1.bf16.msra.mxu0 0
    %3379 = vmatprep.subr.bf16.mxu0 0
    %3380 = vmatpush1.bf16.msra.mxu0 0
    %3381 = vmatprep.subr.bf16.mxu0 0
    %3382 = vmatpush1.bf16.msra.mxu0 0
    %3383 = vmatprep.subr.bf16.mxu0 0
    %3384 = vmatpush1.bf16.msra.mxu0 0
    %3385 = vmatprep.subr.bf16.mxu0 0
    %3386 = vmatpush1.bf16.msra.mxu0 0
    %3387 = vmatprep.subr.bf16.mxu0 0
    %3388 = vmatpush1.bf16.msra.mxu0 0
    %3389 = vmatprep.subr.bf16.mxu0 0
    %3390 = vmatpush1.bf16.msra.mxu0 0
    %3391 = vmatprep.subr.bf16.mxu0 0
    %3392 = vmatpush1.bf16.msra.mxu0 0
    %3393 = vmatprep.subr.bf16.mxu0 0
    %3394 = vmatpush1.bf16.msra.mxu0 0
    %3395 = vmatprep.subr.bf16.mxu0 0
    %3396 = vmatpush1.bf16.msra.mxu0 0
    %3397 = vmatprep.subr.bf16.mxu0 0
    %3398 = vmatpush1.bf16.msra.mxu0 0
    %3399 = vmatprep.mubr.bf16.mxu0 0
    %3400 = vmatmul.mubr.bf16.gmra.mrb[0].mxu0 %v3365
    %v3401 = vpop.f32.mrb[0].mxu0
    %v3402 = vadd.f32 0.0, %v3401
    %v3403 = vpop.f32.mrb[0].mxu0
    %v3404 = vpop.f32.mrb[0].mxu0
    %v3405 = vpop.f32.mrb[0].mxu0
    %3406 = vdwg.mxu0
    %v3408 = vsel %vm3105, %v2462, 0
    %3410 = vmatprep.subr.bf16.mxu0 0
    %3411 = vmatpush1.bf16.msra.mxu0 %v3103
    %3412 = vmatprep.subr.bf16.mxu0 0
    %3413 = vmatpush1.bf16.msra.mxu0 0
    %3414 = vmatprep.subr.bf16.mxu0 0
    %3415 = vmatpush1.bf16.msra.mxu0 0
    %3416 = vmatprep.subr.bf16.mxu0 0
    %3417 = vmatpush1.bf16.msra.mxu0 0
    %3418 = vmatprep.subr.bf16.mxu0 0
    %3419 = vmatpush1.bf16.msra.mxu0 0
    %3420 = vmatprep.subr.bf16.mxu0 0
    %3421 = vmatpush1.bf16.msra.mxu0 0
    %3422 = vmatprep.subr.bf16.mxu0 0
    %3423 = vmatpush1.bf16.msra.mxu0 0
    %3424 = vmatprep.subr.bf16.mxu0 0
    %3425 = vmatpush1.bf16.msra.mxu0 0
    %3426 = vmatprep.subr.bf16.mxu0 0
    %3427 = vmatpush1.bf16.msra.mxu0 0
    %3428 = vmatprep.subr.bf16.mxu0 0
    %3429 = vmatpush1.bf16.msra.mxu0 0
    %3430 = vmatprep.subr.bf16.mxu0 0
    %3431 = vmatpush1.bf16.msra.mxu0 0
    %3432 = vmatprep.subr.bf16.mxu0 0
    %3433 = vmatpush1.bf16.msra.mxu0 0
    %3434 = vmatprep.subr.bf16.mxu0 0
    %3435 = vmatpush1.bf16.msra.mxu0 0
    %3436 = vmatprep.subr.bf16.mxu0 0
    %3437 = vmatpush1.bf16.msra.mxu0 0
    %3438 = vmatprep.subr.bf16.mxu0 0
    %3439 = vmatpush1.bf16.msra.mxu0 0
    %3440 = vmatprep.subr.bf16.mxu0 0
    %3441 = vmatpush1.bf16.msra.mxu0 0
    %3442 = vmatprep.mubr.bf16.mxu0 0
    %3443 = vmatmul.mubr.bf16.gmra.mrb[0].mxu0 %v3408
    %v3444 = vpop.f32.mrb[0].mxu0
    %v3445 = vadd.f32 0.0, %v3444
    %v3446 = vpop.f32.mrb[0].mxu0
    %v3447 = vpop.f32.mrb[0].mxu0
    %v3448 = vpop.f32.mrb[0].mxu0
    %3449 = vdwg.mxu0
    %v3450 = vmul.f32 %v3144, 0.25
    %v3451 = vmul.f32 %v3187, 0.25
    %v3452 = vmul.f32 %v3230, 0.25
    %v3453 = vmul.f32 %v3273, 0.25
    %v3454 = vmul.f32 %v3316, 0.25
    %v3455 = vmul.f32 %v3359, 0.25
    %v3456 = vmul.f32 %v3402, 0.25
    %v3457 = vmul.f32 %v3445, 0.25
    %vm3458 = vcmask 27648
    %v3459 = vsel %vm3458, %v3450, -inf
    %3460 = vmax.xlane.f32.xlu0 %v3459
    %v3461 = vpop.xlane.xlu0 %3460
    %v3462 = vsel %vm3458, %v3451, -inf
    %3463 = vmax.xlane.f32.xlu0 %v3462
    %v3464 = vpop.xlane.xlu0 %3463
    %v3465 = vsel %vm3458, %v3452, -inf
    %3466 = vmax.xlane.f32.xlu0 %v3465
    %v3467 = vpop.xlane.xlu0 %3466
    %v3468 = vsel %vm3458, %v3453, -inf
    %3469 = vmax.xlane.f32.xlu0 %v3468
    %v3470 = vpop.xlane.xlu0 %3469
    %v3471 = vsel %vm3458, %v3454, -inf
    %3472 = vmax.xlane.f32.xlu0 %v3471
    %v3473 = vpop.xlane.xlu0 %3472
    %v3474 = vsel %vm3458, %v3455, -inf
    %3475 = vmax.xlane.f32.xlu0 %v3474
    %v3476 = vpop.xlane.xlu0 %3475
    %v3477 = vsel %vm3458, %v3456, -inf
    %3478 = vmax.xlane.f32.xlu0 %v3477
    %v3479 = vpop.xlane.xlu0 %3478
    %v3480 = vsel %vm3458, %v3457, -inf
    %3481 = vmax.xlane.f32.xlu0 %v3480
    %v3482 = vpop.xlane.xlu0 %3481
    %v3483 = vsub.f32 %v3450, %v3461
    %v3484 = vsub.f32 %v3451, %v3464
    %v3485 = vsub.f32 %v3452, %v3467
    %v3486 = vsub.f32 %v3453, %v3470
    %v3487 = vsub.f32 %v3454, %v3473
    %v3488 = vsub.f32 %v3455, %v3476
    %v3489 = vsub.f32 %v3456, %v3479
    %v3490 = vsub.f32 %v3457, %v3482
    %v3491 = vmul.f32 %v3483, 1.442695
    %v3492 = vpow.pop %v3491
    %v3493 = vmul.f32 %v3484, 1.442695
    %v3494 = vpow.pop %v3493
    %v3495 = vmul.f32 %v3485, 1.442695
    %v3496 = vpow.pop %v3495
    %v3497 = vmul.f32 %v3486, 1.442695
    %v3498 = vpow.pop %v3497
    %v3499 = vmul.f32 %v3487, 1.442695
    %v3500 = vpow.pop %v3499
    %v3501 = vmul.f32 %v3488, 1.442695
    %v3502 = vpow.pop %v3501
    %v3503 = vmul.f32 %v3489, 1.442695
    %v3504 = vpow.pop %v3503
    %v3505 = vmul.f32 %v3490, 1.442695
    %v3506 = vpow.pop %v3505
    %v3507 = vsel %vm3458, %v3492, 0.0
    %3508 = vadd.xlane.f32.xlu0 %v3507
    %v3509 = vpop.xlane.xlu0 %3508
    %v3510 = vsel %vm3458, %v3494, 0.0
    %3511 = vadd.xlane.f32.xlu0 %v3510
    %v3512 = vpop.xlane.xlu0 %3511
    %v3513 = vsel %vm3458, %v3496, 0.0
    %3514 = vadd.xlane.f32.xlu0 %v3513
    %v3515 = vpop.xlane.xlu0 %3514
    %v3516 = vsel %vm3458, %v3498, 0.0
    %3517 = vadd.xlane.f32.xlu0 %v3516
    %v3518 = vpop.xlane.xlu0 %3517
    %v3519 = vsel %vm3458, %v3500, 0.0
    %3520 = vadd.xlane.f32.xlu0 %v3519
    %v3521 = vpop.xlane.xlu0 %3520
    %v3522 = vsel %vm3458, %v3502, 0.0
    %3523 = vadd.xlane.f32.xlu0 %v3522
    %v3524 = vpop.xlane.xlu0 %3523
    %v3525 = vsel %vm3458, %v3504, 0.0
    %3526 = vadd.xlane.f32.xlu0 %v3525
    %v3527 = vpop.xlane.xlu0 %3526
    %v3528 = vsel %vm3458, %v3506, 0.0
    %3529 = vadd.xlane.f32.xlu0 %v3528
    %v3530 = vpop.xlane.xlu0 %3529
    %v3531 = vrcp.pop %v3509
    %v3532 = vrcp.pop %v3512
    %v3533 = vrcp.pop %v3515
    %v3534 = vrcp.pop %v3518
    %v3535 = vrcp.pop %v3521
    %v3536 = vrcp.pop %v3524
    %v3537 = vrcp.pop %v3527
    %v3538 = vrcp.pop %v3530
    %v3539 = vmul.f32 %v3492, %v3531
    %v3540 = vmul.f32 %v3494, %v3532
    %v3541 = vmul.f32 %v3496, %v3533
    %v3542 = vmul.f32 %v3498, %v3534
    %v3543 = vmul.f32 %v3500, %v3535
    %v3544 = vmul.f32 %v3502, %v3536
    %v3545 = vmul.f32 %v3504, %v3537
    %v3546 = vmul.f32 %v3506, %v3538
    %v3547 = vpack.c.bf16 %v3539, %v3539
    %v3548 = vpack.c.bf16 %v3540, %v3540
    %v3549 = vpack.c.bf16 %v3541, %v3541
    %v3550 = vpack.c.bf16 %v3542, %v3542
    %v3551 = vpack.c.bf16 %v3543, %v3543
    %v3552 = vpack.c.bf16 %v3544, %v3544
    %v3553 = vpack.c.bf16 %v3545, %v3545
    %v3554 = vpack.c.bf16 %v3546, %v3546
    %3555 = vxpose.xlu0.c.b16.start [1/8] %v2367, 128
    %3556 = vxpose.xlu0.c.b16.cont [2/8] 0, 128
    %3557 = vxpose.xlu0.c.b16.cont [3/8] 0, 128
    %3558 = vxpose.xlu0.c.b16.cont [4/8] 0, 128
    %3559 = vxpose.xlu0.c.b16.cont [5/8] 0, 128
    %3560 = vxpose.xlu0.c.b16.cont [6/8] 0, 128
    %3561 = vxpose.xlu0.c.b16.cont [7/8] 0, 128
    %3562 = vxpose.xlu0.c.b16.end [8/8] 0, 128
    %v3563 = vpop.trf.xlu0
    %v3564 = vpop.trf.xlu0
    %v3565 = vpop.trf.xlu0
    %v3566 = vpop.trf.xlu0
    %v3567 = vpop.trf.xlu0
    %v3568 = vpop.trf.xlu0
    %v3569 = vpop.trf.xlu0
    %v3570 = vpop.trf.xlu0
    %3571 = vxpose.xlu0.c.b16.start [1/8] %v2368, 128
    %3572 = vxpose.xlu0.c.b16.cont [2/8] 0, 128
    %3573 = vxpose.xlu0.c.b16.cont [3/8] 0, 128
    %3574 = vxpose.xlu0.c.b16.cont [4/8] 0, 128
    %3575 = vxpose.xlu0.c.b16.cont [5/8] 0, 128
    %3576 = vxpose.xlu0.c.b16.cont [6/8] 0, 128
    %3577 = vxpose.xlu0.c.b16.cont [7/8] 0, 128
    %3578 = vxpose.xlu0.c.b16.end [8/8] 0, 128
    %v3579 = vpop.trf.xlu0
    %v3580 = vpop.trf.xlu0
    %v3581 = vpop.trf.xlu0
    %v3582 = vpop.trf.xlu0
    %v3583 = vpop.trf.xlu0
    %v3584 = vpop.trf.xlu0
    %v3585 = vpop.trf.xlu0
    %v3586 = vpop.trf.xlu0
    %3587 = vxpose.xlu0.c.b16.start [1/8] %v2369, 128
    %3588 = vxpose.xlu0.c.b16.cont [2/8] 0, 128
    %3589 = vxpose.xlu0.c.b16.cont [3/8] 0, 128
    %3590 = vxpose.xlu0.c.b16.cont [4/8] 0, 128
    %3591 = vxpose.xlu0.c.b16.cont [5/8] 0, 128
    %3592 = vxpose.xlu0.c.b16.cont [6/8] 0, 128
    %3593 = vxpose.xlu0.c.b16.cont [7/8] 0, 128
    %3594 = vxpose.xlu0.c.b16.end [8/8] 0, 128
    %v3595 = vpop.trf.xlu0
    %v3596 = vpop.trf.xlu0
    %v3597 = vpop.trf.xlu0
    %v3598 = vpop.trf.xlu0
    %v3599 = vpop.trf.xlu0
    %v3600 = vpop.trf.xlu0
    %v3601 = vpop.trf.xlu0
    %v3602 = vpop.trf.xlu0
    %3603 = vxpose.xlu0.c.b16.start [1/8] %v2370, 128
    %3604 = vxpose.xlu0.c.b16.cont [2/8] 0, 128
    %3605 = vxpose.xlu0.c.b16.cont [3/8] 0, 128
    %3606 = vxpose.xlu0.c.b16.cont [4/8] 0, 128
    %3607 = vxpose.xlu0.c.b16.cont [5/8] 0, 128
    %3608 = vxpose.xlu0.c.b16.cont [6/8] 0, 128
    %3609 = vxpose.xlu0.c.b16.cont [7/8] 0, 128
    %3610 = vxpose.xlu0.c.b16.end [8/8] 0, 128
    %v3611 = vpop.trf.xlu0
    %v3612 = vpop.trf.xlu0
    %v3613 = vpop.trf.xlu0
    %v3614 = vpop.trf.xlu0
    %v3615 = vpop.trf.xlu0
    %v3616 = vpop.trf.xlu0
    %v3617 = vpop.trf.xlu0
    %v3618 = vpop.trf.xlu0
    %v3621 = vpack.i.b16 %v3579, %v3563
    %v3623 = vshrl.u32 %v3563, 16
    %v3624 = vshrl.u32 %v3579, 16
    %v3625 = vpack.i.b16 %v3624, %v3623
    %v3629 = vpack.i.b16 %v3611, %v3595
    %v3631 = vshrl.u32 %v3595, 16
    %v3632 = vshrl.u32 %v3611, 16
    %v3633 = vpack.i.b16 %v3632, %v3631
    %v3635 = vcombine.high %v3621, %v2544
    %v3637 = vunpack.c.l.s4 1983009808
    %v3638 = vunpack.c.0.s8 %v3637
    %v3639 = vlaneseq
    %v3640 = vshrl.u32 %v3639, 7
    %v3641 = vsub.s32 %v3638, %v3640
    %v3642 = vrot.slane %v3621, %v3641
    %v3644 = vunpack.c.l.s4 1983009808
    %v3645 = vunpack.c.0.s8 %v3644
    %v3646 = vlaneseq
    %v3647 = vshrl.u32 %v3646, 7
    %v3648 = vsub.s32 %v3645, %v3647
    %v3649 = vrot.slane %v3635, %v3648
    %v3650 = vcombine.high %v3629, %v2544
    %v3652 = vunpack.c.l.s4 1983009808
    %v3653 = vunpack.c.0.s8 %v3652
    %v3654 = vlaneseq
    %v3655 = vshrl.u32 %v3654, 7
    %v3656 = vsub.s32 %v3653, %v3655
    %v3657 = vrot.slane %v3629, %v3656
    %v3659 = vunpack.c.l.s4 1983009808
    %v3660 = vunpack.c.0.s8 %v3659
    %v3661 = vlaneseq
    %v3662 = vshrl.u32 %v3661, 7
    %v3663 = vsub.s32 %v3660, %v3662
    %v3664 = vrot.slane %v3650, %v3663
    %v3665 = vcombine.low %v3642, %v3657
    %v3666 = vcombine.high %v3642, %v3657
    %v3668 = vunpack.c.l.s4 1934713408
    %v3669 = vunpack.c.0.s8 %v3668
    %v3670 = vlaneseq
    %v3671 = vshrl.u32 %v3670, 7
    %v3672 = vsub.s32 %v3669, %v3671
    %v3673 = vrot.slane %v3665, %v3672
    %v3675 = vunpack.c.l.s4 1934713408
    %v3676 = vunpack.c.0.s8 %v3675
    %v3677 = vlaneseq
    %v3678 = vshrl.u32 %v3677, 7
    %v3679 = vsub.s32 %v3676, %v3678
    %v3680 = vrot.slane %v3666, %v3679
    %v3681 = vcombine.low %v3649, %v3664
    %v3682 = vcombine.high %v3649, %v3664
    %v3684 = vunpack.c.l.s4 1934713408
    %v3685 = vunpack.c.0.s8 %v3684
    %v3686 = vlaneseq
    %v3687 = vshrl.u32 %v3686, 7
    %v3688 = vsub.s32 %v3685, %v3687
    %v3689 = vrot.slane %v3681, %v3688
    %v3691 = vunpack.c.l.s4 1934713408
    %v3692 = vunpack.c.0.s8 %v3691
    %v3693 = vlaneseq
    %v3694 = vshrl.u32 %v3693, 7
    %v3695 = vsub.s32 %v3692, %v3694
    %v3696 = vrot.slane %v3682, %v3695
    %v3697 = vcombine.high %v3673, 0
    %v3698 = vcombine.high %v3680, 0
    %v3699 = vcombine.high %v3689, 0
    %v3700 = vcombine.high %v3696, 0
    %v3701 = vcombine.high %v3625, %v2547
    %v3703 = vunpack.c.l.s4 1983009808
    %v3704 = vunpack.c.0.s8 %v3703
    %v3705 = vlaneseq
    %v3706 = vshrl.u32 %v3705, 7
    %v3707 = vsub.s32 %v3704, %v3706
    %v3708 = vrot.slane %v3625, %v3707
    %v3710 = vunpack.c.l.s4 1983009808
    %v3711 = vunpack.c.0.s8 %v3710
    %v3712 = vlaneseq
    %v3713 = vshrl.u32 %v3712, 7
    %v3714 = vsub.s32 %v3711, %v3713
    %v3715 = vrot.slane %v3701, %v3714
    %v3716 = vcombine.high %v3633, %v2547
    %v3718 = vunpack.c.l.s4 1983009808
    %v3719 = vunpack.c.0.s8 %v3718
    %v3720 = vlaneseq
    %v3721 = vshrl.u32 %v3720, 7
    %v3722 = vsub.s32 %v3719, %v3721
    %v3723 = vrot.slane %v3633, %v3722
    %v3725 = vunpack.c.l.s4 1983009808
    %v3726 = vunpack.c.0.s8 %v3725
    %v3727 = vlaneseq
    %v3728 = vshrl.u32 %v3727, 7
    %v3729 = vsub.s32 %v3726, %v3728
    %v3730 = vrot.slane %v3716, %v3729
    %v3731 = vcombine.low %v3708, %v3723
    %v3732 = vcombine.high %v3708, %v3723
    %v3734 = vunpack.c.l.s4 1934713408
    %v3735 = vunpack.c.0.s8 %v3734
    %v3736 = vlaneseq
    %v3737 = vshrl.u32 %v3736, 7
    %v3738 = vsub.s32 %v3735, %v3737
    %v3739 = vrot.slane %v3731, %v3738
    %v3741 = vunpack.c.l.s4 1934713408
    %v3742 = vunpack.c.0.s8 %v3741
    %v3743 = vlaneseq
    %v3744 = vshrl.u32 %v3743, 7
    %v3745 = vsub.s32 %v3742, %v3744
    %v3746 = vrot.slane %v3732, %v3745
    %v3747 = vcombine.low %v3715, %v3730
    %v3748 = vcombine.high %v3715, %v3730
    %v3750 = vunpack.c.l.s4 1934713408
    %v3751 = vunpack.c.0.s8 %v3750
    %v3752 = vlaneseq
    %v3753 = vshrl.u32 %v3752, 7
    %v3754 = vsub.s32 %v3751, %v3753
    %v3755 = vrot.slane %v3747, %v3754
    %v3757 = vunpack.c.l.s4 1934713408
    %v3758 = vunpack.c.0.s8 %v3757
    %v3759 = vlaneseq
    %v3760 = vshrl.u32 %v3759, 7
    %v3761 = vsub.s32 %v3758, %v3760
    %v3762 = vrot.slane %v3748, %v3761
    %v3763 = vcombine.high %v3739, 0
    %v3764 = vcombine.high %v3746, 0
    %v3765 = vcombine.high %v3755, 0
    %v3766 = vcombine.high %v3762, 0
    %3767 = vxpose.xlu0.c.b16.start [1/8] %v3673, 128
    %3768 = vxpose.xlu0.c.b16.cont [2/8] 0, 128
    %3769 = vxpose.xlu0.c.b16.cont [3/8] 0, 128
    %3770 = vxpose.xlu0.c.b16.cont [4/8] 0, 128
    %3771 = vxpose.xlu0.c.b16.cont [5/8] 0, 128
    %3772 = vxpose.xlu0.c.b16.cont [6/8] 0, 128
    %3773 = vxpose.xlu0.c.b16.cont [7/8] 0, 128
    %3774 = vxpose.xlu0.c.b16.end [8/8] 0, 128
    %v3775 = vpop.trf.xlu0
    %v3776 = vpop.trf.xlu0
    %v3777 = vpop.trf.xlu0
    %v3778 = vpop.trf.xlu0
    %v3779 = vpop.trf.xlu0
    %v3780 = vpop.trf.xlu0
    %v3781 = vpop.trf.xlu0
    %v3782 = vpop.trf.xlu0
    %3783 = vxpose.xlu0.c.b16.start [1/8] %v3739, 128
    %3784 = vxpose.xlu0.c.b16.cont [2/8] 0, 128
    %3785 = vxpose.xlu0.c.b16.cont [3/8] 0, 128
    %3786 = vxpose.xlu0.c.b16.cont [4/8] 0, 128
    %3787 = vxpose.xlu0.c.b16.cont [5/8] 0, 128
    %3788 = vxpose.xlu0.c.b16.cont [6/8] 0, 128
    %3789 = vxpose.xlu0.c.b16.cont [7/8] 0, 128
    %3790 = vxpose.xlu0.c.b16.end [8/8] 0, 128
    %v3791 = vpop.trf.xlu0
    %v3792 = vpop.trf.xlu0
    %v3793 = vpop.trf.xlu0
    %v3794 = vpop.trf.xlu0
    %v3795 = vpop.trf.xlu0
    %v3796 = vpop.trf.xlu0
    %v3797 = vpop.trf.xlu0
    %v3798 = vpop.trf.xlu0
    %3799 = vxpose.xlu0.c.b16.start [1/8] %v3697, 128
    %3800 = vxpose.xlu0.c.b16.cont [2/8] 0, 128
    %3801 = vxpose.xlu0.c.b16.cont [3/8] 0, 128
    %3802 = vxpose.xlu0.c.b16.cont [4/8] 0, 128
    %3803 = vxpose.xlu0.c.b16.cont [5/8] 0, 128
    %3804 = vxpose.xlu0.c.b16.cont [6/8] 0, 128
    %3805 = vxpose.xlu0.c.b16.cont [7/8] 0, 128
    %3806 = vxpose.xlu0.c.b16.end [8/8] 0, 128
    %v3807 = vpop.trf.xlu0
    %v3808 = vpop.trf.xlu0
    %v3809 = vpop.trf.xlu0
    %v3810 = vpop.trf.xlu0
    %v3811 = vpop.trf.xlu0
    %v3812 = vpop.trf.xlu0
    %v3813 = vpop.trf.xlu0
    %v3814 = vpop.trf.xlu0
    %3815 = vxpose.xlu0.c.b16.start [1/8] %v3763, 128
    %3816 = vxpose.xlu0.c.b16.cont [2/8] 0, 128
    %3817 = vxpose.xlu0.c.b16.cont [3/8] 0, 128
    %3818 = vxpose.xlu0.c.b16.cont [4/8] 0, 128
    %3819 = vxpose.xlu0.c.b16.cont [5/8] 0, 128
    %3820 = vxpose.xlu0.c.b16.cont [6/8] 0, 128
    %3821 = vxpose.xlu0.c.b16.cont [7/8] 0, 128
    %3822 = vxpose.xlu0.c.b16.end [8/8] 0, 128
    %v3823 = vpop.trf.xlu0
    %v3824 = vpop.trf.xlu0
    %v3825 = vpop.trf.xlu0
    %v3826 = vpop.trf.xlu0
    %v3827 = vpop.trf.xlu0
    %v3828 = vpop.trf.xlu0
    %v3829 = vpop.trf.xlu0
    %v3830 = vpop.trf.xlu0
    %3831 = vxpose.xlu0.c.b16.start [1/8] %v3680, 128
    %3832 = vxpose.xlu0.c.b16.cont [2/8] 0, 128
    %3833 = vxpose.xlu0.c.b16.cont [3/8] 0, 128
    %3834 = vxpose.xlu0.c.b16.cont [4/8] 0, 128
    %3835 = vxpose.xlu0.c.b16.cont [5/8] 0, 128
    %3836 = vxpose.xlu0.c.b16.cont [6/8] 0, 128
    %3837 = vxpose.xlu0.c.b16.cont [7/8] 0, 128
    %3838 = vxpose.xlu0.c.b16.end [8/8] 0, 128
    %v3839 = vpop.trf.xlu0
    %v3840 = vpop.trf.xlu0
    %v3841 = vpop.trf.xlu0
    %v3842 = vpop.trf.xlu0
    %v3843 = vpop.trf.xlu0
    %v3844 = vpop.trf.xlu0
    %v3845 = vpop.trf.xlu0
    %v3846 = vpop.trf.xlu0
    %3847 = vxpose.xlu0.c.b16.start [1/8] %v3746, 128
    %3848 = vxpose.xlu0.c.b16.cont [2/8] 0, 128
    %3849 = vxpose.xlu0.c.b16.cont [3/8] 0, 128
    %3850 = vxpose.xlu0.c.b16.cont [4/8] 0, 128
    %3851 = vxpose.xlu0.c.b16.cont [5/8] 0, 128
    %3852 = vxpose.xlu0.c.b16.cont [6/8] 0, 128
    %3853 = vxpose.xlu0.c.b16.cont [7/8] 0, 128
    %3854 = vxpose.xlu0.c.b16.end [8/8] 0, 128
    %v3855 = vpop.trf.xlu0
    %v3856 = vpop.trf.xlu0
    %v3857 = vpop.trf.xlu0
    %v3858 = vpop.trf.xlu0
    %v3859 = vpop.trf.xlu0
    %v3860 = vpop.trf.xlu0
    %v3861 = vpop.trf.xlu0
    %v3862 = vpop.trf.xlu0
    %3863 = vxpose.xlu0.c.b16.start [1/8] %v3698, 128
    %3864 = vxpose.xlu0.c.b16.cont [2/8] 0, 128
    %3865 = vxpose.xlu0.c.b16.cont [3/8] 0, 128
    %3866 = vxpose.xlu0.c.b16.cont [4/8] 0, 128
    %3867 = vxpose.xlu0.c.b16.cont [5/8] 0, 128
    %3868 = vxpose.xlu0.c.b16.cont [6/8] 0, 128
    %3869 = vxpose.xlu0.c.b16.cont [7/8] 0, 128
    %3870 = vxpose.xlu0.c.b16.end [8/8] 0, 128
    %v3871 = vpop.trf.xlu0
    %v3872 = vpop.trf.xlu0
    %v3873 = vpop.trf.xlu0
    %v3874 = vpop.trf.xlu0
    %v3875 = vpop.trf.xlu0
    %v3876 = vpop.trf.xlu0
    %v3877 = vpop.trf.xlu0
    %v3878 = vpop.trf.xlu0
    %3879 = vxpose.xlu0.c.b16.start [1/8] %v3764, 128
    %3880 = vxpose.xlu0.c.b16.cont [2/8] 0, 128
    %3881 = vxpose.xlu0.c.b16.cont [3/8] 0, 128
    %3882 = vxpose.xlu0.c.b16.cont [4/8] 0, 128
    %3883 = vxpose.xlu0.c.b16.cont [5/8] 0, 128
    %3884 = vxpose.xlu0.c.b16.cont [6/8] 0, 128
    %3885 = vxpose.xlu0.c.b16.cont [7/8] 0, 128
    %3886 = vxpose.xlu0.c.b16.end [8/8] 0, 128
    %v3887 = vpop.trf.xlu0
    %v3888 = vpop.trf.xlu0
    %v3889 = vpop.trf.xlu0
    %v3890 = vpop.trf.xlu0
    %v3891 = vpop.trf.xlu0
    %v3892 = vpop.trf.xlu0
    %v3893 = vpop.trf.xlu0
    %v3894 = vpop.trf.xlu0
    %3895 = vxpose.xlu0.c.b16.start [1/8] %v3689, 128
    %3896 = vxpose.xlu0.c.b16.cont [2/8] 0, 128
    %3897 = vxpose.xlu0.c.b16.cont [3/8] 0, 128
    %3898 = vxpose.xlu0.c.b16.cont [4/8] 0, 128
    %3899 = vxpose.xlu0.c.b16.cont [5/8] 0, 128
    %3900 = vxpose.xlu0.c.b16.cont [6/8] 0, 128
    %3901 = vxpose.xlu0.c.b16.cont [7/8] 0, 128
    %3902 = vxpose.xlu0.c.b16.end [8/8] 0, 128
    %v3903 = vpop.trf.xlu0
    %v3904 = vpop.trf.xlu0
    %v3905 = vpop.trf.xlu0
    %v3906 = vpop.trf.xlu0
    %v3907 = vpop.trf.xlu0
    %v3908 = vpop.trf.xlu0
    %v3909 = vpop.trf.xlu0
    %v3910 = vpop.trf.xlu0
    %3911 = vxpose.xlu0.c.b16.start [1/8] %v3755, 128
    %3912 = vxpose.xlu0.c.b16.cont [2/8] 0, 128
    %3913 = vxpose.xlu0.c.b16.cont [3/8] 0, 128
    %3914 = vxpose.xlu0.c.b16.cont [4/8] 0, 128
    %3915 = vxpose.xlu0.c.b16.cont [5/8] 0, 128
    %3916 = vxpose.xlu0.c.b16.cont [6/8] 0, 128
    %3917 = vxpose.xlu0.c.b16.cont [7/8] 0, 128
    %3918 = vxpose.xlu0.c.b16.end [8/8] 0, 128
    %v3919 = vpop.trf.xlu0
    %v3920 = vpop.trf.xlu0
    %v3921 = vpop.trf.xlu0
    %v3922 = vpop.trf.xlu0
    %v3923 = vpop.trf.xlu0
    %v3924 = vpop.trf.xlu0
    %v3925 = vpop.trf.xlu0
    %v3926 = vpop.trf.xlu0
    %3927 = vxpose.xlu0.c.b16.start [1/8] %v3699, 128
    %3928 = vxpose.xlu0.c.b16.cont [2/8] 0, 128
    %3929 = vxpose.xlu0.c.b16.cont [3/8] 0, 128
    %3930 = vxpose.xlu0.c.b16.cont [4/8] 0, 128
    %3931 = vxpose.xlu0.c.b16.cont [5/8] 0, 128
    %3932 = vxpose.xlu0.c.b16.cont [6/8] 0, 128
    %3933 = vxpose.xlu0.c.b16.cont [7/8] 0, 128
    %3934 = vxpose.xlu0.c.b16.end [8/8] 0, 128
    %v3935 = vpop.trf.xlu0
    %v3936 = vpop.trf.xlu0
    %v3937 = vpop.trf.xlu0
    %v3938 = vpop.trf.xlu0
    %v3939 = vpop.trf.xlu0
    %v3940 = vpop.trf.xlu0
    %v3941 = vpop.trf.xlu0
    %v3942 = vpop.trf.xlu0
    %3943 = vxpose.xlu0.c.b16.start [1/8] %v3765, 128
    %3944 = vxpose.xlu0.c.b16.cont [2/8] 0, 128
    %3945 = vxpose.xlu0.c.b16.cont [3/8] 0, 128
    %3946 = vxpose.xlu0.c.b16.cont [4/8] 0, 128
    %3947 = vxpose.xlu0.c.b16.cont [5/8] 0, 128
    %3948 = vxpose.xlu0.c.b16.cont [6/8] 0, 128
    %3949 = vxpose.xlu0.c.b16.cont [7/8] 0, 128
    %3950 = vxpose.xlu0.c.b16.end [8/8] 0, 128
    %v3951 = vpop.trf.xlu0
    %v3952 = vpop.trf.xlu0
    %v3953 = vpop.trf.xlu0
    %v3954 = vpop.trf.xlu0
    %v3955 = vpop.trf.xlu0
    %v3956 = vpop.trf.xlu0
    %v3957 = vpop.trf.xlu0
    %v3958 = vpop.trf.xlu0
    %3959 = vxpose.xlu0.c.b16.start [1/8] %v3696, 128
    %3960 = vxpose.xlu0.c.b16.cont [2/8] 0, 128
    %3961 = vxpose.xlu0.c.b16.cont [3/8] 0, 128
    %3962 = vxpose.xlu0.c.b16.cont [4/8] 0, 128
    %3963 = vxpose.xlu0.c.b16.cont [5/8] 0, 128
    %3964 = vxpose.xlu0.c.b16.cont [6/8] 0, 128
    %3965 = vxpose.xlu0.c.b16.cont [7/8] 0, 128
    %3966 = vxpose.xlu0.c.b16.end [8/8] 0, 128
    %v3967 = vpop.trf.xlu0
    %v3968 = vpop.trf.xlu0
    %v3969 = vpop.trf.xlu0
    %v3970 = vpop.trf.xlu0
    %v3971 = vpop.trf.xlu0
    %v3972 = vpop.trf.xlu0
    %v3973 = vpop.trf.xlu0
    %v3974 = vpop.trf.xlu0
    %3975 = vxpose.xlu0.c.b16.start [1/8] %v3762, 128
    %3976 = vxpose.xlu0.c.b16.cont [2/8] 0, 128
    %3977 = vxpose.xlu0.c.b16.cont [3/8] 0, 128
    %3978 = vxpose.xlu0.c.b16.cont [4/8] 0, 128
    %3979 = vxpose.xlu0.c.b16.cont [5/8] 0, 128
    %3980 = vxpose.xlu0.c.b16.cont [6/8] 0, 128
    %3981 = vxpose.xlu0.c.b16.cont [7/8] 0, 128
    %3982 = vxpose.xlu0.c.b16.end [8/8] 0, 128
    %v3983 = vpop.trf.xlu0
    %v3984 = vpop.trf.xlu0
    %v3985 = vpop.trf.xlu0
    %v3986 = vpop.trf.xlu0
    %v3987 = vpop.trf.xlu0
    %v3988 = vpop.trf.xlu0
    %v3989 = vpop.trf.xlu0
    %v3990 = vpop.trf.xlu0
    %3991 = vxpose.xlu0.c.b16.start [1/8] %v3700, 128
    %3992 = vxpose.xlu0.c.b16.cont [2/8] 0, 128
    %3993 = vxpose.xlu0.c.b16.cont [3/8] 0, 128
    %3994 = vxpose.xlu0.c.b16.cont [4/8] 0, 128
    %3995 = vxpose.xlu0.c.b16.cont [5/8] 0, 128
    %3996 = vxpose.xlu0.c.b16.cont [6/8] 0, 128
    %3997 = vxpose.xlu0.c.b16.cont [7/8] 0, 128
    %3998 = vxpose.xlu0.c.b16.end [8/8] 0, 128
    %v3999 = vpop.trf.xlu0
    %v4000 = vpop.trf.xlu0
    %v4001 = vpop.trf.xlu0
    %v4002 = vpop.trf.xlu0
    %v4003 = vpop.trf.xlu0
    %v4004 = vpop.trf.xlu0
    %v4005 = vpop.trf.xlu0
    %v4006 = vpop.trf.xlu0
    %4007 = vxpose.xlu0.c.b16.start [1/8] %v3766, 128
    %4008 = vxpose.xlu0.c.b16.cont [2/8] 0, 128
    %4009 = vxpose.xlu0.c.b16.cont [3/8] 0, 128
    %4010 = vxpose.xlu0.c.b16.cont [4/8] 0, 128
    %4011 = vxpose.xlu0.c.b16.cont [5/8] 0, 128
    %4012 = vxpose.xlu0.c.b16.cont [6/8] 0, 128
    %4013 = vxpose.xlu0.c.b16.cont [7/8] 0, 128
    %4014 = vxpose.xlu0.c.b16.end [8/8] 0, 128
    %v4015 = vpop.trf.xlu0
    %v4016 = vpop.trf.xlu0
    %v4017 = vpop.trf.xlu0
    %v4018 = vpop.trf.xlu0
    %v4019 = vpop.trf.xlu0
    %v4020 = vpop.trf.xlu0
    %v4021 = vpop.trf.xlu0
    %v4022 = vpop.trf.xlu0
    %v4023 = vcombine.low %v3775, %v3839
    %v4025 = vunpack.c.l.s4 1983009808
    %v4026 = vunpack.c.0.s8 %v4025
    %v4027 = vlaneseq
    %v4028 = vshrl.u32 %v4027, 7
    %v4029 = vsub.s32 %v4026, %v4028
    %v4030 = vrot.slane %v4023, %v4029
    %v4031 = vcombine.low %v3807, %v3871
    %v4033 = vunpack.c.l.s4 1983009808
    %v4034 = vunpack.c.0.s8 %v4033
    %v4035 = vlaneseq
    %v4036 = vshrl.u32 %v4035, 7
    %v4037 = vsub.s32 %v4034, %v4036
    %v4038 = vrot.slane %v4031, %v4037
    %v4039 = vcombine.low %v3903, %v3967
    %v4041 = vunpack.c.l.s4 1983009808
    %v4042 = vunpack.c.0.s8 %v4041
    %v4043 = vlaneseq
    %v4044 = vshrl.u32 %v4043, 7
    %v4045 = vsub.s32 %v4042, %v4044
    %v4046 = vrot.slane %v4039, %v4045
    %v4047 = vcombine.low %v3935, %v3999
    %v4049 = vunpack.c.l.s4 1983009808
    %v4050 = vunpack.c.0.s8 %v4049
    %v4051 = vlaneseq
    %v4052 = vshrl.u32 %v4051, 7
    %v4053 = vsub.s32 %v4050, %v4052
    %v4054 = vrot.slane %v4047, %v4053
    %v4055 = vcombine.low %v4030, %v4038
    %v4056 = vcombine.high %v4030, %v4038
    %v4058 = vunpack.c.l.s4 1934713408
    %v4059 = vunpack.c.0.s8 %v4058
    %v4060 = vlaneseq
    %v4061 = vshrl.u32 %v4060, 7
    %v4062 = vsub.s32 %v4059, %v4061
    %v4063 = vrot.slane %v4055, %v4062
    %v4065 = vunpack.c.l.s4 1934713408
    %v4066 = vunpack.c.0.s8 %v4065
    %v4067 = vlaneseq
    %v4068 = vshrl.u32 %v4067, 7
    %v4069 = vsub.s32 %v4066, %v4068
    %v4070 = vrot.slane %v4056, %v4069
    %v4071 = vcombine.low %v4046, %v4054
    %v4072 = vcombine.high %v4046, %v4054
    %v4074 = vunpack.c.l.s4 1934713408
    %v4075 = vunpack.c.0.s8 %v4074
    %v4076 = vlaneseq
    %v4077 = vshrl.u32 %v4076, 7
    %v4078 = vsub.s32 %v4075, %v4077
    %v4079 = vrot.slane %v4071, %v4078
    %v4081 = vunpack.c.l.s4 1934713408
    %v4082 = vunpack.c.0.s8 %v4081
    %v4083 = vlaneseq
    %v4084 = vshrl.u32 %v4083, 7
    %v4085 = vsub.s32 %v4082, %v4084
    %v4086 = vrot.slane %v4072, %v4085
    %v4087 = vcombine.low %v4063, %v4079
    %v4088 = vcombine.high %v4063, %v4079
    %v4089 = vcombine.low %v4070, %v4086
    %v4090 = vcombine.high %v4070, %v4086
    %v4091 = vcombine.low %v3791, %v3855
    %v4093 = vunpack.c.l.s4 1983009808
    %v4094 = vunpack.c.0.s8 %v4093
    %v4095 = vlaneseq
    %v4096 = vshrl.u32 %v4095, 7
    %v4097 = vsub.s32 %v4094, %v4096
    %v4098 = vrot.slane %v4091, %v4097
    %v4099 = vcombine.low %v3823, %v3887
    %v4101 = vunpack.c.l.s4 1983009808
    %v4102 = vunpack.c.0.s8 %v4101
    %v4103 = vlaneseq
    %v4104 = vshrl.u32 %v4103, 7
    %v4105 = vsub.s32 %v4102, %v4104
    %v4106 = vrot.slane %v4099, %v4105
    %v4107 = vcombine.low %v3919, %v3983
    %v4109 = vunpack.c.l.s4 1983009808
    %v4110 = vunpack.c.0.s8 %v4109
    %v4111 = vlaneseq
    %v4112 = vshrl.u32 %v4111, 7
    %v4113 = vsub.s32 %v4110, %v4112
    %v4114 = vrot.slane %v4107, %v4113
    %v4115 = vcombine.low %v3951, %v4015
    %v4117 = vunpack.c.l.s4 1983009808
    %v4118 = vunpack.c.0.s8 %v4117
    %v4119 = vlaneseq
    %v4120 = vshrl.u32 %v4119, 7
    %v4121 = vsub.s32 %v4118, %v4120
    %v4122 = vrot.slane %v4115, %v4121
    %v4123 = vcombine.low %v4098, %v4106
    %v4124 = vcombine.high %v4098, %v4106
    %v4126 = vunpack.c.l.s4 1934713408
    %v4127 = vunpack.c.0.s8 %v4126
    %v4128 = vlaneseq
    %v4129 = vshrl.u32 %v4128, 7
    %v4130 = vsub.s32 %v4127, %v4129
    %v4131 = vrot.slane %v4123, %v4130
    %v4133 = vunpack.c.l.s4 1934713408
    %v4134 = vunpack.c.0.s8 %v4133
    %v4135 = vlaneseq
    %v4136 = vshrl.u32 %v4135, 7
    %v4137 = vsub.s32 %v4134, %v4136
    %v4138 = vrot.slane %v4124, %v4137
    %v4139 = vcombine.low %v4114, %v4122
    %v4140 = vcombine.high %v4114, %v4122
    %v4142 = vunpack.c.l.s4 1934713408
    %v4143 = vunpack.c.0.s8 %v4142
    %v4144 = vlaneseq
    %v4145 = vshrl.u32 %v4144, 7
    %v4146 = vsub.s32 %v4143, %v4145
    %v4147 = vrot.slane %v4139, %v4146
    %v4149 = vunpack.c.l.s4 1934713408
    %v4150 = vunpack.c.0.s8 %v4149
    %v4151 = vlaneseq
    %v4152 = vshrl.u32 %v4151, 7
    %v4153 = vsub.s32 %v4150, %v4152
    %v4154 = vrot.slane %v4140, %v4153
    %v4155 = vcombine.low %v4131, %v4147
    %v4156 = vcombine.high %v4131, %v4147
    %v4157 = vcombine.low %v4138, %v4154
    %v4158 = vcombine.high %v4138, %v4154
    %v4161 = vpack.i.b16 %v4155, %v4087
    %v4162 = vshrl.u32 %v4087, 16
    %v4163 = vshrl.u32 %v4155, 16
    %v4164 = vpack.i.b16 %v4163, %v4162
    %v4167 = vpack.i.b16 %v4156, %v4088
    %v4168 = vshrl.u32 %v4088, 16
    %v4169 = vshrl.u32 %v4156, 16
    %v4170 = vpack.i.b16 %v4169, %v4168
    %v4173 = vpack.i.b16 %v4157, %v4089
    %v4174 = vshrl.u32 %v4089, 16
    %v4175 = vshrl.u32 %v4157, 16
    %v4176 = vpack.i.b16 %v4175, %v4174
    %v4179 = vpack.i.b16 %v4158, %v4090
    %v4180 = vshrl.u32 %v4090, 16
    %v4181 = vshrl.u32 %v4158, 16
    %v4182 = vpack.i.b16 %v4181, %v4180
    %vm4183 = vcmask 31744
    %v4185 = vsel %vm4183, %v4161, 0
    %v4188 = vsel %vm4183, %v3547, 0
    %4190 = vmatprep.subr.bf16.mxu0 0
    %4191 = vmatpush1.bf16.xpose.msra.mxu0 %v4188
    %4192 = vmatprep.subr.bf16.mxu0 0
    %4193 = vmatpush1.bf16.xpose.msra.mxu0 0
    %4194 = vmatprep.subr.bf16.mxu0 0
    %4195 = vmatpush1.bf16.xpose.msra.mxu0 0
    %4196 = vmatprep.subr.bf16.mxu0 0
    %4197 = vmatpush1.bf16.xpose.msra.mxu0 0
    %4198 = vmatprep.subr.bf16.mxu0 0
    %4199 = vmatpush1.bf16.xpose.msra.mxu0 0
    %4200 = vmatprep.subr.bf16.mxu0 0
    %4201 = vmatpush1.bf16.xpose.msra.mxu0 0
    %4202 = vmatprep.subr.bf16.mxu0 0
    %4203 = vmatpush1.bf16.xpose.msra.mxu0 0
    %4204 = vmatprep.subr.bf16.mxu0 0
    %4205 = vmatpush1.bf16.xpose.msra.mxu0 0
    %4206 = vmatprep.subr.bf16.mxu0 0
    %4207 = vmatpush1.bf16.xpose.msra.mxu0 0
    %4208 = vmatprep.subr.bf16.mxu0 0
    %4209 = vmatpush1.bf16.xpose.msra.mxu0 0
    %4210 = vmatprep.subr.bf16.mxu0 0
    %4211 = vmatpush1.bf16.xpose.msra.mxu0 0
    %4212 = vmatprep.subr.bf16.mxu0 0
    %4213 = vmatpush1.bf16.xpose.msra.mxu0 0
    %4214 = vmatprep.subr.bf16.mxu0 0
    %4215 = vmatpush1.bf16.xpose.msra.mxu0 0
    %4216 = vmatprep.subr.bf16.mxu0 0
    %4217 = vmatpush1.bf16.xpose.msra.mxu0 0
    %4218 = vmatprep.subr.bf16.mxu0 0
    %4219 = vmatpush1.bf16.xpose.msra.mxu0 0
    %4220 = vmatprep.subr.bf16.mxu0 0
    %4221 = vmatpush1.bf16.xpose.msra.mxu0 0
    %4222 = vmatprep.mubr.bf16.mxu0 0
    %4223 = vmatmul.mubr.bf16.gmra.mrb[0].mxu0 %v4185
    %v4224 = vpop.f32.mrb[0].mxu0
    %v4225 = vadd.f32 0.0, %v4224
    %v4226 = vpop.f32.mrb[0].mxu0
    %v4227 = vpop.f32.mrb[0].mxu0
    %v4228 = vadd.f32 0.0, %v4227
    %v4229 = vpop.f32.mrb[0].mxu0
    %4230 = vdwg.mxu0
    %v4232 = vsel %vm4183, %v4164, 0
    %v4235 = vsel %vm4183, %v3548, 0
    %4237 = vmatprep.subr.bf16.mxu0 0
    %4238 = vmatpush1.bf16.xpose.msra.mxu0 %v4235
    %4239 = vmatprep.subr.bf16.mxu0 0
    %4240 = vmatpush1.bf16.xpose.msra.mxu0 0
    %4241 = vmatprep.subr.bf16.mxu0 0
    %4242 = vmatpush1.bf16.xpose.msra.mxu0 0
    %4243 = vmatprep.subr.bf16.mxu0 0
    %4244 = vmatpush1.bf16.xpose.msra.mxu0 0
    %4245 = vmatprep.subr.bf16.mxu0 0
    %4246 = vmatpush1.bf16.xpose.msra.mxu0 0
    %4247 = vmatprep.subr.bf16.mxu0 0
    %4248 = vmatpush1.bf16.xpose.msra.mxu0 0
    %4249 = vmatprep.subr.bf16.mxu0 0
    %4250 = vmatpush1.bf16.xpose.msra.mxu0 0
    %4251 = vmatprep.subr.bf16.mxu0 0
    %4252 = vmatpush1.bf16.xpose.msra.mxu0 0
    %4253 = vmatprep.subr.bf16.mxu0 0
    %4254 = vmatpush1.bf16.xpose.msra.mxu0 0
    %4255 = vmatprep.subr.bf16.mxu0 0
    %4256 = vmatpush1.bf16.xpose.msra.mxu0 0
    %4257 = vmatprep.subr.bf16.mxu0 0
    %4258 = vmatpush1.bf16.xpose.msra.mxu0 0
    %4259 = vmatprep.subr.bf16.mxu0 0
    %4260 = vmatpush1.bf16.xpose.msra.mxu0 0
    %4261 = vmatprep.subr.bf16.mxu0 0
    %4262 = vmatpush1.bf16.xpose.msra.mxu0 0
    %4263 = vmatprep.subr.bf16.mxu0 0
    %4264 = vmatpush1.bf16.xpose.msra.mxu0 0
    %4265 = vmatprep.subr.bf16.mxu0 0
    %4266 = vmatpush1.bf16.xpose.msra.mxu0 0
    %4267 = vmatprep.subr.bf16.mxu0 0
    %4268 = vmatpush1.bf16.xpose.msra.mxu0 0
    %4269 = vmatprep.mubr.bf16.mxu0 0
    %4270 = vmatmul.mubr.bf16.gmra.mrb[0].mxu0 %v4232
    %v4271 = vpop.f32.mrb[0].mxu0
    %v4272 = vadd.f32 0.0, %v4271
    %v4273 = vpop.f32.mrb[0].mxu0
    %v4274 = vpop.f32.mrb[0].mxu0
    %v4275 = vadd.f32 0.0, %v4274
    %v4276 = vpop.f32.mrb[0].mxu0
    %4277 = vdwg.mxu0
    %v4279 = vsel %vm4183, %v4167, 0
    %v4282 = vsel %vm4183, %v3549, 0
    %4284 = vmatprep.subr.bf16.mxu0 0
    %4285 = vmatpush1.bf16.xpose.msra.mxu0 %v4282
    %4286 = vmatprep.subr.bf16.mxu0 0
    %4287 = vmatpush1.bf16.xpose.msra.mxu0 0
    %4288 = vmatprep.subr.bf16.mxu0 0
    %4289 = vmatpush1.bf16.xpose.msra.mxu0 0
    %4290 = vmatprep.subr.bf16.mxu0 0
    %4291 = vmatpush1.bf16.xpose.msra.mxu0 0
    %4292 = vmatprep.subr.bf16.mxu0 0
    %4293 = vmatpush1.bf16.xpose.msra.mxu0 0
    %4294 = vmatprep.subr.bf16.mxu0 0
    %4295 = vmatpush1.bf16.xpose.msra.mxu0 0
    %4296 = vmatprep.subr.bf16.mxu0 0
    %4297 = vmatpush1.bf16.xpose.msra.mxu0 0
    %4298 = vmatprep.subr.bf16.mxu0 0
    %4299 = vmatpush1.bf16.xpose.msra.mxu0 0
    %4300 = vmatprep.subr.bf16.mxu0 0
    %4301 = vmatpush1.bf16.xpose.msra.mxu0 0
    %4302 = vmatprep.subr.bf16.mxu0 0
    %4303 = vmatpush1.bf16.xpose.msra.mxu0 0
    %4304 = vmatprep.subr.bf16.mxu0 0
    %4305 = vmatpush1.bf16.xpose.msra.mxu0 0
    %4306 = vmatprep.subr.bf16.mxu0 0
    %4307 = vmatpush1.bf16.xpose.msra.mxu0 0
    %4308 = vmatprep.subr.bf16.mxu0 0
    %4309 = vmatpush1.bf16.xpose.msra.mxu0 0
    %4310 = vmatprep.subr.bf16.mxu0 0
    %4311 = vmatpush1.bf16.xpose.msra.mxu0 0
    %4312 = vmatprep.subr.bf16.mxu0 0
    %4313 = vmatpush1.bf16.xpose.msra.mxu0 0
    %4314 = vmatprep.subr.bf16.mxu0 0
    %4315 = vmatpush1.bf16.xpose.msra.mxu0 0
    %4316 = vmatprep.mubr.bf16.mxu0 0
    %4317 = vmatmul.mubr.bf16.gmra.mrb[0].mxu0 %v4279
    %v4318 = vpop.f32.mrb[0].mxu0
    %v4319 = vadd.f32 0.0, %v4318
    %v4320 = vpop.f32.mrb[0].mxu0
    %v4321 = vpop.f32.mrb[0].mxu0
    %v4322 = vadd.f32 0.0, %v4321
    %v4323 = vpop.f32.mrb[0].mxu0
    %4324 = vdwg.mxu0
    %v4326 = vsel %vm4183, %v4170, 0
    %v4329 = vsel %vm4183, %v3550, 0
    %4331 = vmatprep.subr.bf16.mxu0 0
    %4332 = vmatpush1.bf16.xpose.msra.mxu0 %v4329
    %4333 = vmatprep.subr.bf16.mxu0 0
    %4334 = vmatpush1.bf16.xpose.msra.mxu0 0
    %4335 = vmatprep.subr.bf16.mxu0 0
    %4336 = vmatpush1.bf16.xpose.msra.mxu0 0
    %4337 = vmatprep.subr.bf16.mxu0 0
    %4338 = vmatpush1.bf16.xpose.msra.mxu0 0
    %4339 = vmatprep.subr.bf16.mxu0 0
    %4340 = vmatpush1.bf16.xpose.msra.mxu0 0
    %4341 = vmatprep.subr.bf16.mxu0 0
    %4342 = vmatpush1.bf16.xpose.msra.mxu0 0
    %4343 = vmatprep.subr.bf16.mxu0 0
    %4344 = vmatpush1.bf16.xpose.msra.mxu0 0
    %4345 = vmatprep.subr.bf16.mxu0 0
    %4346 = vmatpush1.bf16.xpose.msra.mxu0 0
    %4347 = vmatprep.subr.bf16.mxu0 0
    %4348 = vmatpush1.bf16.xpose.msra.mxu0 0
    %4349 = vmatprep.subr.bf16.mxu0 0
    %4350 = vmatpush1.bf16.xpose.msra.mxu0 0
    %4351 = vmatprep.subr.bf16.mxu0 0
    %4352 = vmatpush1.bf16.xpose.msra.mxu0 0
    %4353 = vmatprep.subr.bf16.mxu0 0
    %4354 = vmatpush1.bf16.xpose.msra.mxu0 0
    %4355 = vmatprep.subr.bf16.mxu0 0
    %4356 = vmatpush1.bf16.xpose.msra.mxu0 0
    %4357 = vmatprep.subr.bf16.mxu0 0
    %4358 = vmatpush1.bf16.xpose.msra.mxu0 0
    %4359 = vmatprep.subr.bf16.mxu0 0
    %4360 = vmatpush1.bf16.xpose.msra.mxu0 0
    %4361 = vmatprep.subr.bf16.mxu0 0
    %4362 = vmatpush1.bf16.xpose.msra.mxu0 0
    %4363 = vmatprep.mubr.bf16.mxu0 0
    %4364 = vmatmul.mubr.bf16.gmra.mrb[0].mxu0 %v4326
    %v4365 = vpop.f32.mrb[0].mxu0
    %v4366 = vadd.f32 0.0, %v4365
    %v4367 = vpop.f32.mrb[0].mxu0
    %v4368 = vpop.f32.mrb[0].mxu0
    %v4369 = vadd.f32 0.0, %v4368
    %v4370 = vpop.f32.mrb[0].mxu0
    %4371 = vdwg.mxu0
    %v4373 = vsel %vm4183, %v4173, 0
    %v4376 = vsel %vm4183, %v3551, 0
    %4378 = vmatprep.subr.bf16.mxu0 0
    %4379 = vmatpush1.bf16.xpose.msra.mxu0 %v4376
    %4380 = vmatprep.subr.bf16.mxu0 0
    %4381 = vmatpush1.bf16.xpose.msra.mxu0 0
    %4382 = vmatprep.subr.bf16.mxu0 0
    %4383 = vmatpush1.bf16.xpose.msra.mxu0 0
    %4384 = vmatprep.subr.bf16.mxu0 0
    %4385 = vmatpush1.bf16.xpose.msra.mxu0 0
    %4386 = vmatprep.subr.bf16.mxu0 0
    %4387 = vmatpush1.bf16.xpose.msra.mxu0 0
    %4388 = vmatprep.subr.bf16.mxu0 0
    %4389 = vmatpush1.bf16.xpose.msra.mxu0 0
    %4390 = vmatprep.subr.bf16.mxu0 0
    %4391 = vmatpush1.bf16.xpose.msra.mxu0 0
    %4392 = vmatprep.subr.bf16.mxu0 0
    %4393 = vmatpush1.bf16.xpose.msra.mxu0 0
    %4394 = vmatprep.subr.bf16.mxu0 0
    %4395 = vmatpush1.bf16.xpose.msra.mxu0 0
    %4396 = vmatprep.subr.bf16.mxu0 0
    %4397 = vmatpush1.bf16.xpose.msra.mxu0 0
    %4398 = vmatprep.subr.bf16.mxu0 0
    %4399 = vmatpush1.bf16.xpose.msra.mxu0 0
    %4400 = vmatprep.subr.bf16.mxu0 0
    %4401 = vmatpush1.bf16.xpose.msra.mxu0 0
    %4402 = vmatprep.subr.bf16.mxu0 0
    %4403 = vmatpush1.bf16.xpose.msra.mxu0 0
    %4404 = vmatprep.subr.bf16.mxu0 0
    %4405 = vmatpush1.bf16.xpose.msra.mxu0 0
    %4406 = vmatprep.subr.bf16.mxu0 0
    %4407 = vmatpush1.bf16.xpose.msra.mxu0 0
    %4408 = vmatprep.subr.bf16.mxu0 0
    %4409 = vmatpush1.bf16.xpose.msra.mxu0 0
    %4410 = vmatprep.mubr.bf16.mxu0 0
    %4411 = vmatmul.mubr.bf16.gmra.mrb[0].mxu0 %v4373
    %v4412 = vpop.f32.mrb[0].mxu0
    %v4413 = vadd.f32 0.0, %v4412
    %v4414 = vpop.f32.mrb[0].mxu0
    %v4415 = vpop.f32.mrb[0].mxu0
    %v4416 = vadd.f32 0.0, %v4415
    %v4417 = vpop.f32.mrb[0].mxu0
    %4418 = vdwg.mxu0
    %v4420 = vsel %vm4183, %v4176, 0
    %v4423 = vsel %vm4183, %v3552, 0
    %4425 = vmatprep.subr.bf16.mxu0 0
    %4426 = vmatpush1.bf16.xpose.msra.mxu0 %v4423
    %4427 = vmatprep.subr.bf16.mxu0 0
    %4428 = vmatpush1.bf16.xpose.msra.mxu0 0
    %4429 = vmatprep.subr.bf16.mxu0 0
    %4430 = vmatpush1.bf16.xpose.msra.mxu0 0
    %4431 = vmatprep.subr.bf16.mxu0 0
    %4432 = vmatpush1.bf16.xpose.msra.mxu0 0
    %4433 = vmatprep.subr.bf16.mxu0 0
    %4434 = vmatpush1.bf16.xpose.msra.mxu0 0
    %4435 = vmatprep.subr.bf16.mxu0 0
    %4436 = vmatpush1.bf16.xpose.msra.mxu0 0
    %4437 = vmatprep.subr.bf16.mxu0 0
    %4438 = vmatpush1.bf16.xpose.msra.mxu0 0
    %4439 = vmatprep.subr.bf16.mxu0 0
    %4440 = vmatpush1.bf16.xpose.msra.mxu0 0
    %4441 = vmatprep.subr.bf16.mxu0 0
    %4442 = vmatpush1.bf16.xpose.msra.mxu0 0
    %4443 = vmatprep.subr.bf16.mxu0 0
    %4444 = vmatpush1.bf16.xpose.msra.mxu0 0
    %4445 = vmatprep.subr.bf16.mxu0 0
    %4446 = vmatpush1.bf16.xpose.msra.mxu0 0
    %4447 = vmatprep.subr.bf16.mxu0 0
    %4448 = vmatpush1.bf16.xpose.msra.mxu0 0
    %4449 = vmatprep.subr.bf16.mxu0 0
    %4450 = vmatpush1.bf16.xpose.msra.mxu0 0
    %4451 = vmatprep.subr.bf16.mxu0 0
    %4452 = vmatpush1.bf16.xpose.msra.mxu0 0
    %4453 = vmatprep.subr.bf16.mxu0 0
    %4454 = vmatpush1.bf16.xpose.msra.mxu0 0
    %4455 = vmatprep.subr.bf16.mxu0 0
    %4456 = vmatpush1.bf16.xpose.msra.mxu0 0
    %4457 = vmatprep.mubr.bf16.mxu0 0
    %4458 = vmatmul.mubr.bf16.gmra.mrb[0].mxu0 %v4420
    %v4459 = vpop.f32.mrb[0].mxu0
    %v4460 = vadd.f32 0.0, %v4459
    %v4461 = vpop.f32.mrb[0].mxu0
    %v4462 = vpop.f32.mrb[0].mxu0
    %v4463 = vadd.f32 0.0, %v4462
    %v4464 = vpop.f32.mrb[0].mxu0
    %4465 = vdwg.mxu0
    %v4467 = vsel %vm4183, %v4179, 0
    %v4470 = vsel %vm4183, %v3553, 0
    %4472 = vmatprep.subr.bf16.mxu0 0
    %4473 = vmatpush1.bf16.xpose.msra.mxu0 %v4470
    %4474 = vmatprep.subr.bf16.mxu0 0
    %4475 = vmatpush1.bf16.xpose.msra.mxu0 0
    %4476 = vmatprep.subr.bf16.mxu0 0
    %4477 = vmatpush1.bf16.xpose.msra.mxu0 0
    %4478 = vmatprep.subr.bf16.mxu0 0
    %4479 = vmatpush1.bf16.xpose.msra.mxu0 0
    %4480 = vmatprep.subr.bf16.mxu0 0
    %4481 = vmatpush1.bf16.xpose.msra.mxu0 0
    %4482 = vmatprep.subr.bf16.mxu0 0
    %4483 = vmatpush1.bf16.xpose.msra.mxu0 0
    %4484 = vmatprep.subr.bf16.mxu0 0
    %4485 = vmatpush1.bf16.xpose.msra.mxu0 0
    %4486 = vmatprep.subr.bf16.mxu0 0
    %4487 = vmatpush1.bf16.xpose.msra.mxu0 0
    %4488 = vmatprep.subr.bf16.mxu0 0
    %4489 = vmatpush1.bf16.xpose.msra.mxu0 0
    %4490 = vmatprep.subr.bf16.mxu0 0
    %4491 = vmatpush1.bf16.xpose.msra.mxu0 0
    %4492 = vmatprep.subr.bf16.mxu0 0
    %4493 = vmatpush1.bf16.xpose.msra.mxu0 0
    %4494 = vmatprep.subr.bf16.mxu0 0
    %4495 = vmatpush1.bf16.xpose.msra.mxu0 0
    %4496 = vmatprep.subr.bf16.mxu0 0
    %4497 = vmatpush1.bf16.xpose.msra.mxu0 0
    %4498 = vmatprep.subr.bf16.mxu0 0
    %4499 = vmatpush1.bf16.xpose.msra.mxu0 0
    %4500 = vmatprep.subr.bf16.mxu0 0
    %4501 = vmatpush1.bf16.xpose.msra.mxu0 0
    %4502 = vmatprep.subr.bf16.mxu0 0
    %4503 = vmatpush1.bf16.xpose.msra.mxu0 0
    %4504 = vmatprep.mubr.bf16.mxu0 0
    %4505 = vmatmul.mubr.bf16.gmra.mrb[0].mxu0 %v4467
    %v4506 = vpop.f32.mrb[0].mxu0
    %v4507 = vadd.f32 0.0, %v4506
    %v4508 = vpop.f32.mrb[0].mxu0
    %v4509 = vpop.f32.mrb[0].mxu0
    %v4510 = vadd.f32 0.0, %v4509
    %v4511 = vpop.f32.mrb[0].mxu0
    %4512 = vdwg.mxu0
    %v4514 = vsel %vm4183, %v4182, 0
    %v4517 = vsel %vm4183, %v3554, 0
    %4519 = vmatprep.subr.bf16.mxu0 0
    %4520 = vmatpush1.bf16.xpose.msra.mxu0 %v4517
    %4521 = vmatprep.subr.bf16.mxu0 0
    %4522 = vmatpush1.bf16.xpose.msra.mxu0 0
    %4523 = vmatprep.subr.bf16.mxu0 0
    %4524 = vmatpush1.bf16.xpose.msra.mxu0 0
    %4525 = vmatprep.subr.bf16.mxu0 0
    %4526 = vmatpush1.bf16.xpose.msra.mxu0 0
    %4527 = vmatprep.subr.bf16.mxu0 0
    %4528 = vmatpush1.bf16.xpose.msra.mxu0 0
    %4529 = vmatprep.subr.bf16.mxu0 0
    %4530 = vmatpush1.bf16.xpose.msra.mxu0 0
    %4531 = vmatprep.subr.bf16.mxu0 0
    %4532 = vmatpush1.bf16.xpose.msra.mxu0 0
    %4533 = vmatprep.subr.bf16.mxu0 0
    %4534 = vmatpush1.bf16.xpose.msra.mxu0 0
    %4535 = vmatprep.subr.bf16.mxu0 0
    %4536 = vmatpush1.bf16.xpose.msra.mxu0 0
    %4537 = vmatprep.subr.bf16.mxu0 0
    %4538 = vmatpush1.bf16.xpose.msra.mxu0 0
    %4539 = vmatprep.subr.bf16.mxu0 0
    %4540 = vmatpush1.bf16.xpose.msra.mxu0 0
    %4541 = vmatprep.subr.bf16.mxu0 0
    %4542 = vmatpush1.bf16.xpose.msra.mxu0 0
    %4543 = vmatprep.subr.bf16.mxu0 0
    %4544 = vmatpush1.bf16.xpose.msra.mxu0 0
    %4545 = vmatprep.subr.bf16.mxu0 0
    %4546 = vmatpush1.bf16.xpose.msra.mxu0 0
    %4547 = vmatprep.subr.bf16.mxu0 0
    %4548 = vmatpush1.bf16.xpose.msra.mxu0 0
    %4549 = vmatprep.subr.bf16.mxu0 0
    %4550 = vmatpush1.bf16.xpose.msra.mxu0 0
    %4551 = vmatprep.mubr.bf16.mxu0 0
    %4552 = vmatmul.mubr.bf16.gmra.mrb[0].mxu0 %v4514
    %v4553 = vpop.f32.mrb[0].mxu0
    %v4554 = vadd.f32 0.0, %v4553
    %v4555 = vpop.f32.mrb[0].mxu0
    %v4556 = vpop.f32.mrb[0].mxu0
    %v4557 = vadd.f32 0.0, %v4556
    %v4558 = vpop.f32.mrb[0].mxu0
    %4559 = vdwg.mxu0
    %4560 = vxpose.xlu0.b32.start [1/16] %v4225, 128
    %4561 = vxpose.xlu0.b32.cont [2/16] %v4228, 128
    %4562 = vxpose.xlu0.b32.cont [3/16] 0.0, 128
    %4563 = vxpose.xlu0.b32.cont [4/16] 0.0, 128
    %4564 = vxpose.xlu0.b32.cont [5/16] 0.0, 128
    %4565 = vxpose.xlu0.b32.cont [6/16] 0.0, 128
    %4566 = vxpose.xlu0.b32.cont [7/16] 0.0, 128
    %4567 = vxpose.xlu0.b32.cont [8/16] 0.0, 128
    %4568 = vxpose.xlu0.b32.cont [9/16] 0.0, 128
    %4569 = vxpose.xlu0.b32.cont [10/16] 0.0, 128
    %4570 = vxpose.xlu0.b32.cont [11/16] 0.0, 128
    %4571 = vxpose.xlu0.b32.cont [12/16] 0.0, 128
    %4572 = vxpose.xlu0.b32.cont [13/16] 0.0, 128
    %4573 = vxpose.xlu0.b32.cont [14/16] 0.0, 128
    %4574 = vxpose.xlu0.b32.cont [15/16] 0.0, 128
    %4575 = vxpose.xlu0.b32.end [16/16] 0.0, 128
    %v4576 = vpop.trf.xlu0
    %v4577 = vpop.trf.xlu0
    %v4578 = vpop.trf.xlu0
    %v4579 = vpop.trf.xlu0
    %v4580 = vpop.trf.xlu0
    %v4581 = vpop.trf.xlu0
    %v4582 = vpop.trf.xlu0
    %v4583 = vpop.trf.xlu0
    %v4584 = vpop.trf.xlu0
    %v4585 = vpop.trf.xlu0
    %v4586 = vpop.trf.xlu0
    %v4587 = vpop.trf.xlu0
    %v4588 = vpop.trf.xlu0
    %v4589 = vpop.trf.xlu0
    %v4590 = vpop.trf.xlu0
    %v4591 = vpop.trf.xlu0
    %4592 = vxpose.xlu0.b32.start [1/16] %v4272, 128
    %4593 = vxpose.xlu0.b32.cont [2/16] %v4275, 128
    %4594 = vxpose.xlu0.b32.cont [3/16] 0.0, 128
    %4595 = vxpose.xlu0.b32.cont [4/16] 0.0, 128
    %4596 = vxpose.xlu0.b32.cont [5/16] 0.0, 128
    %4597 = vxpose.xlu0.b32.cont [6/16] 0.0, 128
    %4598 = vxpose.xlu0.b32.cont [7/16] 0.0, 128
    %4599 = vxpose.xlu0.b32.cont [8/16] 0.0, 128
    %4600 = vxpose.xlu0.b32.cont [9/16] 0.0, 128
    %4601 = vxpose.xlu0.b32.cont [10/16] 0.0, 128
    %4602 = vxpose.xlu0.b32.cont [11/16] 0.0, 128
    %4603 = vxpose.xlu0.b32.cont [12/16] 0.0, 128
    %4604 = vxpose.xlu0.b32.cont [13/16] 0.0, 128
    %4605 = vxpose.xlu0.b32.cont [14/16] 0.0, 128
    %4606 = vxpose.xlu0.b32.cont [15/16] 0.0, 128
    %4607 = vxpose.xlu0.b32.end [16/16] 0.0, 128
    %v4608 = vpop.trf.xlu0
    %v4609 = vpop.trf.xlu0
    %v4610 = vpop.trf.xlu0
    %v4611 = vpop.trf.xlu0
    %v4612 = vpop.trf.xlu0
    %v4613 = vpop.trf.xlu0
    %v4614 = vpop.trf.xlu0
    %v4615 = vpop.trf.xlu0
    %v4616 = vpop.trf.xlu0
    %v4617 = vpop.trf.xlu0
    %v4618 = vpop.trf.xlu0
    %v4619 = vpop.trf.xlu0
    %v4620 = vpop.trf.xlu0
    %v4621 = vpop.trf.xlu0
    %v4622 = vpop.trf.xlu0
    %v4623 = vpop.trf.xlu0
    %4624 = vxpose.xlu0.b32.start [1/16] %v4319, 128
    %4625 = vxpose.xlu0.b32.cont [2/16] %v4322, 128
    %4626 = vxpose.xlu0.b32.cont [3/16] 0.0, 128
    %4627 = vxpose.xlu0.b32.cont [4/16] 0.0, 128
    %4628 = vxpose.xlu0.b32.cont [5/16] 0.0, 128
    %4629 = vxpose.xlu0.b32.cont [6/16] 0.0, 128
    %4630 = vxpose.xlu0.b32.cont [7/16] 0.0, 128
    %4631 = vxpose.xlu0.b32.cont [8/16] 0.0, 128
    %4632 = vxpose.xlu0.b32.cont [9/16] 0.0, 128
    %4633 = vxpose.xlu0.b32.cont [10/16] 0.0, 128
    %4634 = vxpose.xlu0.b32.cont [11/16] 0.0, 128
    %4635 = vxpose.xlu0.b32.cont [12/16] 0.0, 128
    %4636 = vxpose.xlu0.b32.cont [13/16] 0.0, 128
    %4637 = vxpose.xlu0.b32.cont [14/16] 0.0, 128
    %4638 = vxpose.xlu0.b32.cont [15/16] 0.0, 128
    %4639 = vxpose.xlu0.b32.end [16/16] 0.0, 128
    %v4640 = vpop.trf.xlu0
    %v4641 = vpop.trf.xlu0
    %v4642 = vpop.trf.xlu0
    %v4643 = vpop.trf.xlu0
    %v4644 = vpop.trf.xlu0
    %v4645 = vpop.trf.xlu0
    %v4646 = vpop.trf.xlu0
    %v4647 = vpop.trf.xlu0
    %v4648 = vpop.trf.xlu0
    %v4649 = vpop.trf.xlu0
    %v4650 = vpop.trf.xlu0
    %v4651 = vpop.trf.xlu0
    %v4652 = vpop.trf.xlu0
    %v4653 = vpop.trf.xlu0
    %v4654 = vpop.trf.xlu0
    %v4655 = vpop.trf.xlu0
    %4656 = vxpose.xlu0.b32.start [1/16] %v4366, 128
    %4657 = vxpose.xlu0.b32.cont [2/16] %v4369, 128
    %4658 = vxpose.xlu0.b32.cont [3/16] 0.0, 128
    %4659 = vxpose.xlu0.b32.cont [4/16] 0.0, 128
    %4660 = vxpose.xlu0.b32.cont [5/16] 0.0, 128
    %4661 = vxpose.xlu0.b32.cont [6/16] 0.0, 128
    %4662 = vxpose.xlu0.b32.cont [7/16] 0.0, 128
    %4663 = vxpose.xlu0.b32.cont [8/16] 0.0, 128
    %4664 = vxpose.xlu0.b32.cont [9/16] 0.0, 128
    %4665 = vxpose.xlu0.b32.cont [10/16] 0.0, 128
    %4666 = vxpose.xlu0.b32.cont [11/16] 0.0, 128
    %4667 = vxpose.xlu0.b32.cont [12/16] 0.0, 128
    %4668 = vxpose.xlu0.b32.cont [13/16] 0.0, 128
    %4669 = vxpose.xlu0.b32.cont [14/16] 0.0, 128
    %4670 = vxpose.xlu0.b32.cont [15/16] 0.0, 128
    %4671 = vxpose.xlu0.b32.end [16/16] 0.0, 128
    %v4672 = vpop.trf.xlu0
    %v4673 = vpop.trf.xlu0
    %v4674 = vpop.trf.xlu0
    %v4675 = vpop.trf.xlu0
    %v4676 = vpop.trf.xlu0
    %v4677 = vpop.trf.xlu0
    %v4678 = vpop.trf.xlu0
    %v4679 = vpop.trf.xlu0
    %v4680 = vpop.trf.xlu0
    %v4681 = vpop.trf.xlu0
    %v4682 = vpop.trf.xlu0
    %v4683 = vpop.trf.xlu0
    %v4684 = vpop.trf.xlu0
    %v4685 = vpop.trf.xlu0
    %v4686 = vpop.trf.xlu0
    %v4687 = vpop.trf.xlu0
    %4688 = vxpose.xlu0.b32.start [1/16] %v4413, 128
    %4689 = vxpose.xlu0.b32.cont [2/16] %v4416, 128
    %4690 = vxpose.xlu0.b32.cont [3/16] 0.0, 128
    %4691 = vxpose.xlu0.b32.cont [4/16] 0.0, 128
    %4692 = vxpose.xlu0.b32.cont [5/16] 0.0, 128
    %4693 = vxpose.xlu0.b32.cont [6/16] 0.0, 128
    %4694 = vxpose.xlu0.b32.cont [7/16] 0.0, 128
    %4695 = vxpose.xlu0.b32.cont [8/16] 0.0, 128
    %4696 = vxpose.xlu0.b32.cont [9/16] 0.0, 128
    %4697 = vxpose.xlu0.b32.cont [10/16] 0.0, 128
    %4698 = vxpose.xlu0.b32.cont [11/16] 0.0, 128
    %4699 = vxpose.xlu0.b32.cont [12/16] 0.0, 128
    %4700 = vxpose.xlu0.b32.cont [13/16] 0.0, 128
    %4701 = vxpose.xlu0.b32.cont [14/16] 0.0, 128
    %4702 = vxpose.xlu0.b32.cont [15/16] 0.0, 128
    %4703 = vxpose.xlu0.b32.end [16/16] 0.0, 128
    %v4704 = vpop.trf.xlu0
    %v4705 = vpop.trf.xlu0
    %v4706 = vpop.trf.xlu0
    %v4707 = vpop.trf.xlu0
    %v4708 = vpop.trf.xlu0
    %v4709 = vpop.trf.xlu0
    %v4710 = vpop.trf.xlu0
    %v4711 = vpop.trf.xlu0
    %v4712 = vpop.trf.xlu0
    %v4713 = vpop.trf.xlu0
    %v4714 = vpop.trf.xlu0
    %v4715 = vpop.trf.xlu0
    %v4716 = vpop.trf.xlu0
    %v4717 = vpop.trf.xlu0
    %v4718 = vpop.trf.xlu0
    %v4719 = vpop.trf.xlu0
    %4720 = vxpose.xlu0.b32.start [1/16] %v4460, 128
    %4721 = vxpose.xlu0.b32.cont [2/16] %v4463, 128
    %4722 = vxpose.xlu0.b32.cont [3/16] 0.0, 128
    %4723 = vxpose.xlu0.b32.cont [4/16] 0.0, 128
    %4724 = vxpose.xlu0.b32.cont [5/16] 0.0, 128
    %4725 = vxpose.xlu0.b32.cont [6/16] 0.0, 128
    %4726 = vxpose.xlu0.b32.cont [7/16] 0.0, 128
    %4727 = vxpose.xlu0.b32.cont [8/16] 0.0, 128
    %4728 = vxpose.xlu0.b32.cont [9/16] 0.0, 128
    %4729 = vxpose.xlu0.b32.cont [10/16] 0.0, 128
    %4730 = vxpose.xlu0.b32.cont [11/16] 0.0, 128
    %4731 = vxpose.xlu0.b32.cont [12/16] 0.0, 128
    %4732 = vxpose.xlu0.b32.cont [13/16] 0.0, 128
    %4733 = vxpose.xlu0.b32.cont [14/16] 0.0, 128
    %4734 = vxpose.xlu0.b32.cont [15/16] 0.0, 128
    %4735 = vxpose.xlu0.b32.end [16/16] 0.0, 128
    %v4736 = vpop.trf.xlu0
    %v4737 = vpop.trf.xlu0
    %v4738 = vpop.trf.xlu0
    %v4739 = vpop.trf.xlu0
    %v4740 = vpop.trf.xlu0
    %v4741 = vpop.trf.xlu0
    %v4742 = vpop.trf.xlu0
    %v4743 = vpop.trf.xlu0
    %v4744 = vpop.trf.xlu0
    %v4745 = vpop.trf.xlu0
    %v4746 = vpop.trf.xlu0
    %v4747 = vpop.trf.xlu0
    %v4748 = vpop.trf.xlu0
    %v4749 = vpop.trf.xlu0
    %v4750 = vpop.trf.xlu0
    %v4751 = vpop.trf.xlu0
    %4752 = vxpose.xlu0.b32.start [1/16] %v4507, 128
    %4753 = vxpose.xlu0.b32.cont [2/16] %v4510, 128
    %4754 = vxpose.xlu0.b32.cont [3/16] 0.0, 128
    %4755 = vxpose.xlu0.b32.cont [4/16] 0.0, 128
    %4756 = vxpose.xlu0.b32.cont [5/16] 0.0, 128
    %4757 = vxpose.xlu0.b32.cont [6/16] 0.0, 128
    %4758 = vxpose.xlu0.b32.cont [7/16] 0.0, 128
    %4759 = vxpose.xlu0.b32.cont [8/16] 0.0, 128
    %4760 = vxpose.xlu0.b32.cont [9/16] 0.0, 128
    %4761 = vxpose.xlu0.b32.cont [10/16] 0.0, 128
    %4762 = vxpose.xlu0.b32.cont [11/16] 0.0, 128
    %4763 = vxpose.xlu0.b32.cont [12/16] 0.0, 128
    %4764 = vxpose.xlu0.b32.cont [13/16] 0.0, 128
    %4765 = vxpose.xlu0.b32.cont [14/16] 0.0, 128
    %4766 = vxpose.xlu0.b32.cont [15/16] 0.0, 128
    %4767 = vxpose.xlu0.b32.end [16/16] 0.0, 128
    %v4768 = vpop.trf.xlu0
    %v4769 = vpop.trf.xlu0
    %v4770 = vpop.trf.xlu0
    %v4771 = vpop.trf.xlu0
    %v4772 = vpop.trf.xlu0
    %v4773 = vpop.trf.xlu0
    %v4774 = vpop.trf.xlu0
    %v4775 = vpop.trf.xlu0
    %v4776 = vpop.trf.xlu0
    %v4777 = vpop.trf.xlu0
    %v4778 = vpop.trf.xlu0
    %v4779 = vpop.trf.xlu0
    %v4780 = vpop.trf.xlu0
    %v4781 = vpop.trf.xlu0
    %v4782 = vpop.trf.xlu0
    %v4783 = vpop.trf.xlu0
    %4784 = vxpose.xlu0.b32.start [1/16] %v4554, 128
    %4785 = vxpose.xlu0.b32.cont [2/16] %v4557, 128
    %4786 = vxpose.xlu0.b32.cont [3/16] 0.0, 128
    %4787 = vxpose.xlu0.b32.cont [4/16] 0.0, 128
    %4788 = vxpose.xlu0.b32.cont [5/16] 0.0, 128
    %4789 = vxpose.xlu0.b32.cont [6/16] 0.0, 128
    %4790 = vxpose.xlu0.b32.cont [7/16] 0.0, 128
    %4791 = vxpose.xlu0.b32.cont [8/16] 0.0, 128
    %4792 = vxpose.xlu0.b32.cont [9/16] 0.0, 128
    %4793 = vxpose.xlu0.b32.cont [10/16] 0.0, 128
    %4794 = vxpose.xlu0.b32.cont [11/16] 0.0, 128
    %4795 = vxpose.xlu0.b32.cont [12/16] 0.0, 128
    %4796 = vxpose.xlu0.b32.cont [13/16] 0.0, 128
    %4797 = vxpose.xlu0.b32.cont [14/16] 0.0, 128
    %4798 = vxpose.xlu0.b32.cont [15/16] 0.0, 128
    %4799 = vxpose.xlu0.b32.end [16/16] 0.0, 128
    %v4800 = vpop.trf.xlu0
    %v4801 = vpop.trf.xlu0
    %v4802 = vpop.trf.xlu0
    %v4803 = vpop.trf.xlu0
    %v4804 = vpop.trf.xlu0
    %v4805 = vpop.trf.xlu0
    %v4806 = vpop.trf.xlu0
    %v4807 = vpop.trf.xlu0
    %v4808 = vpop.trf.xlu0
    %v4809 = vpop.trf.xlu0
    %v4810 = vpop.trf.xlu0
    %v4811 = vpop.trf.xlu0
    %v4812 = vpop.trf.xlu0
    %v4813 = vpop.trf.xlu0
    %v4814 = vpop.trf.xlu0
    %v4815 = vpop.trf.xlu0
    %v4816 = vcombine.low %v4576, %v4640
    %v4818 = vunpack.c.l.s4 1983009808
    %v4819 = vunpack.c.0.s8 %v4818
    %v4820 = vlaneseq
    %v4821 = vshrl.u32 %v4820, 7
    %v4822 = vsub.s32 %v4819, %v4821
    %v4823 = vrot.slane %v4816, %v4822
    %v4824 = vcombine.low %v4608, %v4672
    %v4826 = vunpack.c.l.s4 1983009808
    %v4827 = vunpack.c.0.s8 %v4826
    %v4828 = vlaneseq
    %v4829 = vshrl.u32 %v4828, 7
    %v4830 = vsub.s32 %v4827, %v4829
    %v4831 = vrot.slane %v4824, %v4830
    %v4832 = vcombine.low %v4704, %v4768
    %v4834 = vunpack.c.l.s4 1983009808
    %v4835 = vunpack.c.0.s8 %v4834
    %v4836 = vlaneseq
    %v4837 = vshrl.u32 %v4836, 7
    %v4838 = vsub.s32 %v4835, %v4837
    %v4839 = vrot.slane %v4832, %v4838
    %v4840 = vcombine.low %v4736, %v4800
    %v4842 = vunpack.c.l.s4 1983009808
    %v4843 = vunpack.c.0.s8 %v4842
    %v4844 = vlaneseq
    %v4845 = vshrl.u32 %v4844, 7
    %v4846 = vsub.s32 %v4843, %v4845
    %v4847 = vrot.slane %v4840, %v4846
    %v4848 = vcombine.low %v4823, %v4831
    %v4849 = vcombine.high %v4823, %v4831
    %v4851 = vunpack.c.l.s4 1934713408
    %v4852 = vunpack.c.0.s8 %v4851
    %v4853 = vlaneseq
    %v4854 = vshrl.u32 %v4853, 7
    %v4855 = vsub.s32 %v4852, %v4854
    %v4856 = vrot.slane %v4848, %v4855
    %v4858 = vunpack.c.l.s4 1934713408
    %v4859 = vunpack.c.0.s8 %v4858
    %v4860 = vlaneseq
    %v4861 = vshrl.u32 %v4860, 7
    %v4862 = vsub.s32 %v4859, %v4861
    %v4863 = vrot.slane %v4849, %v4862
    %v4864 = vcombine.low %v4839, %v4847
    %v4865 = vcombine.high %v4839, %v4847
    %v4867 = vunpack.c.l.s4 1934713408
    %v4868 = vunpack.c.0.s8 %v4867
    %v4869 = vlaneseq
    %v4870 = vshrl.u32 %v4869, 7
    %v4871 = vsub.s32 %v4868, %v4870
    %v4872 = vrot.slane %v4864, %v4871
    %v4874 = vunpack.c.l.s4 1934713408
    %v4875 = vunpack.c.0.s8 %v4874
    %v4876 = vlaneseq
    %v4877 = vshrl.u32 %v4876, 7
    %v4878 = vsub.s32 %v4875, %v4877
    %v4879 = vrot.slane %v4865, %v4878
    %v4880 = vcombine.low %v4856, %v4872
    %v4881 = vcombine.high %v4856, %v4872
    %v4882 = vcombine.low %v4863, %v4879
    %v4883 = vcombine.high %v4863, %v4879
    %v4884 = vcombine.low %v4880, %v4882
    %v4885 = vcombine.high %v4880, %v4882
    %v4887 = vunpack.c.l.s4 1983009808
    %v4888 = vunpack.c.0.s8 %v4887
    %v4889 = vlaneseq
    %v4890 = vshrl.u32 %v4889, 7
    %v4891 = vsub.s32 %v4888, %v4890
    %v4892 = vrot.slane %v4884, %v4891
    %v4894 = vunpack.c.l.s4 1983009808
    %v4895 = vunpack.c.0.s8 %v4894
    %v4896 = vlaneseq
    %v4897 = vshrl.u32 %v4896, 7
    %v4898 = vsub.s32 %v4895, %v4897
    %v4899 = vrot.slane %v4885, %v4898
    %v4900 = vcombine.low %v4881, %v4883
    %v4901 = vcombine.high %v4881, %v4883
    %v4903 = vunpack.c.l.s4 1983009808
    %v4904 = vunpack.c.0.s8 %v4903
    %v4905 = vlaneseq
    %v4906 = vshrl.u32 %v4905, 7
    %v4907 = vsub.s32 %v4904, %v4906
    %v4908 = vrot.slane %v4900, %v4907
    %v4910 = vunpack.c.l.s4 1983009808
    %v4911 = vunpack.c.0.s8 %v4910
    %v4912 = vlaneseq
    %v4913 = vshrl.u32 %v4912, 7
    %v4914 = vsub.s32 %v4911, %v4913
    %v4915 = vrot.slane %v4901, %v4914
    %v4916 = vcombine.low %v4892, %v4908
    %v4917 = vcombine.high %v4892, %v4908
    %v4919 = vunpack.c.l.s4 1934713408
    %v4920 = vunpack.c.0.s8 %v4919
    %v4921 = vlaneseq
    %v4922 = vshrl.u32 %v4921, 7
    %v4923 = vsub.s32 %v4920, %v4922
    %v4924 = vrot.slane %v4916, %v4923
    %v4926 = vunpack.c.l.s4 1934713408
    %v4927 = vunpack.c.0.s8 %v4926
    %v4928 = vlaneseq
    %v4929 = vshrl.u32 %v4928, 7
    %v4930 = vsub.s32 %v4927, %v4929
    %v4931 = vrot.slane %v4917, %v4930
    %v4932 = vcombine.low %v4899, %v4915
    %v4933 = vcombine.high %v4899, %v4915
    %v4935 = vunpack.c.l.s4 1934713408
    %v4936 = vunpack.c.0.s8 %v4935
    %v4937 = vlaneseq
    %v4938 = vshrl.u32 %v4937, 7
    %v4939 = vsub.s32 %v4936, %v4938
    %v4940 = vrot.slane %v4932, %v4939
    %v4942 = vunpack.c.l.s4 1934713408
    %v4943 = vunpack.c.0.s8 %v4942
    %v4944 = vlaneseq
    %v4945 = vshrl.u32 %v4944, 7
    %v4946 = vsub.s32 %v4943, %v4945
    %v4947 = vrot.slane %v4933, %v4946
    %v4948 = vcombine.high %v4924, 0.0
    %v4949 = vcombine.high %v4931, 0.0
    %v4950 = vcombine.high %v4940, 0.0
    %v4951 = vcombine.high %v4947, 0.0
    %4953 = vrot.lane.b32.xlu0 %v4948, 16
    %v4954 = vpop.permute.xlu0 %4953
    %4957 = vrot.lane.b32.xlu0 %v4931, 32
    %v4958 = vpop.permute.xlu0 %4957
    %4961 = vrot.lane.b32.xlu0 %v4949, 48
    %v4962 = vpop.permute.xlu0 %4961
    %4965 = vrot.lane.b32.xlu0 %v4940, 64
    %v4966 = vpop.permute.xlu0 %4965
    %4969 = vrot.lane.b32.xlu0 %v4950, 80
    %v4970 = vpop.permute.xlu0 %4969
    %4973 = vrot.lane.b32.xlu0 %v4947, 96
    %v4974 = vpop.permute.xlu0 %4973
    %4977 = vrot.lane.b32.xlu0 %v4951, 112
    %v4978 = vpop.permute.xlu0 %4977
    %v4980 = vsel %vm3105, %v4924, %v4954
    %vm4981 = vcmask 261120
    %v4982 = vsel %vm4981, %v4980, %v4958
    %vm4983 = vcmask 392192
    %v4984 = vsel %vm4983, %v4982, %v4962
    %v4985 = vsel %vm707, %v4984, %v4966
    %vm4986 = vcmask 654336
    %v4987 = vsel %vm4986, %v4985, %v4970
    %vm4988 = vcmask 785408
    %v4989 = vsel %vm4988, %v4987, %v4974
    %vm4990 = vcmask 916480
    %v4991 = vsel %vm4990, %v4989, %v4978
    %v4992 = vpack.c.bf16 %v4991, %v4991
    %v4993 = vld [vmem:[#allocation19] sm:$0xf]
    %v4994 = vld [vmem:[#allocation19 + $0x4] sm:$0xf]
    %v4995 = vld [vmem:[#allocation19 + $0x8] sm:$0xf]
    %v4996 = vld [vmem:[#allocation19 + $0xc] sm:$0xf]
    %v4997 = vld [vmem:[#allocation19 + $0x10] sm:$0xf]
    %v4998 = vld [vmem:[#allocation19 + $0x14] sm:$0xf]
    %v4999 = vld [vmem:[#allocation19 + $0x18] sm:$0xf]
    %v5000 = vld [vmem:[#allocation19 + $0x1c] sm:$0xf]
    %v5001 = vld [vmem:[#allocation19 + $0x20] sm:$0xf]
    %v5002 = vld [vmem:[#allocation19 + $0x24] sm:$0xf]
    %v5003 = vld [vmem:[#allocation19 + $0x28] sm:$0xf]
    %v5004 = vld [vmem:[#allocation19 + $0x2c] sm:$0xf]
    %v5005 = vld [vmem:[#allocation19 + $0x30] sm:$0xf]
    %v5006 = vld [vmem:[#allocation19 + $0x34] sm:$0xf]
    %v5007 = vld [vmem:[#allocation19 + $0x38] sm:$0xf]
    %v5008 = vld [vmem:[#allocation19 + $0x3c] sm:$0xf]
    %v5009 = vld [vmem:[%s14] sm:$0x1]
    %v5011 = vlaneseq
    %v5012 = vshrl.u32 %v5011, 7
    %v5013 = vsub.s32 0, %v5012
    %v5014 = vrot.slane %v5009, %v5013
    %v5032 = vunpack.c.l.b16 %v4993
    %v5033 = vunpack.c.l.b16 %v4994
    %v5034 = vunpack.c.l.b16 %v4995
    %v5035 = vunpack.c.l.b16 %v4996
    %v5036 = vunpack.c.l.b16 %v4997
    %v5037 = vunpack.c.l.b16 %v4998
    %v5038 = vunpack.c.l.b16 %v4999
    %v5039 = vunpack.c.l.b16 %v5000
    %v5040 = vunpack.c.l.b16 %v5001
    %v5041 = vunpack.c.l.b16 %v5002
    %v5042 = vunpack.c.l.b16 %v5003
    %v5043 = vunpack.c.l.b16 %v5004
    %v5044 = vunpack.c.l.b16 %v5005
    %v5045 = vunpack.c.l.b16 %v5006
    %v5046 = vunpack.c.l.b16 %v5007
    %v5047 = vunpack.c.l.b16 %v5008
    %v5048 = vpack.c.b16 %v5033, %v5032
    %v5049 = vpack.c.b16 %v5035, %v5034
    %v5050 = vpack.c.b16 %v5037, %v5036
    %v5051 = vpack.c.b16 %v5039, %v5038
    %v5052 = vpack.c.b16 %v5041, %v5040
    %v5053 = vpack.c.b16 %v5043, %v5042
    %v5054 = vpack.c.b16 %v5045, %v5044
    %v5055 = vpack.c.b16 %v5047, %v5046
    %5064 = vmatprep.subr.bf16.mxu0 0
    %5065 = vmatpush1.bf16.msra.mxu0 %v5048
    %5066 = vmatprep.subr.bf16.mxu0 0
    %5067 = vmatpush1.bf16.msra.mxu0 %v5049
    %5068 = vmatprep.subr.bf16.mxu0 0
    %5069 = vmatpush1.bf16.msra.mxu0 %v5050
    %5070 = vmatprep.subr.bf16.mxu0 0
    %5071 = vmatpush1.bf16.msra.mxu0 %v5051
    %5072 = vmatprep.subr.bf16.mxu0 0
    %5073 = vmatpush1.bf16.msra.mxu0 %v5052
    %5074 = vmatprep.subr.bf16.mxu0 0
    %5075 = vmatpush1.bf16.msra.mxu0 %v5053
    %5076 = vmatprep.subr.bf16.mxu0 0
    %5077 = vmatpush1.bf16.msra.mxu0 %v5054
    %5078 = vmatprep.subr.bf16.mxu0 0
    %5079 = vmatpush1.bf16.msra.mxu0 %v5055
    %5080 = vmatprep.subr.bf16.mxu0 0
    %5081 = vmatpush1.bf16.msra.mxu0 0
    %5082 = vmatprep.subr.bf16.mxu0 0
    %5083 = vmatpush1.bf16.msra.mxu0 0
    %5084 = vmatprep.subr.bf16.mxu0 0
    %5085 = vmatpush1.bf16.msra.mxu0 0
    %5086 = vmatprep.subr.bf16.mxu0 0
    %5087 = vmatpush1.bf16.msra.mxu0 0
    %5088 = vmatprep.subr.bf16.mxu0 0
    %5089 = vmatpush1.bf16.msra.mxu0 0
    %5090 = vmatprep.subr.bf16.mxu0 0
    %5091 = vmatpush1.bf16.msra.mxu0 0
    %5092 = vmatprep.subr.bf16.mxu0 0
    %5093 = vmatpush1.bf16.msra.mxu0 0
    %5094 = vmatprep.subr.bf16.mxu0 0
    %5095 = vmatpush1.bf16.msra.mxu0 0
    %5096 = vmatprep.mubr.bf16.mxu0 0
    %5097 = vmatmul.mubr.bf16.gmra.mrb[0].mxu0 %v4992
    %v5098 = vpop.f32.mrb[0].mxu0
    %v5099 = vadd.f32 %v5014, %v5098
    %v5100 = vpop.f32.mrb[0].mxu0
    %v5101 = vpop.f32.mrb[0].mxu0
    %v5102 = vpop.f32.mrb[0].mxu0
    %5103 = vdwg.mxu0
    %5104 = vst [vmem:[#allocation21] sm:$0xf] %v5099
    // Predicated region
    $region102: #{tpu_custom_call.1} parent=1 // pred_check
      _
    $region103: #{tpu_custom_call.1} parent=1 // pred_check_branch
      %5106 = sbr.rel (0) target = $region105
    $region104: #{tpu_custom_call.1} parent=1 // pred_region
      %s5108 = ssub.s32 64, 64
      %5109 = vsyncadd [#allocation6], %s5108
      %s5111 = sshll.u32 [#allocation21], 4
      %s5112 = int_to_ptr.vmem [resolvable:$true] %s5111
      %5114 = dma.vmem_to_hbm [thread:$0]  %s5112, 64, %s15, [#allocation6]
    $region105: #{tpu_custom_call.1} parent=1 // pred_fallthru
      _
    // Predicated region
    $region106: #{tpu_custom_call.1} parent=1 // pred_check
      _
    $region107: #{tpu_custom_call.1} parent=1 // pred_check_branch
      %5116 = sbr.rel (0) target = $region109
    $region108: #{tpu_custom_call.1} parent=1 // pred_region
      %5117 = dma.done [#allocation6], 64
    $region109: #{tpu_custom_call.1} parent=1 // pred_fallthru
      _
    %5118 = vsyncpa [#allocation5], 1
    %5119 = vsyncpa [#allocation8], 1
    %5120 = vsyncpa [#allocation11], 1
    %5121 = vsyncpa [#allocation14], 1
    %5122 = vsyncpa [#allocation17], 1
    %5123 = vsyncpa [#allocation20], 1
    %5124 = vsyncpa [#allocation6], 1

</llo_original>
